<compile_context>
chip_gen: v7x
topology: tpu7x:2x2x1
jax: 0.10.0
libtpu: 0.0.40
codegen_flags: <defaults>
</compile_context>

<pallas_src>
import numpy as np
import jax
import jax.numpy as jnp
from jax.experimental import pallas as pl
from jax.experimental.pallas import tpu as pltpu

EPS = 1e-5        # nn.BatchNorm2d default eps
NEG_SLOPE = 0.2   # LeakyReLU slope
HQ = 4            # rows per (sample, parity-block); every block is (N*HQ, W*C)


# ---------------------------------------------------------------------------
# In-kernel helpers (traced inside the single fused Pallas kernel)
# ---------------------------------------------------------------------------
def _shift_down(x, n):
    """Rows (sample, q) -> value at (sample, q-1); zero row at q == 0."""
    zero = jnp.zeros((1, x.shape[1]), x.dtype)
    parts = []
    for i in range(n):
        parts.append(zero)
        parts.append(x[i * HQ:(i + 1) * HQ - 1, :])
    return jnp.concatenate(parts, axis=0)


def _shift_up(x, n):
    """Rows (sample, q) -> value at (sample, q+1); zero row at q == HQ-1."""
    zero = jnp.zeros((1, x.shape[1]), x.dtype)
    parts = []
    for i in range(n):
        parts.append(x[i * HQ + 1:(i + 1) * HQ, :])
        parts.append(zero)
    return jnp.concatenate(parts, axis=0)


def _convt_s2(blocks, m_ref, n):
    """k=4, s=2, p=1 ConvTranspose on parity-split row blocks.

    blocks: list of P float32 arrays (N*HQ, W_in*C_in); block p holds input
            rows h with h % P == p (row inside a block is (sample, h // P)).
    m_ref:  (4, W_in*C_in, W_out*C_out) bf16 ref; m_ref[di] mixes one input
            row into one output row for kernel tap di.
    Returns 2*P float32 blocks (N*HQ, W_out*C_out); output block 2p+r holds
    output rows oy with oy % (2P) == 2p + r.
    """
    pcnt = len(blocks)
    m0, m1, m2, m3 = m_ref[0], m_ref[1], m_ref[2], m_ref[3]

    def mm(a, m):
        return jnp.dot(a.astype(jnp.bfloat16), m,
                       preferred_element_type=jnp.float32)

    out = []
    for p in range(pcnt):
        x_p = blocks[p]
        prev = blocks[p - 1] if p >= 1 else _shift_down(blocks[pcnt - 1], n)
        nxt = blocks[p + 1] if p + 1 < pcnt else _shift_up(blocks[0], n)
        out.append(mm(x_p, m1) + mm(prev, m3))   # even output rows (r = 0)
        out.append(mm(x_p, m2) + mm(nxt, m0))    # odd  output rows (r = 1)
    return out


def _bn_lrelu(blocks, gather_ref, scatter_ref, gamma_ref, beta_ref, w_out):
    """Training-mode BatchNorm + LeakyReLU(0.2) over a list of row blocks.

    Lanes of every block are (spatial_x, channel) with channel minor; the
    per-channel reduction / broadcast uses the constant 0/1 gather matrix
    (W*C, C) and its transpose.  Single pass: sum and sum-of-squares.
    """
    colsum = blocks[0].sum(axis=0, keepdims=True)
    colsq = (blocks[0] * blocks[0]).sum(axis=0, keepdims=True)
    for b in blocks[1:]:
        colsum = colsum + b.sum(axis=0, keepdims=True)
        colsq = colsq + (b * b).sum(axis=0, keepdims=True)
    count = float(w_out * sum(b.shape[0] for b in blocks))   # N * H_out * W_out

    ch_sum = jnp.dot(colsum, gather_ref[...], preferred_element_type=jnp.float32)
    ch_sq = jnp.dot(colsq, gather_ref[...], preferred_element_type=jnp.float32)
    mean = ch_sum * (1.0 / count)
    var = ch_sq * (1.0 / count) - mean * mean                # biased (training BN)
    scale = gamma_ref[...] * jax.lax.rsqrt(var + EPS)
    shift = beta_ref[...] - mean * scale
    scale_w = jnp.dot(scale, scatter_ref[...], preferred_element_type=jnp.float32)
    shift_w = jnp.dot(shift, scatter_ref[...], preferred_element_type=jnp.float32)

    out = []
    for b in blocks:
        z = b * scale_w + shift_w
        out.append(jnp.maximum(z, NEG_SLOPE * z))            # LeakyReLU(0.2)
    return out


# ---------------------------------------------------------------------------
# The single fused kernel (whole Generator forward)
# ---------------------------------------------------------------------------
def _generator_kernel(x_ref, w1_ref, w2_ref, w3_ref, w4_ref,
                      ga1_ref, be1_ref, gm1_ref, gs1_ref,
                      ga2_ref, be2_ref, gm2_ref, gs2_ref,
                      ga3_ref, be3_ref, gm3_ref, gs3_ref,
                      o_ref):
    n = x_ref.shape[0]

    # Layer 1: 1x1-input ConvT == plain matmul: (N,100) @ (100, 4*4*32).
    y1 = jnp.dot(x_ref[...], w1_ref[...], preferred_element_type=jnp.float32)
    rows = []
    for i in range(n):                        # assemble rows (sample, oy)
        for oy in range(4):
            rows.append(y1[i:i + 1, oy * 128:(oy + 1) * 128])
    a1 = jnp.concatenate(rows, axis=0)        # (N*4, 4*32) = (N*4, 128)
    a1_blocks = _bn_lrelu([a1], gm1_ref, gs1_ref, ga1_ref, be1_ref, 4)

    # Layer 2: (N,4,4,32) -> (N,8,8,16); 1 block in, 2 blocks out.
    a2_blocks = _convt_s2(a1_blocks, w2_ref, n)
    a2_blocks = _bn_lrelu(a2_blocks, gm2_ref, gs2_ref, ga2_ref, be2_ref, 8)

    # Layer 3: (N,8,8,16) -> (N,16,16,8); 2 blocks in, 4 blocks out.
    a3_blocks = _convt_s2(a2_blocks, w3_ref, n)
    a3_blocks = _bn_lrelu(a3_blocks, gm3_ref, gs3_ref, ga3_ref, be3_ref, 16)

    # Layer 4: (N,16,16,8) -> (N,32,32,3); 4 blocks in, 8 blocks out; Tanh.
    a4_blocks = _convt_s2(a3_blocks, w4_ref, n)
    for p, blk in enumerate(a4_blocks):
        o_ref[p, :, :] = jnp.tanh(blk)


# ---------------------------------------------------------------------------
# One-time host-side parameter packing (hoisted out of the forward path)
# ---------------------------------------------------------------------------
def _conv1_matrix(w):
    # PyTorch ConvTranspose2d weight (C_in, C_out, 4, 4) -> (C_in, 4*4*C_out),
    # lane order (oy, ox, co):  out[n, oy, ox, co] = x[n, :] @ this.
    w = np.asarray(w, np.float32)
    return jnp.asarray(np.transpose(w, (0, 2, 3, 1)).reshape(w.shape[0], -1),
                       dtype=jnp.bfloat16)


def _row_matrices(w, w_in):
    # Per-tap row-mixing matrices for a k=4, s=2, p=1 ConvTranspose2d:
    # m[di, j*C_in + ci, ox*C_out + co] = W[ci, co, di, dj] with ox = 2j-1+dj.
    w = np.asarray(w, np.float32)
    c_in, c_out = w.shape[0], w.shape[1]
    w_out = 2 * w_in
    m = np.zeros((4, w_in * c_in, w_out * c_out), np.float32)
    for di in range(4):
        for j in range(w_in):
            for dj in range(4):
                ox = 2 * j - 1 + dj
                if 0 <= ox < w_out:
                    m[di, j * c_in:(j + 1) * c_in,
                      ox * c_out:(ox + 1) * c_out] = w[:, :, di, dj]
    return jnp.asarray(m, dtype=jnp.bfloat16)


def _channel_gather(w_out, c_out):
    g = np.tile(np.eye(c_out, dtype=np.float32), (w_out, 1))   # (W*C, C)
    return jnp.asarray(g), jnp.asarray(np.ascontiguousarray(g.T))


def prepare_params(params):
    """Pack PyTorch-layout Generator parameters for the fused kernel (host, once)."""
    gm1, gs1 = _channel_gather(4, 32)
    gm2, gs2 = _channel_gather(8, 16)
    gm3, gs3 = _channel_gather(16, 8)
    return {
        "w1": _conv1_matrix(params["w1"]),
        "w2": _row_matrices(params["w2"], 4),
        "w3": _row_matrices(params["w3"], 8),
        "w4": _row_matrices(params["w4"], 16),
        "ga1": jnp.asarray(params["g1"], jnp.float32).reshape(1, -1),
        "be1": jnp.asarray(params["b1"], jnp.float32).reshape(1, -1),
        "ga2": jnp.asarray(params["g2"], jnp.float32).reshape(1, -1),
        "be2": jnp.asarray(params["b2"], jnp.float32).reshape(1, -1),
        "ga3": jnp.asarray(params["g3"], jnp.float32).reshape(1, -1),
        "be3": jnp.asarray(params["b3"], jnp.float32).reshape(1, -1),
        "gm1": gm1, "gs1": gs1, "gm2": gm2, "gs2": gs2, "gm3": gm3, "gs3": gs3,
    }


# ---------------------------------------------------------------------------
# Generator forward (NCHW in, NCHW out — matches PyTorch)
# ---------------------------------------------------------------------------
def generator_forward(noise_nchw, pp):
    n = noise_nchw.shape[0]
    x = noise_nchw.reshape(n, -1).astype(jnp.bfloat16)           # (N, 100)
    vmem = pl.BlockSpec(memory_space=pltpu.MemorySpace.VMEM)
    blocks = pl.pallas_call(
        _generator_kernel,
        out_shape=jax.ShapeDtypeStruct((8, n * HQ, 96), jnp.float32),
        in_specs=[vmem] * 17,
        out_specs=vmem,
    )(x, pp["w1"], pp["w2"], pp["w3"], pp["w4"],
      pp["ga1"], pp["be1"], pp["gm1"], pp["gs1"],
      pp["ga2"], pp["be2"], pp["gm2"], pp["gs2"],
      pp["ga3"], pp["be3"], pp["gm3"], pp["gs3"])
    # Un-shuffle the 8 parity blocks (oy = 8*q + p) back to NCHW in XLA.
    y = blocks.reshape(8, n, HQ, 32, 3)            # (p, n, q, ox, co)
    y = jnp.transpose(y, (1, 2, 0, 3, 4))          # (n, q, p, ox, co)
    y = y.reshape(n, 32, 32, 3)                    # NHWC with oy = 8*q + p
    return jnp.transpose(y, (0, 3, 1, 2))          # NCHW


# ---------------------------------------------------------------------------
# Pure-JAX reference (for correctness check)
# ---------------------------------------------------------------------------
def _ref_convT(x, w, s, p):
    k = w.shape[-1]
    wt = jnp.transpose(w[:, :, ::-1, ::-1], (1, 0, 2, 3))        # (C_out, C_in, k, k)
    return jax.lax.conv_general_dilated(
        x, wt, window_strides=(1, 1), padding=[(k - 1 - p, k - 1 - p)] * 2,
        lhs_dilation=(s, s), dimension_numbers=("NCHW", "OIHW", "NCHW"))


def _ref_bn_lrelu(y, gamma, beta):
    mean = y.mean(axis=(0, 2, 3), keepdims=True)
    var = jnp.square(y - mean).mean(axis=(0, 2, 3), keepdims=True)
    z = (y - mean) / jnp.sqrt(var + EPS) * gamma.reshape(1, -1, 1, 1) \
        + beta.reshape(1, -1, 1, 1)
    return jnp.where(z >= 0.0, z, NEG_SLOPE * z)


def reference_forward(noise, params):
    x = _ref_convT(noise, params["w1"], 1, 0)
    x = _ref_bn_lrelu(x, params["g1"], params["b1"])
    x = _ref_convT(x, params["w2"], 2, 1)
    x = _ref_bn_lrelu(x, params["g2"], params["b2"])
    x = _ref_convT(x, params["w3"], 2, 1)
    x = _ref_bn_lrelu(x, params["g3"], params["b3"])
    x = _ref_convT(x, params["w4"], 2, 1)
    return jnp.tanh(x)


# ---------------------------------------------------------------------------
if __name__ == "__main__":
    key = jax.random.PRNGKey(0)
    ks = jax.random.split(key, 5)

    # Deterministic synthetic parameters (PyTorch ConvTranspose2d weight layout:
    # (C_in, C_out, kH, kW); BN gamma=1, beta=0 as at nn.Module init).
    params = {
        "w1": 0.05 * jax.random.normal(ks[0], (100, 32, 4, 4), jnp.float32),
        "w2": 0.05 * jax.random.normal(ks[1], (32, 16, 4, 4), jnp.float32),
        "w3": 0.05 * jax.random.normal(ks[2], (16, 8, 4, 4), jnp.float32),
        "w4": 0.05 * jax.random.normal(ks[3], (8, 3, 4, 4), jnp.float32),
        "g1": jnp.ones((32,), jnp.float32), "b1": jnp.zeros((32,), jnp.float32),
        "g2": jnp.ones((16,), jnp.float32), "b2": jnp.zeros((16,), jnp.float32),
        "g3": jnp.ones((8,), jnp.float32), "b3": jnp.zeros((8,), jnp.float32),
    }

    noise = jax.random.normal(ks[4], (2, 100, 1, 1), jnp.float32)    # NCHW

    pp = prepare_params(params)                  # one-time host-side packing
    fwd = jax.jit(generator_forward)
    out = jax.block_until_ready(fwd(noise, pp))
    assert out.shape == (2, 3, 32, 32), out.shape
    assert bool(jnp.all(jnp.isfinite(out)))

    ref = jax.block_until_ready(reference_forward(noise, params))
    np.testing.assert_allclose(np.asarray(out), np.asarray(ref),
                               rtol=5e-2, atol=5e-2)

    print("KERNEL_OK")
</pallas_src>

<mosaic_0001>
module attributes {stable_mosaic.version = 11 : i64} {
  func.func @_generator_kernel(%arg0: memref<2x100xbf16, #tpu.memory_space<vmem>>, %arg1: memref<100x512xbf16, #tpu.memory_space<vmem>>, %arg2: memref<4x128x128xbf16, #tpu.memory_space<vmem>>, %arg3: memref<4x128x128xbf16, #tpu.memory_space<vmem>>, %arg4: memref<4x128x96xbf16, #tpu.memory_space<vmem>>, %arg5: memref<1x32xf32, #tpu.memory_space<vmem>>, %arg6: memref<1x32xf32, #tpu.memory_space<vmem>>, %arg7: memref<128x32xf32, #tpu.memory_space<vmem>>, %arg8: memref<32x128xf32, #tpu.memory_space<vmem>>, %arg9: memref<1x16xf32, #tpu.memory_space<vmem>>, %arg10: memref<1x16xf32, #tpu.memory_space<vmem>>, %arg11: memref<128x16xf32, #tpu.memory_space<vmem>>, %arg12: memref<16x128xf32, #tpu.memory_space<vmem>>, %arg13: memref<1x8xf32, #tpu.memory_space<vmem>>, %arg14: memref<1x8xf32, #tpu.memory_space<vmem>>, %arg15: memref<128x8xf32, #tpu.memory_space<vmem>>, %arg16: memref<8x128xf32, #tpu.memory_space<vmem>>, %arg17: memref<8x8x96xf32, #tpu.memory_space<vmem>>) attributes {dimension_semantics = [], scalar_prefetch = 0 : i64, scratch_operands = 0 : i64, tpu.core_type = #tpu.core_type<tc>} {
    %c0 = arith.constant 0 : index
    %c0_0 = arith.constant 0 : index
    %0 = vector.load %arg0[%c0, %c0_0] : memref<2x100xbf16, #tpu.memory_space<vmem>>, vector<2x100xbf16>
    %c0_1 = arith.constant 0 : index
    %c0_2 = arith.constant 0 : index
    %1 = vector.load %arg1[%c0_1, %c0_2] : memref<100x512xbf16, #tpu.memory_space<vmem>>, vector<100x512xbf16>
    %cst = arith.constant dense<0.000000e+00> : vector<2x512xf32>
    %2 = tpu.matmul %0, %1, %cst {dimension_numbers = #tpu.dot_dimension_numbers<[1], [0], [0], [1], [0, 0, 1, 1], [], []>} : vector<2x100xbf16>, vector<100x512xbf16>, vector<2x512xf32> -> vector<2x512xf32>
    %3 = vector.extract_strided_slice %2 {offsets = [0, 0], sizes = [1, 128], strides = [1, 1]} : vector<2x512xf32> to vector<1x128xf32>
    %4 = vector.extract_strided_slice %2 {offsets = [0, 128], sizes = [1, 128], strides = [1, 1]} : vector<2x512xf32> to vector<1x128xf32>
    %5 = vector.extract_strided_slice %2 {offsets = [0, 256], sizes = [1, 128], strides = [1, 1]} : vector<2x512xf32> to vector<1x128xf32>
    %6 = vector.extract_strided_slice %2 {offsets = [0, 384], sizes = [1, 128], strides = [1, 1]} : vector<2x512xf32> to vector<1x128xf32>
    %7 = vector.extract_strided_slice %2 {offsets = [1, 0], sizes = [1, 128], strides = [1, 1]} : vector<2x512xf32> to vector<1x128xf32>
    %8 = vector.extract_strided_slice %2 {offsets = [1, 128], sizes = [1, 128], strides = [1, 1]} : vector<2x512xf32> to vector<1x128xf32>
    %9 = vector.extract_strided_slice %2 {offsets = [1, 256], sizes = [1, 128], strides = [1, 1]} : vector<2x512xf32> to vector<1x128xf32>
    %10 = vector.extract_strided_slice %2 {offsets = [1, 384], sizes = [1, 128], strides = [1, 1]} : vector<2x512xf32> to vector<1x128xf32>
    %11 = tpu.concatenate %3, %4, %5, %6, %7, %8, %9, %10 in 0 : vector<1x128xf32>, vector<1x128xf32>, vector<1x128xf32>, vector<1x128xf32>, vector<1x128xf32>, vector<1x128xf32>, vector<1x128xf32>, vector<1x128xf32> -> vector<8x128xf32>
    %cst_3 = arith.constant dense<0.000000e+00> : vector<128xf32>
    %12 = vector.multi_reduction <add>, %11, %cst_3 [0] : vector<8x128xf32> to vector<128xf32>
    %13 = vector.shape_cast %12 : vector<128xf32> to vector<1x128xf32>
    %14 = arith.mulf %11, %11 : vector<8x128xf32>
    %cst_4 = arith.constant dense<0.000000e+00> : vector<128xf32>
    %15 = vector.multi_reduction <add>, %14, %cst_4 [0] : vector<8x128xf32> to vector<128xf32>
    %16 = vector.shape_cast %15 : vector<128xf32> to vector<1x128xf32>
    %c0_5 = arith.constant 0 : index
    %c0_6 = arith.constant 0 : index
    %17 = vector.load %arg7[%c0_5, %c0_6] : memref<128x32xf32, #tpu.memory_space<vmem>>, vector<128x32xf32>
    %cst_7 = arith.constant dense<0.000000e+00> : vector<1x32xf32>
    %18 = tpu.matmul %13, %17, %cst_7 {dimension_numbers = #tpu.dot_dimension_numbers<[1], [0], [0], [1], [0, 0, 1, 1], [], []>} : vector<1x128xf32>, vector<128x32xf32>, vector<1x32xf32> -> vector<1x32xf32>
    %c0_8 = arith.constant 0 : index
    %c0_9 = arith.constant 0 : index
    %19 = vector.load %arg7[%c0_8, %c0_9] : memref<128x32xf32, #tpu.memory_space<vmem>>, vector<128x32xf32>
    %cst_10 = arith.constant dense<0.000000e+00> : vector<1x32xf32>
    %20 = tpu.matmul %16, %19, %cst_10 {dimension_numbers = #tpu.dot_dimension_numbers<[1], [0], [0], [1], [0, 0, 1, 1], [], []>} : vector<1x128xf32>, vector<128x32xf32>, vector<1x32xf32> -> vector<1x32xf32>
    %cst_11 = arith.constant 3.125000e-02 : f32
    %21 = vector.broadcast %cst_11 : f32 to vector<1x32xf32>
    %22 = arith.mulf %18, %21 : vector<1x32xf32>
    %cst_12 = arith.constant 3.125000e-02 : f32
    %23 = vector.broadcast %cst_12 : f32 to vector<1x32xf32>
    %24 = arith.mulf %20, %23 : vector<1x32xf32>
    %25 = arith.mulf %22, %22 : vector<1x32xf32>
    %26 = arith.subf %24, %25 : vector<1x32xf32>
    %c0_13 = arith.constant 0 : index
    %c0_14 = arith.constant 0 : index
    %27 = vector.load %arg5[%c0_13, %c0_14] : memref<1x32xf32, #tpu.memory_space<vmem>>, vector<1x32xf32>
    %cst_15 = arith.constant 9.99999974E-6 : f32
    %28 = vector.broadcast %cst_15 : f32 to vector<1x32xf32>
    %29 = arith.addf %26, %28 : vector<1x32xf32>
    %30 = math.rsqrt %29 : vector<1x32xf32>
    %31 = arith.mulf %27, %30 : vector<1x32xf32>
    %c0_16 = arith.constant 0 : index
    %c0_17 = arith.constant 0 : index
    %32 = vector.load %arg6[%c0_16, %c0_17] : memref<1x32xf32, #tpu.memory_space<vmem>>, vector<1x32xf32>
    %33 = arith.mulf %22, %31 : vector<1x32xf32>
    %34 = arith.subf %32, %33 : vector<1x32xf32>
    %c0_18 = arith.constant 0 : index
    %c0_19 = arith.constant 0 : index
    %35 = vector.load %arg8[%c0_18, %c0_19] : memref<32x128xf32, #tpu.memory_space<vmem>>, vector<32x128xf32>
    %cst_20 = arith.constant dense<0.000000e+00> : vector<1x128xf32>
    %36 = tpu.matmul %31, %35, %cst_20 {dimension_numbers = #tpu.dot_dimension_numbers<[1], [0], [0], [1], [0, 0, 1, 1], [], []>} : vector<1x32xf32>, vector<32x128xf32>, vector<1x128xf32> -> vector<1x128xf32>
    %c0_21 = arith.constant 0 : index
    %c0_22 = arith.constant 0 : index
    %37 = vector.load %arg8[%c0_21, %c0_22] : memref<32x128xf32, #tpu.memory_space<vmem>>, vector<32x128xf32>
    %cst_23 = arith.constant dense<0.000000e+00> : vector<1x128xf32>
    %38 = tpu.matmul %34, %37, %cst_23 {dimension_numbers = #tpu.dot_dimension_numbers<[1], [0], [0], [1], [0, 0, 1, 1], [], []>} : vector<1x32xf32>, vector<32x128xf32>, vector<1x128xf32> -> vector<1x128xf32>
    %39 = vector.broadcast %36 : vector<1x128xf32> to vector<8x128xf32>
    %40 = arith.mulf %11, %39 : vector<8x128xf32>
    %41 = vector.broadcast %38 : vector<1x128xf32> to vector<8x128xf32>
    %42 = arith.addf %40, %41 : vector<8x128xf32>
    %cst_24 = arith.constant 2.000000e-01 : f32
    %43 = vector.broadcast %cst_24 : f32 to vector<8x128xf32>
    %44 = arith.mulf %43, %42 : vector<8x128xf32>
    %45 = arith.maximumf %42, %44 : vector<8x128xf32>
    %c0_25 = arith.constant 0 : index
    %c0_26 = arith.constant 0 : index
    %c0_27 = arith.constant 0 : index
    %46 = vector.load %arg2[%c0_25, %c0_26, %c0_27] : memref<4x128x128xbf16, #tpu.memory_space<vmem>>, vector<1x128x128xbf16>
    %47 = vector.shape_cast %46 : vector<1x128x128xbf16> to vector<128x128xbf16>
    %c1 = arith.constant 1 : index
    %c0_28 = arith.constant 0 : index
    %c0_29 = arith.constant 0 : index
    %48 = vector.load %arg2[%c1, %c0_28, %c0_29] : memref<4x128x128xbf16, #tpu.memory_space<vmem>>, vector<1x128x128xbf16>
    %49 = vector.shape_cast %48 : vector<1x128x128xbf16> to vector<128x128xbf16>
    %c2 = arith.constant 2 : index
    %c0_30 = arith.constant 0 : index
    %c0_31 = arith.constant 0 : index
    %50 = vector.load %arg2[%c2, %c0_30, %c0_31] : memref<4x128x128xbf16, #tpu.memory_space<vmem>>, vector<1x128x128xbf16>
    %51 = vector.shape_cast %50 : vector<1x128x128xbf16> to vector<128x128xbf16>
    %c3 = arith.constant 3 : index
    %c0_32 = arith.constant 0 : index
    %c0_33 = arith.constant 0 : index
    %52 = vector.load %arg2[%c3, %c0_32, %c0_33] : memref<4x128x128xbf16, #tpu.memory_space<vmem>>, vector<1x128x128xbf16>
    %53 = vector.shape_cast %52 : vector<1x128x128xbf16> to vector<128x128xbf16>
    %cst_34 = arith.constant 0.000000e+00 : f32
    %54 = vector.broadcast %cst_34 : f32 to vector<1x128xf32>
    %55 = vector.extract_strided_slice %45 {offsets = [0, 0], sizes = [3, 128], strides = [1, 1]} : vector<8x128xf32> to vector<3x128xf32>
    %56 = vector.extract_strided_slice %45 {offsets = [4, 0], sizes = [3, 128], strides = [1, 1]} : vector<8x128xf32> to vector<3x128xf32>
    %57 = tpu.concatenate %54, %55, %54, %56 in 0 : vector<1x128xf32>, vector<3x128xf32>, vector<1x128xf32>, vector<3x128xf32> -> vector<8x128xf32>
    %cst_35 = arith.constant 0.000000e+00 : f32
    %58 = vector.broadcast %cst_35 : f32 to vector<1x128xf32>
    %59 = vector.extract_strided_slice %45 {offsets = [1, 0], sizes = [3, 128], strides = [1, 1]} : vector<8x128xf32> to vector<3x128xf32>
    %60 = vector.extract_strided_slice %45 {offsets = [5, 0], sizes = [3, 128], strides = [1, 1]} : vector<8x128xf32> to vector<3x128xf32>
    %61 = tpu.concatenate %59, %58, %60, %58 in 0 : vector<3x128xf32>, vector<1x128xf32>, vector<3x128xf32>, vector<1x128xf32> -> vector<8x128xf32>
    %62 = arith.truncf %45 : vector<8x128xf32> to vector<8x128xbf16>
    %cst_36 = arith.constant dense<0.000000e+00> : vector<8x128xf32>
    %63 = tpu.matmul %62, %49, %cst_36 {dimension_numbers = #tpu.dot_dimension_numbers<[1], [0], [0], [1], [0, 0, 1, 1], [], []>} : vector<8x128xbf16>, vector<128x128xbf16>, vector<8x128xf32> -> vector<8x128xf32>
    %64 = arith.truncf %57 : vector<8x128xf32> to vector<8x128xbf16>
    %cst_37 = arith.constant dense<0.000000e+00> : vector<8x128xf32>
    %65 = tpu.matmul %64, %53, %cst_37 {dimension_numbers = #tpu.dot_dimension_numbers<[1], [0], [0], [1], [0, 0, 1, 1], [], []>} : vector<8x128xbf16>, vector<128x128xbf16>, vector<8x128xf32> -> vector<8x128xf32>
    %66 = arith.addf %63, %65 : vector<8x128xf32>
    %67 = arith.truncf %45 : vector<8x128xf32> to vector<8x128xbf16>
    %cst_38 = arith.constant dense<0.000000e+00> : vector<8x128xf32>
    %68 = tpu.matmul %67, %51, %cst_38 {dimension_numbers = #tpu.dot_dimension_numbers<[1], [0], [0], [1], [0, 0, 1, 1], [], []>} : vector<8x128xbf16>, vector<128x128xbf16>, vector<8x128xf32> -> vector<8x128xf32>
    %69 = arith.truncf %61 : vector<8x128xf32> to vector<8x128xbf16>
    %cst_39 = arith.constant dense<0.000000e+00> : vector<8x128xf32>
    %70 = tpu.matmul %69, %47, %cst_39 {dimension_numbers = #tpu.dot_dimension_numbers<[1], [0], [0], [1], [0, 0, 1, 1], [], []>} : vector<8x128xbf16>, vector<128x128xbf16>, vector<8x128xf32> -> vector<8x128xf32>
    %71 = arith.addf %68, %70 : vector<8x128xf32>
    %cst_40 = arith.constant dense<0.000000e+00> : vector<128xf32>
    %72 = vector.multi_reduction <add>, %66, %cst_40 [0] : vector<8x128xf32> to vector<128xf32>
    %73 = vector.shape_cast %72 : vector<128xf32> to vector<1x128xf32>
    %74 = arith.mulf %66, %66 : vector<8x128xf32>
    %cst_41 = arith.constant dense<0.000000e+00> : vector<128xf32>
    %75 = vector.multi_reduction <add>, %74, %cst_41 [0] : vector<8x128xf32> to vector<128xf32>
    %76 = vector.shape_cast %75 : vector<128xf32> to vector<1x128xf32>
    %cst_42 = arith.constant dense<0.000000e+00> : vector<128xf32>
    %77 = vector.multi_reduction <add>, %71, %cst_42 [0] : vector<8x128xf32> to vector<128xf32>
    %78 = vector.shape_cast %77 : vector<128xf32> to vector<1x128xf32>
    %79 = arith.addf %73, %78 : vector<1x128xf32>
    %80 = arith.mulf %71, %71 : vector<8x128xf32>
    %cst_43 = arith.constant dense<0.000000e+00> : vector<128xf32>
    %81 = vector.multi_reduction <add>, %80, %cst_43 [0] : vector<8x128xf32> to vector<128xf32>
    %82 = vector.shape_cast %81 : vector<128xf32> to vector<1x128xf32>
    %83 = arith.addf %76, %82 : vector<1x128xf32>
    %c0_44 = arith.constant 0 : index
    %c0_45 = arith.constant 0 : index
    %84 = vector.load %arg11[%c0_44, %c0_45] : memref<128x16xf32, #tpu.memory_space<vmem>>, vector<128x16xf32>
    %cst_46 = arith.constant dense<0.000000e+00> : vector<1x16xf32>
    %85 = tpu.matmul %79, %84, %cst_46 {dimension_numbers = #tpu.dot_dimension_numbers<[1], [0], [0], [1], [0, 0, 1, 1], [], []>} : vector<1x128xf32>, vector<128x16xf32>, vector<1x16xf32> -> vector<1x16xf32>
    %c0_47 = arith.constant 0 : index
    %c0_48 = arith.constant 0 : index
    %86 = vector.load %arg11[%c0_47, %c0_48] : memref<128x16xf32, #tpu.memory_space<vmem>>, vector<128x16xf32>
    %cst_49 = arith.constant dense<0.000000e+00> : vector<1x16xf32>
    %87 = tpu.matmul %83, %86, %cst_49 {dimension_numbers = #tpu.dot_dimension_numbers<[1], [0], [0], [1], [0, 0, 1, 1], [], []>} : vector<1x128xf32>, vector<128x16xf32>, vector<1x16xf32> -> vector<1x16xf32>
    %cst_50 = arith.constant 7.812500e-03 : f32
    %88 = vector.broadcast %cst_50 : f32 to vector<1x16xf32>
    %89 = arith.mulf %85, %88 : vector<1x16xf32>
    %cst_51 = arith.constant 7.812500e-03 : f32
    %90 = vector.broadcast %cst_51 : f32 to vector<1x16xf32>
    %91 = arith.mulf %87, %90 : vector<1x16xf32>
    %92 = arith.mulf %89, %89 : vector<1x16xf32>
    %93 = arith.subf %91, %92 : vector<1x16xf32>
    %c0_52 = arith.constant 0 : index
    %c0_53 = arith.constant 0 : index
    %94 = vector.load %arg9[%c0_52, %c0_53] : memref<1x16xf32, #tpu.memory_space<vmem>>, vector<1x16xf32>
    %cst_54 = arith.constant 9.99999974E-6 : f32
    %95 = vector.broadcast %cst_54 : f32 to vector<1x16xf32>
    %96 = arith.addf %93, %95 : vector<1x16xf32>
    %97 = math.rsqrt %96 : vector<1x16xf32>
    %98 = arith.mulf %94, %97 : vector<1x16xf32>
    %c0_55 = arith.constant 0 : index
    %c0_56 = arith.constant 0 : index
    %99 = vector.load %arg10[%c0_55, %c0_56] : memref<1x16xf32, #tpu.memory_space<vmem>>, vector<1x16xf32>
    %100 = arith.mulf %89, %98 : vector<1x16xf32>
    %101 = arith.subf %99, %100 : vector<1x16xf32>
    %c0_57 = arith.constant 0 : index
    %c0_58 = arith.constant 0 : index
    %102 = vector.load %arg12[%c0_57, %c0_58] : memref<16x128xf32, #tpu.memory_space<vmem>>, vector<16x128xf32>
    %cst_59 = arith.constant dense<0.000000e+00> : vector<1x128xf32>
    %103 = tpu.matmul %98, %102, %cst_59 {dimension_numbers = #tpu.dot_dimension_numbers<[1], [0], [0], [1], [0, 0, 1, 1], [], []>} : vector<1x16xf32>, vector<16x128xf32>, vector<1x128xf32> -> vector<1x128xf32>
    %c0_60 = arith.constant 0 : index
    %c0_61 = arith.constant 0 : index
    %104 = vector.load %arg12[%c0_60, %c0_61] : memref<16x128xf32, #tpu.memory_space<vmem>>, vector<16x128xf32>
    %cst_62 = arith.constant dense<0.000000e+00> : vector<1x128xf32>
    %105 = tpu.matmul %101, %104, %cst_62 {dimension_numbers = #tpu.dot_dimension_numbers<[1], [0], [0], [1], [0, 0, 1, 1], [], []>} : vector<1x16xf32>, vector<16x128xf32>, vector<1x128xf32> -> vector<1x128xf32>
    %106 = vector.broadcast %103 : vector<1x128xf32> to vector<8x128xf32>
    %107 = arith.mulf %66, %106 : vector<8x128xf32>
    %108 = vector.broadcast %105 : vector<1x128xf32> to vector<8x128xf32>
    %109 = arith.addf %107, %108 : vector<8x128xf32>
    %cst_63 = arith.constant 2.000000e-01 : f32
    %110 = vector.broadcast %cst_63 : f32 to vector<8x128xf32>
    %111 = arith.mulf %110, %109 : vector<8x128xf32>
    %112 = arith.maximumf %109, %111 : vector<8x128xf32>
    %113 = vector.broadcast %103 : vector<1x128xf32> to vector<8x128xf32>
    %114 = arith.mulf %71, %113 : vector<8x128xf32>
    %115 = vector.broadcast %105 : vector<1x128xf32> to vector<8x128xf32>
    %116 = arith.addf %114, %115 : vector<8x128xf32>
    %cst_64 = arith.constant 2.000000e-01 : f32
    %117 = vector.broadcast %cst_64 : f32 to vector<8x128xf32>
    %118 = arith.mulf %117, %116 : vector<8x128xf32>
    %119 = arith.maximumf %116, %118 : vector<8x128xf32>
    %c0_65 = arith.constant 0 : index
    %c0_66 = arith.constant 0 : index
    %c0_67 = arith.constant 0 : index
    %120 = vector.load %arg3[%c0_65, %c0_66, %c0_67] : memref<4x128x128xbf16, #tpu.memory_space<vmem>>, vector<1x128x128xbf16>
    %121 = vector.shape_cast %120 : vector<1x128x128xbf16> to vector<128x128xbf16>
    %c1_68 = arith.constant 1 : index
    %c0_69 = arith.constant 0 : index
    %c0_70 = arith.constant 0 : index
    %122 = vector.load %arg3[%c1_68, %c0_69, %c0_70] : memref<4x128x128xbf16, #tpu.memory_space<vmem>>, vector<1x128x128xbf16>
    %123 = vector.shape_cast %122 : vector<1x128x128xbf16> to vector<128x128xbf16>
    %c2_71 = arith.constant 2 : index
    %c0_72 = arith.constant 0 : index
    %c0_73 = arith.constant 0 : index
    %124 = vector.load %arg3[%c2_71, %c0_72, %c0_73] : memref<4x128x128xbf16, #tpu.memory_space<vmem>>, vector<1x128x128xbf16>
    %125 = vector.shape_cast %124 : vector<1x128x128xbf16> to vector<128x128xbf16>
    %c3_74 = arith.constant 3 : index
    %c0_75 = arith.constant 0 : index
    %c0_76 = arith.constant 0 : index
    %126 = vector.load %arg3[%c3_74, %c0_75, %c0_76] : memref<4x128x128xbf16, #tpu.memory_space<vmem>>, vector<1x128x128xbf16>
    %127 = vector.shape_cast %126 : vector<1x128x128xbf16> to vector<128x128xbf16>
    %cst_77 = arith.constant 0.000000e+00 : f32
    %128 = vector.broadcast %cst_77 : f32 to vector<1x128xf32>
    %129 = vector.extract_strided_slice %119 {offsets = [0, 0], sizes = [3, 128], strides = [1, 1]} : vector<8x128xf32> to vector<3x128xf32>
    %130 = vector.extract_strided_slice %119 {offsets = [4, 0], sizes = [3, 128], strides = [1, 1]} : vector<8x128xf32> to vector<3x128xf32>
    %131 = tpu.concatenate %128, %129, %128, %130 in 0 : vector<1x128xf32>, vector<3x128xf32>, vector<1x128xf32>, vector<3x128xf32> -> vector<8x128xf32>
    %132 = arith.truncf %112 : vector<8x128xf32> to vector<8x128xbf16>
    %cst_78 = arith.constant dense<0.000000e+00> : vector<8x128xf32>
    %133 = tpu.matmul %132, %123, %cst_78 {dimension_numbers = #tpu.dot_dimension_numbers<[1], [0], [0], [1], [0, 0, 1, 1], [], []>} : vector<8x128xbf16>, vector<128x128xbf16>, vector<8x128xf32> -> vector<8x128xf32>
    %134 = arith.truncf %131 : vector<8x128xf32> to vector<8x128xbf16>
    %cst_79 = arith.constant dense<0.000000e+00> : vector<8x128xf32>
    %135 = tpu.matmul %134, %127, %cst_79 {dimension_numbers = #tpu.dot_dimension_numbers<[1], [0], [0], [1], [0, 0, 1, 1], [], []>} : vector<8x128xbf16>, vector<128x128xbf16>, vector<8x128xf32> -> vector<8x128xf32>
    %136 = arith.addf %133, %135 : vector<8x128xf32>
    %137 = arith.truncf %112 : vector<8x128xf32> to vector<8x128xbf16>
    %cst_80 = arith.constant dense<0.000000e+00> : vector<8x128xf32>
    %138 = tpu.matmul %137, %125, %cst_80 {dimension_numbers = #tpu.dot_dimension_numbers<[1], [0], [0], [1], [0, 0, 1, 1], [], []>} : vector<8x128xbf16>, vector<128x128xbf16>, vector<8x128xf32> -> vector<8x128xf32>
    %139 = arith.truncf %119 : vector<8x128xf32> to vector<8x128xbf16>
    %cst_81 = arith.constant dense<0.000000e+00> : vector<8x128xf32>
    %140 = tpu.matmul %139, %121, %cst_81 {dimension_numbers = #tpu.dot_dimension_numbers<[1], [0], [0], [1], [0, 0, 1, 1], [], []>} : vector<8x128xbf16>, vector<128x128xbf16>, vector<8x128xf32> -> vector<8x128xf32>
    %141 = arith.addf %138, %140 : vector<8x128xf32>
    %cst_82 = arith.constant 0.000000e+00 : f32
    %142 = vector.broadcast %cst_82 : f32 to vector<1x128xf32>
    %143 = vector.extract_strided_slice %112 {offsets = [1, 0], sizes = [3, 128], strides = [1, 1]} : vector<8x128xf32> to vector<3x128xf32>
    %144 = vector.extract_strided_slice %112 {offsets = [5, 0], sizes = [3, 128], strides = [1, 1]} : vector<8x128xf32> to vector<3x128xf32>
    %145 = tpu.concatenate %143, %142, %144, %142 in 0 : vector<3x128xf32>, vector<1x128xf32>, vector<3x128xf32>, vector<1x128xf32> -> vector<8x128xf32>
    %146 = arith.truncf %119 : vector<8x128xf32> to vector<8x128xbf16>
    %cst_83 = arith.constant dense<0.000000e+00> : vector<8x128xf32>
    %147 = tpu.matmul %146, %123, %cst_83 {dimension_numbers = #tpu.dot_dimension_numbers<[1], [0], [0], [1], [0, 0, 1, 1], [], []>} : vector<8x128xbf16>, vector<128x128xbf16>, vector<8x128xf32> -> vector<8x128xf32>
    %148 = arith.truncf %112 : vector<8x128xf32> to vector<8x128xbf16>
    %cst_84 = arith.constant dense<0.000000e+00> : vector<8x128xf32>
    %149 = tpu.matmul %148, %127, %cst_84 {dimension_numbers = #tpu.dot_dimension_numbers<[1], [0], [0], [1], [0, 0, 1, 1], [], []>} : vector<8x128xbf16>, vector<128x128xbf16>, vector<8x128xf32> -> vector<8x128xf32>
    %150 = arith.addf %147, %149 : vector<8x128xf32>
    %151 = arith.truncf %119 : vector<8x128xf32> to vector<8x128xbf16>
    %cst_85 = arith.constant dense<0.000000e+00> : vector<8x128xf32>
    %152 = tpu.matmul %151, %125, %cst_85 {dimension_numbers = #tpu.dot_dimension_numbers<[1], [0], [0], [1], [0, 0, 1, 1], [], []>} : vector<8x128xbf16>, vector<128x128xbf16>, vector<8x128xf32> -> vector<8x128xf32>
    %153 = arith.truncf %145 : vector<8x128xf32> to vector<8x128xbf16>
    %cst_86 = arith.constant dense<0.000000e+00> : vector<8x128xf32>
    %154 = tpu.matmul %153, %121, %cst_86 {dimension_numbers = #tpu.dot_dimension_numbers<[1], [0], [0], [1], [0, 0, 1, 1], [], []>} : vector<8x128xbf16>, vector<128x128xbf16>, vector<8x128xf32> -> vector<8x128xf32>
    %155 = arith.addf %152, %154 : vector<8x128xf32>
    %cst_87 = arith.constant dense<0.000000e+00> : vector<128xf32>
    %156 = vector.multi_reduction <add>, %136, %cst_87 [0] : vector<8x128xf32> to vector<128xf32>
    %157 = vector.shape_cast %156 : vector<128xf32> to vector<1x128xf32>
    %158 = arith.mulf %136, %136 : vector<8x128xf32>
    %cst_88 = arith.constant dense<0.000000e+00> : vector<128xf32>
    %159 = vector.multi_reduction <add>, %158, %cst_88 [0] : vector<8x128xf32> to vector<128xf32>
    %160 = vector.shape_cast %159 : vector<128xf32> to vector<1x128xf32>
    %cst_89 = arith.constant dense<0.000000e+00> : vector<128xf32>
    %161 = vector.multi_reduction <add>, %141, %cst_89 [0] : vector<8x128xf32> to vector<128xf32>
    %162 = vector.shape_cast %161 : vector<128xf32> to vector<1x128xf32>
    %163 = arith.addf %157, %162 : vector<1x128xf32>
    %164 = arith.mulf %141, %141 : vector<8x128xf32>
    %cst_90 = arith.constant dense<0.000000e+00> : vector<128xf32>
    %165 = vector.multi_reduction <add>, %164, %cst_90 [0] : vector<8x128xf32> to vector<128xf32>
    %166 = vector.shape_cast %165 : vector<128xf32> to vector<1x128xf32>
    %167 = arith.addf %160, %166 : vector<1x128xf32>
    %cst_91 = arith.constant dense<0.000000e+00> : vector<128xf32>
    %168 = vector.multi_reduction <add>, %150, %cst_91 [0] : vector<8x128xf32> to vector<128xf32>
    %169 = vector.shape_cast %168 : vector<128xf32> to vector<1x128xf32>
    %170 = arith.addf %163, %169 : vector<1x128xf32>
    %171 = arith.mulf %150, %150 : vector<8x128xf32>
    %cst_92 = arith.constant dense<0.000000e+00> : vector<128xf32>
    %172 = vector.multi_reduction <add>, %171, %cst_92 [0] : vector<8x128xf32> to vector<128xf32>
    %173 = vector.shape_cast %172 : vector<128xf32> to vector<1x128xf32>
    %174 = arith.addf %167, %173 : vector<1x128xf32>
    %cst_93 = arith.constant dense<0.000000e+00> : vector<128xf32>
    %175 = vector.multi_reduction <add>, %155, %cst_93 [0] : vector<8x128xf32> to vector<128xf32>
    %176 = vector.shape_cast %175 : vector<128xf32> to vector<1x128xf32>
    %177 = arith.addf %170, %176 : vector<1x128xf32>
    %178 = arith.mulf %155, %155 : vector<8x128xf32>
    %cst_94 = arith.constant dense<0.000000e+00> : vector<128xf32>
    %179 = vector.multi_reduction <add>, %178, %cst_94 [0] : vector<8x128xf32> to vector<128xf32>
    %180 = vector.shape_cast %179 : vector<128xf32> to vector<1x128xf32>
    %181 = arith.addf %174, %180 : vector<1x128xf32>
    %c0_95 = arith.constant 0 : index
    %c0_96 = arith.constant 0 : index
    %182 = vector.load %arg15[%c0_95, %c0_96] : memref<128x8xf32, #tpu.memory_space<vmem>>, vector<128x8xf32>
    %cst_97 = arith.constant dense<0.000000e+00> : vector<1x8xf32>
    %183 = tpu.matmul %177, %182, %cst_97 {dimension_numbers = #tpu.dot_dimension_numbers<[1], [0], [0], [1], [0, 0, 1, 1], [], []>} : vector<1x128xf32>, vector<128x8xf32>, vector<1x8xf32> -> vector<1x8xf32>
    %c0_98 = arith.constant 0 : index
    %c0_99 = arith.constant 0 : index
    %184 = vector.load %arg15[%c0_98, %c0_99] : memref<128x8xf32, #tpu.memory_space<vmem>>, vector<128x8xf32>
    %cst_100 = arith.constant dense<0.000000e+00> : vector<1x8xf32>
    %185 = tpu.matmul %181, %184, %cst_100 {dimension_numbers = #tpu.dot_dimension_numbers<[1], [0], [0], [1], [0, 0, 1, 1], [], []>} : vector<1x128xf32>, vector<128x8xf32>, vector<1x8xf32> -> vector<1x8xf32>
    %cst_101 = arith.constant 0.001953125 : f32
    %186 = vector.broadcast %cst_101 : f32 to vector<1x8xf32>
    %187 = arith.mulf %183, %186 : vector<1x8xf32>
    %cst_102 = arith.constant 0.001953125 : f32
    %188 = vector.broadcast %cst_102 : f32 to vector<1x8xf32>
    %189 = arith.mulf %185, %188 : vector<1x8xf32>
    %190 = arith.mulf %187, %187 : vector<1x8xf32>
    %191 = arith.subf %189, %190 : vector<1x8xf32>
    %c0_103 = arith.constant 0 : index
    %c0_104 = arith.constant 0 : index
    %192 = vector.load %arg13[%c0_103, %c0_104] : memref<1x8xf32, #tpu.memory_space<vmem>>, vector<1x8xf32>
    %cst_105 = arith.constant 9.99999974E-6 : f32
    %193 = vector.broadcast %cst_105 : f32 to vector<1x8xf32>
    %194 = arith.addf %191, %193 : vector<1x8xf32>
    %195 = math.rsqrt %194 : vector<1x8xf32>
    %196 = arith.mulf %192, %195 : vector<1x8xf32>
    %c0_106 = arith.constant 0 : index
    %c0_107 = arith.constant 0 : index
    %197 = vector.load %arg14[%c0_106, %c0_107] : memref<1x8xf32, #tpu.memory_space<vmem>>, vector<1x8xf32>
    %198 = arith.mulf %187, %196 : vector<1x8xf32>
    %199 = arith.subf %197, %198 : vector<1x8xf32>
    %c0_108 = arith.constant 0 : index
    %c0_109 = arith.constant 0 : index
    %200 = vector.load %arg16[%c0_108, %c0_109] : memref<8x128xf32, #tpu.memory_space<vmem>>, vector<8x128xf32>
    %cst_110 = arith.constant dense<0.000000e+00> : vector<1x128xf32>
    %201 = tpu.matmul %196, %200, %cst_110 {dimension_numbers = #tpu.dot_dimension_numbers<[1], [0], [0], [1], [0, 0, 1, 1], [], []>} : vector<1x8xf32>, vector<8x128xf32>, vector<1x128xf32> -> vector<1x128xf32>
    %c0_111 = arith.constant 0 : index
    %c0_112 = arith.constant 0 : index
    %202 = vector.load %arg16[%c0_111, %c0_112] : memref<8x128xf32, #tpu.memory_space<vmem>>, vector<8x128xf32>
    %cst_113 = arith.constant dense<0.000000e+00> : vector<1x128xf32>
    %203 = tpu.matmul %199, %202, %cst_113 {dimension_numbers = #tpu.dot_dimension_numbers<[1], [0], [0], [1], [0, 0, 1, 1], [], []>} : vector<1x8xf32>, vector<8x128xf32>, vector<1x128xf32> -> vector<1x128xf32>
    %204 = vector.broadcast %201 : vector<1x128xf32> to vector<8x128xf32>
    %205 = arith.mulf %136, %204 : vector<8x128xf32>
    %206 = vector.broadcast %203 : vector<1x128xf32> to vector<8x128xf32>
    %207 = arith.addf %205, %206 : vector<8x128xf32>
    %cst_114 = arith.constant 2.000000e-01 : f32
    %208 = vector.broadcast %cst_114 : f32 to vector<8x128xf32>
    %209 = arith.mulf %208, %207 : vector<8x128xf32>
    %210 = arith.maximumf %207, %209 : vector<8x128xf32>
    %211 = vector.broadcast %201 : vector<1x128xf32> to vector<8x128xf32>
    %212 = arith.mulf %141, %211 : vector<8x128xf32>
    %213 = vector.broadcast %203 : vector<1x128xf32> to vector<8x128xf32>
    %214 = arith.addf %212, %213 : vector<8x128xf32>
    %cst_115 = arith.constant 2.000000e-01 : f32
    %215 = vector.broadcast %cst_115 : f32 to vector<8x128xf32>
    %216 = arith.mulf %215, %214 : vector<8x128xf32>
    %217 = arith.maximumf %214, %216 : vector<8x128xf32>
    %218 = vector.broadcast %201 : vector<1x128xf32> to vector<8x128xf32>
    %219 = arith.mulf %150, %218 : vector<8x128xf32>
    %220 = vector.broadcast %203 : vector<1x128xf32> to vector<8x128xf32>
    %221 = arith.addf %219, %220 : vector<8x128xf32>
    %cst_116 = arith.constant 2.000000e-01 : f32
    %222 = vector.broadcast %cst_116 : f32 to vector<8x128xf32>
    %223 = arith.mulf %222, %221 : vector<8x128xf32>
    %224 = arith.maximumf %221, %223 : vector<8x128xf32>
    %225 = vector.broadcast %201 : vector<1x128xf32> to vector<8x128xf32>
    %226 = arith.mulf %155, %225 : vector<8x128xf32>
    %227 = vector.broadcast %203 : vector<1x128xf32> to vector<8x128xf32>
    %228 = arith.addf %226, %227 : vector<8x128xf32>
    %cst_117 = arith.constant 2.000000e-01 : f32
    %229 = vector.broadcast %cst_117 : f32 to vector<8x128xf32>
    %230 = arith.mulf %229, %228 : vector<8x128xf32>
    %231 = arith.maximumf %228, %230 : vector<8x128xf32>
    %c0_118 = arith.constant 0 : index
    %c0_119 = arith.constant 0 : index
    %c0_120 = arith.constant 0 : index
    %232 = vector.load %arg4[%c0_118, %c0_119, %c0_120] : memref<4x128x96xbf16, #tpu.memory_space<vmem>>, vector<1x128x96xbf16>
    %233 = vector.shape_cast %232 : vector<1x128x96xbf16> to vector<128x96xbf16>
    %c1_121 = arith.constant 1 : index
    %c0_122 = arith.constant 0 : index
    %c0_123 = arith.constant 0 : index
    %234 = vector.load %arg4[%c1_121, %c0_122, %c0_123] : memref<4x128x96xbf16, #tpu.memory_space<vmem>>, vector<1x128x96xbf16>
    %235 = vector.shape_cast %234 : vector<1x128x96xbf16> to vector<128x96xbf16>
    %c2_124 = arith.constant 2 : index
    %c0_125 = arith.constant 0 : index
    %c0_126 = arith.constant 0 : index
    %236 = vector.load %arg4[%c2_124, %c0_125, %c0_126] : memref<4x128x96xbf16, #tpu.memory_space<vmem>>, vector<1x128x96xbf16>
    %237 = vector.shape_cast %236 : vector<1x128x96xbf16> to vector<128x96xbf16>
    %c3_127 = arith.constant 3 : index
    %c0_128 = arith.constant 0 : index
    %c0_129 = arith.constant 0 : index
    %238 = vector.load %arg4[%c3_127, %c0_128, %c0_129] : memref<4x128x96xbf16, #tpu.memory_space<vmem>>, vector<1x128x96xbf16>
    %239 = vector.shape_cast %238 : vector<1x128x96xbf16> to vector<128x96xbf16>
    %cst_130 = arith.constant 0.000000e+00 : f32
    %240 = vector.broadcast %cst_130 : f32 to vector<1x128xf32>
    %241 = vector.extract_strided_slice %231 {offsets = [0, 0], sizes = [3, 128], strides = [1, 1]} : vector<8x128xf32> to vector<3x128xf32>
    %242 = vector.extract_strided_slice %231 {offsets = [4, 0], sizes = [3, 128], strides = [1, 1]} : vector<8x128xf32> to vector<3x128xf32>
    %243 = tpu.concatenate %240, %241, %240, %242 in 0 : vector<1x128xf32>, vector<3x128xf32>, vector<1x128xf32>, vector<3x128xf32> -> vector<8x128xf32>
    %244 = arith.truncf %210 : vector<8x128xf32> to vector<8x128xbf16>
    %cst_131 = arith.constant dense<0.000000e+00> : vector<8x96xf32>
    %245 = tpu.matmul %244, %235, %cst_131 {dimension_numbers = #tpu.dot_dimension_numbers<[1], [0], [0], [1], [0, 0, 1, 1], [], []>} : vector<8x128xbf16>, vector<128x96xbf16>, vector<8x96xf32> -> vector<8x96xf32>
    %246 = arith.truncf %243 : vector<8x128xf32> to vector<8x128xbf16>
    %cst_132 = arith.constant dense<0.000000e+00> : vector<8x96xf32>
    %247 = tpu.matmul %246, %239, %cst_132 {dimension_numbers = #tpu.dot_dimension_numbers<[1], [0], [0], [1], [0, 0, 1, 1], [], []>} : vector<8x128xbf16>, vector<128x96xbf16>, vector<8x96xf32> -> vector<8x96xf32>
    %248 = arith.addf %245, %247 : vector<8x96xf32>
    %249 = arith.truncf %210 : vector<8x128xf32> to vector<8x128xbf16>
    %cst_133 = arith.constant dense<0.000000e+00> : vector<8x96xf32>
    %250 = tpu.matmul %249, %237, %cst_133 {dimension_numbers = #tpu.dot_dimension_numbers<[1], [0], [0], [1], [0, 0, 1, 1], [], []>} : vector<8x128xbf16>, vector<128x96xbf16>, vector<8x96xf32> -> vector<8x96xf32>
    %251 = arith.truncf %217 : vector<8x128xf32> to vector<8x128xbf16>
    %cst_134 = arith.constant dense<0.000000e+00> : vector<8x96xf32>
    %252 = tpu.matmul %251, %233, %cst_134 {dimension_numbers = #tpu.dot_dimension_numbers<[1], [0], [0], [1], [0, 0, 1, 1], [], []>} : vector<8x128xbf16>, vector<128x96xbf16>, vector<8x96xf32> -> vector<8x96xf32>
    %253 = arith.addf %250, %252 : vector<8x96xf32>
    %254 = arith.truncf %217 : vector<8x128xf32> to vector<8x128xbf16>
    %cst_135 = arith.constant dense<0.000000e+00> : vector<8x96xf32>
    %255 = tpu.matmul %254, %235, %cst_135 {dimension_numbers = #tpu.dot_dimension_numbers<[1], [0], [0], [1], [0, 0, 1, 1], [], []>} : vector<8x128xbf16>, vector<128x96xbf16>, vector<8x96xf32> -> vector<8x96xf32>
    %256 = arith.truncf %210 : vector<8x128xf32> to vector<8x128xbf16>
    %cst_136 = arith.constant dense<0.000000e+00> : vector<8x96xf32>
    %257 = tpu.matmul %256, %239, %cst_136 {dimension_numbers = #tpu.dot_dimension_numbers<[1], [0], [0], [1], [0, 0, 1, 1], [], []>} : vector<8x128xbf16>, vector<128x96xbf16>, vector<8x96xf32> -> vector<8x96xf32>
    %258 = arith.addf %255, %257 : vector<8x96xf32>
    %259 = arith.truncf %217 : vector<8x128xf32> to vector<8x128xbf16>
    %cst_137 = arith.constant dense<0.000000e+00> : vector<8x96xf32>
    %260 = tpu.matmul %259, %237, %cst_137 {dimension_numbers = #tpu.dot_dimension_numbers<[1], [0], [0], [1], [0, 0, 1, 1], [], []>} : vector<8x128xbf16>, vector<128x96xbf16>, vector<8x96xf32> -> vector<8x96xf32>
    %261 = arith.truncf %224 : vector<8x128xf32> to vector<8x128xbf16>
    %cst_138 = arith.constant dense<0.000000e+00> : vector<8x96xf32>
    %262 = tpu.matmul %261, %233, %cst_138 {dimension_numbers = #tpu.dot_dimension_numbers<[1], [0], [0], [1], [0, 0, 1, 1], [], []>} : vector<8x128xbf16>, vector<128x96xbf16>, vector<8x96xf32> -> vector<8x96xf32>
    %263 = arith.addf %260, %262 : vector<8x96xf32>
    %264 = arith.truncf %224 : vector<8x128xf32> to vector<8x128xbf16>
    %cst_139 = arith.constant dense<0.000000e+00> : vector<8x96xf32>
    %265 = tpu.matmul %264, %235, %cst_139 {dimension_numbers = #tpu.dot_dimension_numbers<[1], [0], [0], [1], [0, 0, 1, 1], [], []>} : vector<8x128xbf16>, vector<128x96xbf16>, vector<8x96xf32> -> vector<8x96xf32>
    %266 = arith.truncf %217 : vector<8x128xf32> to vector<8x128xbf16>
    %cst_140 = arith.constant dense<0.000000e+00> : vector<8x96xf32>
    %267 = tpu.matmul %266, %239, %cst_140 {dimension_numbers = #tpu.dot_dimension_numbers<[1], [0], [0], [1], [0, 0, 1, 1], [], []>} : vector<8x128xbf16>, vector<128x96xbf16>, vector<8x96xf32> -> vector<8x96xf32>
    %268 = arith.addf %265, %267 : vector<8x96xf32>
    %269 = arith.truncf %224 : vector<8x128xf32> to vector<8x128xbf16>
    %cst_141 = arith.constant dense<0.000000e+00> : vector<8x96xf32>
    %270 = tpu.matmul %269, %237, %cst_141 {dimension_numbers = #tpu.dot_dimension_numbers<[1], [0], [0], [1], [0, 0, 1, 1], [], []>} : vector<8x128xbf16>, vector<128x96xbf16>, vector<8x96xf32> -> vector<8x96xf32>
    %271 = arith.truncf %231 : vector<8x128xf32> to vector<8x128xbf16>
    %cst_142 = arith.constant dense<0.000000e+00> : vector<8x96xf32>
    %272 = tpu.matmul %271, %233, %cst_142 {dimension_numbers = #tpu.dot_dimension_numbers<[1], [0], [0], [1], [0, 0, 1, 1], [], []>} : vector<8x128xbf16>, vector<128x96xbf16>, vector<8x96xf32> -> vector<8x96xf32>
    %273 = arith.addf %270, %272 : vector<8x96xf32>
    %cst_143 = arith.constant 0.000000e+00 : f32
    %274 = vector.broadcast %cst_143 : f32 to vector<1x128xf32>
    %275 = vector.extract_strided_slice %210 {offsets = [1, 0], sizes = [3, 128], strides = [1, 1]} : vector<8x128xf32> to vector<3x128xf32>
    %276 = vector.extract_strided_slice %210 {offsets = [5, 0], sizes = [3, 128], strides = [1, 1]} : vector<8x128xf32> to vector<3x128xf32>
    %277 = tpu.concatenate %275, %274, %276, %274 in 0 : vector<3x128xf32>, vector<1x128xf32>, vector<3x128xf32>, vector<1x128xf32> -> vector<8x128xf32>
    %278 = arith.truncf %231 : vector<8x128xf32> to vector<8x128xbf16>
    %cst_144 = arith.constant dense<0.000000e+00> : vector<8x96xf32>
    %279 = tpu.matmul %278, %235, %cst_144 {dimension_numbers = #tpu.dot_dimension_numbers<[1], [0], [0], [1], [0, 0, 1, 1], [], []>} : vector<8x128xbf16>, vector<128x96xbf16>, vector<8x96xf32> -> vector<8x96xf32>
    %280 = arith.truncf %224 : vector<8x128xf32> to vector<8x128xbf16>
    %cst_145 = arith.constant dense<0.000000e+00> : vector<8x96xf32>
    %281 = tpu.matmul %280, %239, %cst_145 {dimension_numbers = #tpu.dot_dimension_numbers<[1], [0], [0], [1], [0, 0, 1, 1], [], []>} : vector<8x128xbf16>, vector<128x96xbf16>, vector<8x96xf32> -> vector<8x96xf32>
    %282 = arith.addf %279, %281 : vector<8x96xf32>
    %283 = arith.truncf %231 : vector<8x128xf32> to vector<8x128xbf16>
    %cst_146 = arith.constant dense<0.000000e+00> : vector<8x96xf32>
    %284 = tpu.matmul %283, %237, %cst_146 {dimension_numbers = #tpu.dot_dimension_numbers<[1], [0], [0], [1], [0, 0, 1, 1], [], []>} : vector<8x128xbf16>, vector<128x96xbf16>, vector<8x96xf32> -> vector<8x96xf32>
    %285 = arith.truncf %277 : vector<8x128xf32> to vector<8x128xbf16>
    %cst_147 = arith.constant dense<0.000000e+00> : vector<8x96xf32>
    %286 = tpu.matmul %285, %233, %cst_147 {dimension_numbers = #tpu.dot_dimension_numbers<[1], [0], [0], [1], [0, 0, 1, 1], [], []>} : vector<8x128xbf16>, vector<128x96xbf16>, vector<8x96xf32> -> vector<8x96xf32>
    %287 = arith.addf %284, %286 : vector<8x96xf32>
    %288 = math.tanh %248 : vector<8x96xf32>
    %c0_148 = arith.constant 0 : index
    %c0_149 = arith.constant 0 : index
    %c0_150 = arith.constant 0 : index
    %289 = vector.load %arg17[%c0_148, %c0_149, %c0_150] : memref<8x8x96xf32, #tpu.memory_space<vmem>>, vector<1x8x96xf32>
    %290 = vector.shape_cast %289 : vector<1x8x96xf32> to vector<8x96xf32>
    %291 = vector.shape_cast %288 : vector<8x96xf32> to vector<1x8x96xf32>
    tpu.vector_store %arg17[%c0_148, %c0_149, %c0_150], %291 {strides = array<i32>} : memref<8x8x96xf32, #tpu.memory_space<vmem>>, vector<1x8x96xf32>,
    %292 = math.tanh %253 : vector<8x96xf32>
    %c1_151 = arith.constant 1 : index
    %c0_152 = arith.constant 0 : index
    %c0_153 = arith.constant 0 : index
    %293 = vector.load %arg17[%c1_151, %c0_152, %c0_153] : memref<8x8x96xf32, #tpu.memory_space<vmem>>, vector<1x8x96xf32>
    %294 = vector.shape_cast %293 : vector<1x8x96xf32> to vector<8x96xf32>
    %295 = vector.shape_cast %292 : vector<8x96xf32> to vector<1x8x96xf32>
    tpu.vector_store %arg17[%c1_151, %c0_152, %c0_153], %295 {strides = array<i32>} : memref<8x8x96xf32, #tpu.memory_space<vmem>>, vector<1x8x96xf32>,
    %296 = math.tanh %258 : vector<8x96xf32>
    %c2_154 = arith.constant 2 : index
    %c0_155 = arith.constant 0 : index
    %c0_156 = arith.constant 0 : index
    %297 = vector.load %arg17[%c2_154, %c0_155, %c0_156] : memref<8x8x96xf32, #tpu.memory_space<vmem>>, vector<1x8x96xf32>
    %298 = vector.shape_cast %297 : vector<1x8x96xf32> to vector<8x96xf32>
    %299 = vector.shape_cast %296 : vector<8x96xf32> to vector<1x8x96xf32>
    tpu.vector_store %arg17[%c2_154, %c0_155, %c0_156], %299 {strides = array<i32>} : memref<8x8x96xf32, #tpu.memory_space<vmem>>, vector<1x8x96xf32>,
    %300 = math.tanh %263 : vector<8x96xf32>
    %c3_157 = arith.constant 3 : index
    %c0_158 = arith.constant 0 : index
    %c0_159 = arith.constant 0 : index
    %301 = vector.load %arg17[%c3_157, %c0_158, %c0_159] : memref<8x8x96xf32, #tpu.memory_space<vmem>>, vector<1x8x96xf32>
    %302 = vector.shape_cast %301 : vector<1x8x96xf32> to vector<8x96xf32>
    %303 = vector.shape_cast %300 : vector<8x96xf32> to vector<1x8x96xf32>
    tpu.vector_store %arg17[%c3_157, %c0_158, %c0_159], %303 {strides = array<i32>} : memref<8x8x96xf32, #tpu.memory_space<vmem>>, vector<1x8x96xf32>,
    %304 = math.tanh %268 : vector<8x96xf32>
    %c4 = arith.constant 4 : index
    %c0_160 = arith.constant 0 : index
    %c0_161 = arith.constant 0 : index
    %305 = vector.load %arg17[%c4, %c0_160, %c0_161] : memref<8x8x96xf32, #tpu.memory_space<vmem>>, vector<1x8x96xf32>
    %306 = vector.shape_cast %305 : vector<1x8x96xf32> to vector<8x96xf32>
    %307 = vector.shape_cast %304 : vector<8x96xf32> to vector<1x8x96xf32>
    tpu.vector_store %arg17[%c4, %c0_160, %c0_161], %307 {strides = array<i32>} : memref<8x8x96xf32, #tpu.memory_space<vmem>>, vector<1x8x96xf32>,
    %308 = math.tanh %273 : vector<8x96xf32>
    %c5 = arith.constant 5 : index
    %c0_162 = arith.constant 0 : index
    %c0_163 = arith.constant 0 : index
    %309 = vector.load %arg17[%c5, %c0_162, %c0_163] : memref<8x8x96xf32, #tpu.memory_space<vmem>>, vector<1x8x96xf32>
    %310 = vector.shape_cast %309 : vector<1x8x96xf32> to vector<8x96xf32>
    %311 = vector.shape_cast %308 : vector<8x96xf32> to vector<1x8x96xf32>
    tpu.vector_store %arg17[%c5, %c0_162, %c0_163], %311 {strides = array<i32>} : memref<8x8x96xf32, #tpu.memory_space<vmem>>, vector<1x8x96xf32>,
    %312 = math.tanh %282 : vector<8x96xf32>
    %c6 = arith.constant 6 : index
    %c0_164 = arith.constant 0 : index
    %c0_165 = arith.constant 0 : index
    %313 = vector.load %arg17[%c6, %c0_164, %c0_165] : memref<8x8x96xf32, #tpu.memory_space<vmem>>, vector<1x8x96xf32>
    %314 = vector.shape_cast %313 : vector<1x8x96xf32> to vector<8x96xf32>
    %315 = vector.shape_cast %312 : vector<8x96xf32> to vector<1x8x96xf32>
    tpu.vector_store %arg17[%c6, %c0_164, %c0_165], %315 {strides = array<i32>} : memref<8x8x96xf32, #tpu.memory_space<vmem>>, vector<1x8x96xf32>,
    %316 = math.tanh %287 : vector<8x96xf32>
    %c7 = arith.constant 7 : index
    %c0_166 = arith.constant 0 : index
    %c0_167 = arith.constant 0 : index
    %317 = vector.load %arg17[%c7, %c0_166, %c0_167] : memref<8x8x96xf32, #tpu.memory_space<vmem>>, vector<1x8x96xf32>
    %318 = vector.shape_cast %317 : vector<1x8x96xf32> to vector<8x96xf32>
    %319 = vector.shape_cast %316 : vector<8x96xf32> to vector<1x8x96xf32>
    tpu.vector_store %arg17[%c7, %c0_166, %c0_167], %319 {strides = array<i32>} : memref<8x8x96xf32, #tpu.memory_space<vmem>>, vector<1x8x96xf32>,
    return
  }
}

</mosaic_0001>

<llo_original>
// kernel: generator_forward.1
$region0: #{generator_forward.1}
  #allocation0 [shape = 'u32[]', space=smem, size = 0x4, offset = 0x4, fixed_abs, tag = 'smem constant byte address 0x4 - core index']
  #allocation1 [shape = 'u32[144,128]{1,0:T(1,128)}', space=vmem, size = 0x12000, scoped, tag = 'internal scratch']
  %s0 = inlined_call_operand.vmem [shape: bf16[2,100], index: 0, kind: input, shape index: {}]
  %s1 = inlined_call_operand.vmem [shape: bf16[100,512], index: 1, kind: input, shape index: {}]
  %s2 = inlined_call_operand.vmem [shape: bf16[4,128,128], index: 2, kind: input, shape index: {}]
  %s3 = inlined_call_operand.vmem [shape: bf16[4,128,128], index: 3, kind: input, shape index: {}]
  %s4 = inlined_call_operand.vmem [shape: bf16[4,128,96], index: 4, kind: input, shape index: {}]
  %s5 = inlined_call_operand.vmem [shape: f32[1,32], index: 5, kind: input, shape index: {}]
  %s6 = inlined_call_operand.vmem [shape: f32[1,32], index: 6, kind: input, shape index: {}]
  %s7 = inlined_call_operand.vmem [shape: f32[128,32], index: 7, kind: input, shape index: {}]
  %s8 = inlined_call_operand.hbm [shape: f32[32,128], index: 8, kind: input, shape index: {}]
  %s9 = inlined_call_operand.vmem [shape: f32[1,16], index: 9, kind: input, shape index: {}]
  %s10 = inlined_call_operand.vmem [shape: f32[1,16], index: 10, kind: input, shape index: {}]
  %s11 = inlined_call_operand.vmem [shape: f32[128,16], index: 11, kind: input, shape index: {}]
  %s12 = inlined_call_operand.vmem [shape: f32[16,128], index: 12, kind: input, shape index: {}]
  %s13 = inlined_call_operand.vmem [shape: f32[1,8], index: 13, kind: input, shape index: {}]
  %s14 = inlined_call_operand.hbm [shape: f32[1,8], index: 14, kind: input, shape index: {}]
  %s15 = inlined_call_operand.vmem [shape: f32[128,8], index: 15, kind: input, shape index: {}]
  %s16 = inlined_call_operand.hbm [shape: f32[8,128], index: 16, kind: input, shape index: {}]
  %s17 = inlined_call_operand.vmem [shape: f32[8,8,96], index: 17, kind: output, shape index: {}]
  %s18 = sld [smem:[#allocation0]]
  $region90: #{generator_forward.1} parent=0
    _
  %s20 = ssub.s32 1, %s18
  %s21 = scalar_select 0, %s20, %s18
  $region1: #{generator_forward.1} parent=0
    #allocation2 [shape = 'u8[16384]{0}', space=vmem, size = 0x4000, scoped, tag = 'input window, operand 8, single buffered']
    #allocation3 [shape = 's32[1]{0}', space=sflag, size = 0x4, scoped, tag = 'scoped memory for generator_forward.1']
    #allocation4 [shape = 'u8[512]{0}', space=vmem, size = 0x400, scoped, tag = 'input window, operand 14, single buffered']
    #allocation5 [shape = 's32[1]{0}', space=sflag, size = 0x4, scoped, tag = 'scoped memory for generator_forward.1']
    #allocation6 [shape = 'u8[4096]{0}', space=vmem, size = 0x1000, scoped, tag = 'input window, operand 16, single buffered']
    %22 = vsyncpa [#allocation3], 0
    %23 = vsyncpa [#allocation5], 0
    // Predicated region
    $region2: #{generator_forward.1} parent=1 // pred_check
      _
    $region3: #{generator_forward.1} parent=1 // pred_check_branch
      %25 = sbr.rel (0) target = $region5
    $region4: #{generator_forward.1} parent=1 // pred_region
      _
    $region5: #{generator_forward.1} parent=1 // pred_fallthru
      _
    // Predicated region
    $region6: #{generator_forward.1} parent=1 // pred_check
      _
    $region7: #{generator_forward.1} parent=1 // pred_check_branch
      %27 = sbr.rel (0) target = $region9
    $region8: #{generator_forward.1} parent=1 // pred_region
      _
    $region9: #{generator_forward.1} parent=1 // pred_fallthru
      _
    // Predicated region
    $region10: #{generator_forward.1} parent=1 // pred_check
      _
    $region11: #{generator_forward.1} parent=1 // pred_check_branch
      %29 = sbr.rel (0) target = $region13
    $region12: #{generator_forward.1} parent=1 // pred_region
      _
    $region13: #{generator_forward.1} parent=1 // pred_fallthru
      _
    // Predicated region
    $region14: #{generator_forward.1} parent=1 // pred_check
      _
    $region15: #{generator_forward.1} parent=1 // pred_check_branch
      %31 = sbr.rel (0) target = $region17
    $region16: #{generator_forward.1} parent=1 // pred_region
      _
    $region17: #{generator_forward.1} parent=1 // pred_fallthru
      _
    // Predicated region
    $region18: #{generator_forward.1} parent=1 // pred_check
      _
    $region19: #{generator_forward.1} parent=1 // pred_check_branch
      %33 = sbr.rel (0) target = $region21
    $region20: #{generator_forward.1} parent=1 // pred_region
      _
    $region21: #{generator_forward.1} parent=1 // pred_fallthru
      _
    // Predicated region
    $region22: #{generator_forward.1} parent=1 // pred_check
      _
    $region23: #{generator_forward.1} parent=1 // pred_check_branch
      %35 = sbr.rel (0) target = $region25
    $region24: #{generator_forward.1} parent=1 // pred_region
      _
    $region25: #{generator_forward.1} parent=1 // pred_fallthru
      _
    // Predicated region
    $region26: #{generator_forward.1} parent=1 // pred_check
      _
    $region27: #{generator_forward.1} parent=1 // pred_check_branch
      %37 = sbr.rel (0) target = $region29
    $region28: #{generator_forward.1} parent=1 // pred_region
      _
    $region29: #{generator_forward.1} parent=1 // pred_fallthru
      _
    // Predicated region
    $region30: #{generator_forward.1} parent=1 // pred_check
      _
    $region31: #{generator_forward.1} parent=1 // pred_check_branch
      %39 = sbr.rel (0) target = $region33
    $region32: #{generator_forward.1} parent=1 // pred_region
      _
    $region33: #{generator_forward.1} parent=1 // pred_fallthru
      _
    // Predicated region
    $region34: #{generator_forward.1} parent=1 // pred_check
      _
    $region35: #{generator_forward.1} parent=1 // pred_check_branch
      %41 = sbr.rel (0) target = $region37
    $region36: #{generator_forward.1} parent=1 // pred_region
      %s43 = ssub.s32 512, 512
      %44 = vsyncadd [#allocation3], %s43
      %s45 = sshll.u32 [#allocation2], 4
      %s46 = int_to_ptr.vmem [resolvable:$true] %s45
      %51 = dma.hbm_to_vmem [thread:$0]  %s8, 512, %s46, [#allocation3], 128, 128, 8
    $region37: #{generator_forward.1} parent=1 // pred_fallthru
      _
    // Predicated region
    $region38: #{generator_forward.1} parent=1 // pred_check
      _
    $region39: #{generator_forward.1} parent=1 // pred_check_branch
      %53 = sbr.rel (0) target = $region41
    $region40: #{generator_forward.1} parent=1 // pred_region
      _
    $region41: #{generator_forward.1} parent=1 // pred_fallthru
      _
    // Predicated region
    $region42: #{generator_forward.1} parent=1 // pred_check
      _
    $region43: #{generator_forward.1} parent=1 // pred_check_branch
      %55 = sbr.rel (0) target = $region45
    $region44: #{generator_forward.1} parent=1 // pred_region
      _
    $region45: #{generator_forward.1} parent=1 // pred_fallthru
      _
    // Predicated region
    $region46: #{generator_forward.1} parent=1 // pred_check
      _
    $region47: #{generator_forward.1} parent=1 // pred_check_branch
      %57 = sbr.rel (0) target = $region49
    $region48: #{generator_forward.1} parent=1 // pred_region
      _
    $region49: #{generator_forward.1} parent=1 // pred_fallthru
      _
    // Predicated region
    $region50: #{generator_forward.1} parent=1 // pred_check
      _
    $region51: #{generator_forward.1} parent=1 // pred_check_branch
      %59 = sbr.rel (0) target = $region53
    $region52: #{generator_forward.1} parent=1 // pred_region
      _
    $region53: #{generator_forward.1} parent=1 // pred_fallthru
      _
    // Predicated region
    $region54: #{generator_forward.1} parent=1 // pred_check
      _
    $region55: #{generator_forward.1} parent=1 // pred_check_branch
      %61 = sbr.rel (0) target = $region57
    $region56: #{generator_forward.1} parent=1 // pred_region
      _
    $region57: #{generator_forward.1} parent=1 // pred_fallthru
      _
    // Predicated region
    $region58: #{generator_forward.1} parent=1 // pred_check
      _
    $region59: #{generator_forward.1} parent=1 // pred_check_branch
      %63 = sbr.rel (0) target = $region61
    $region60: #{generator_forward.1} parent=1 // pred_region
      %s65 = ssub.s32 16, 16
      %66 = vsyncadd [#allocation5], %s65
      %s68 = sshll.u32 [#allocation4], 4
      %s69 = int_to_ptr.vmem [resolvable:$true] %s68
      %71 = dma.hbm_to_vmem [thread:$0]  %s14, 16, %s69, [#allocation5]
    $region61: #{generator_forward.1} parent=1 // pred_fallthru
      _
    // Predicated region
    $region62: #{generator_forward.1} parent=1 // pred_check
      _
    $region63: #{generator_forward.1} parent=1 // pred_check_branch
      %73 = sbr.rel (0) target = $region65
    $region64: #{generator_forward.1} parent=1 // pred_region
      _
    $region65: #{generator_forward.1} parent=1 // pred_fallthru
      _
    // Predicated region
    $region66: #{generator_forward.1} parent=1 // pred_check
      _
    $region67: #{generator_forward.1} parent=1 // pred_check_branch
      %75 = sbr.rel (0) target = $region69
    $region68: #{generator_forward.1} parent=1 // pred_region
      %s77 = ssub.s32 128, 128
      %78 = vsyncadd [#allocation5], %s77
      %s80 = sshll.u32 [#allocation6], 4
      %s81 = int_to_ptr.vmem [resolvable:$true] %s80
      %83 = dma.hbm_to_vmem [thread:$0]  %s16, 128, %s81, [#allocation5]
    $region69: #{generator_forward.1} parent=1 // pred_fallthru
      _
    // Predicated region
    $region70: #{generator_forward.1} parent=1 // pred_check
      _
    $region71: #{generator_forward.1} parent=1 // pred_check_branch
      %85 = sbr.rel (0) target = $region73
    $region72: #{generator_forward.1} parent=1 // pred_region
      %86 = dma.done [#allocation3], 512
    $region73: #{generator_forward.1} parent=1 // pred_fallthru
      _
    // Predicated region
    $region74: #{generator_forward.1} parent=1 // pred_check
      _
    $region75: #{generator_forward.1} parent=1 // pred_check_branch
      %88 = sbr.rel (0) target = $region77
    $region76: #{generator_forward.1} parent=1 // pred_region
      %89 = dma.done [#allocation5], 16
    $region77: #{generator_forward.1} parent=1 // pred_fallthru
      _
    // Predicated region
    $region78: #{generator_forward.1} parent=1 // pred_check
      _
    $region79: #{generator_forward.1} parent=1 // pred_check_branch
      %91 = sbr.rel (0) target = $region81
    $region80: #{generator_forward.1} parent=1 // pred_region
      %92 = dma.done [#allocation5], 128
    $region81: #{generator_forward.1} parent=1 // pred_fallthru
      _
    %v94 = vld [vmem:[%s0] sm:$0x1]
    %v95 = vld [vmem:[%s1] sm:$0xff]
    %v96 = vld [vmem:[%s1 + $0x8] sm:$0xff]
    %v97 = vld [vmem:[%s1 + $0x10] sm:$0xff]
    %v98 = vld [vmem:[%s1 + $0x18] sm:$0xff]
    %v99 = vld [vmem:[%s1 + $0x20] sm:$0xff]
    %v100 = vld [vmem:[%s1 + $0x28] sm:$0xff]
    %v101 = vld [vmem:[%s1 + $0x30] sm:$0xff]
    %v102 = vld [vmem:[%s1 + $0x38] sm:$0xff]
    %v103 = vld [vmem:[%s1 + $0x40] sm:$0xff]
    %v104 = vld [vmem:[%s1 + $0x48] sm:$0xff]
    %v105 = vld [vmem:[%s1 + $0x50] sm:$0xff]
    %v106 = vld [vmem:[%s1 + $0x58] sm:$0xff]
    %v107 = vld [vmem:[%s1 + $0x60] sm:$0xff]
    %v108 = vld [vmem:[%s1 + $0x68] sm:$0xff]
    %v109 = vld [vmem:[%s1 + $0x70] sm:$0xff]
    %v110 = vld [vmem:[%s1 + $0x78] sm:$0xff]
    %v111 = vld [vmem:[%s1 + $0x80] sm:$0xff]
    %v112 = vld [vmem:[%s1 + $0x88] sm:$0xff]
    %v113 = vld [vmem:[%s1 + $0x90] sm:$0xff]
    %v114 = vld [vmem:[%s1 + $0x98] sm:$0xff]
    %v115 = vld [vmem:[%s1 + $0xa0] sm:$0xff]
    %v116 = vld [vmem:[%s1 + $0xa8] sm:$0xff]
    %v117 = vld [vmem:[%s1 + $0xb0] sm:$0xff]
    %v118 = vld [vmem:[%s1 + $0xb8] sm:$0xff]
    %v119 = vld [vmem:[%s1 + $0xc0] sm:$0x33]
    %v120 = vld [vmem:[%s1 + $0xc8] sm:$0x33]
    %v147 = vunpack.c.l.b16 %v95
    %v148 = vunpack.c.h.b16 %v95
    %v149 = vunpack.c.l.b16 %v96
    %v150 = vunpack.c.h.b16 %v96
    %v151 = vunpack.c.l.b16 %v97
    %v152 = vunpack.c.h.b16 %v97
    %v153 = vunpack.c.l.b16 %v98
    %v154 = vunpack.c.h.b16 %v98
    %v155 = vunpack.c.l.b16 %v99
    %v156 = vunpack.c.h.b16 %v99
    %v157 = vunpack.c.l.b16 %v100
    %v158 = vunpack.c.h.b16 %v100
    %v159 = vunpack.c.l.b16 %v101
    %v160 = vunpack.c.h.b16 %v101
    %v161 = vunpack.c.l.b16 %v102
    %v162 = vunpack.c.h.b16 %v102
    %v163 = vunpack.c.l.b16 %v103
    %v164 = vunpack.c.h.b16 %v103
    %v165 = vunpack.c.l.b16 %v104
    %v166 = vunpack.c.h.b16 %v104
    %v167 = vunpack.c.l.b16 %v105
    %v168 = vunpack.c.h.b16 %v105
    %v169 = vunpack.c.l.b16 %v106
    %v170 = vunpack.c.h.b16 %v106
    %v171 = vunpack.c.l.b16 %v107
    %v172 = vunpack.c.h.b16 %v107
    %v173 = vunpack.c.l.b16 %v108
    %v174 = vunpack.c.h.b16 %v108
    %v175 = vunpack.c.l.b16 %v109
    %v176 = vunpack.c.h.b16 %v109
    %v177 = vunpack.c.l.b16 %v110
    %v178 = vunpack.c.h.b16 %v110
    %v179 = vunpack.c.l.b16 %v111
    %v180 = vunpack.c.h.b16 %v111
    %v181 = vunpack.c.l.b16 %v112
    %v182 = vunpack.c.h.b16 %v112
    %v183 = vunpack.c.l.b16 %v113
    %v184 = vunpack.c.h.b16 %v113
    %v185 = vunpack.c.l.b16 %v114
    %v186 = vunpack.c.h.b16 %v114
    %v187 = vunpack.c.l.b16 %v115
    %v188 = vunpack.c.h.b16 %v115
    %v189 = vunpack.c.l.b16 %v116
    %v190 = vunpack.c.h.b16 %v116
    %v191 = vunpack.c.l.b16 %v117
    %v192 = vunpack.c.h.b16 %v117
    %v193 = vunpack.c.l.b16 %v118
    %v194 = vunpack.c.h.b16 %v118
    %v195 = vunpack.c.l.b16 %v119
    %v196 = vunpack.c.h.b16 %v119
    %v197 = vunpack.c.l.b16 %v120
    %v198 = vunpack.c.h.b16 %v120
    %v199 = vpack.c.b16 %v151, %v147
    %v200 = vpack.c.b16 %v152, %v148
    %v201 = vpack.c.b16 %v153, %v149
    %v202 = vpack.c.b16 %v154, %v150
    %v203 = vpack.c.b16 %v159, %v155
    %v204 = vpack.c.b16 %v160, %v156
    %v205 = vpack.c.b16 %v161, %v157
    %v206 = vpack.c.b16 %v162, %v158
    %v207 = vpack.c.b16 %v167, %v163
    %v208 = vpack.c.b16 %v168, %v164
    %v209 = vpack.c.b16 %v169, %v165
    %v210 = vpack.c.b16 %v170, %v166
    %v211 = vpack.c.b16 %v175, %v171
    %v212 = vpack.c.b16 %v176, %v172
    %v213 = vpack.c.b16 %v177, %v173
    %v214 = vpack.c.b16 %v178, %v174
    %v215 = vpack.c.b16 %v183, %v179
    %v216 = vpack.c.b16 %v184, %v180
    %v217 = vpack.c.b16 %v185, %v181
    %v218 = vpack.c.b16 %v186, %v182
    %v219 = vpack.c.b16 %v191, %v187
    %v220 = vpack.c.b16 %v192, %v188
    %v221 = vpack.c.b16 %v193, %v189
    %v222 = vpack.c.b16 %v194, %v190
    %v223 = vpack.c.b16 %v195, %v195
    %v224 = vpack.c.b16 %v196, %v196
    %v225 = vpack.c.b16 %v197, %v197
    %v226 = vpack.c.b16 %v198, %v198
    %vm251 = vcmask 818176
    %v253 = vsel %vm251, %v94, 0
    %vm255 = vcmask 1041408
    %v257 = vsel %vm255, %v223, 0
    %v260 = vsel %vm255, %v224, 0
    %v263 = vsel %vm255, %v225, 0
    %v266 = vsel %vm255, %v226, 0
    %268 = vmatprep.subr.bf16.mxu0 %v200
    %269 = vmatpush1.bf16.msra.mxu0 %v199
    %270 = vmatprep.subr.bf16.mxu0 %v204
    %271 = vmatpush1.bf16.msra.mxu0 %v203
    %272 = vmatprep.subr.bf16.mxu0 %v208
    %273 = vmatpush1.bf16.msra.mxu0 %v207
    %274 = vmatprep.subr.bf16.mxu0 %v212
    %275 = vmatpush1.bf16.msra.mxu0 %v211
    %276 = vmatprep.subr.bf16.mxu0 %v216
    %277 = vmatpush1.bf16.msra.mxu0 %v215
    %278 = vmatprep.subr.bf16.mxu0 %v220
    %279 = vmatpush1.bf16.msra.mxu0 %v219
    %280 = vmatprep.subr.bf16.mxu0 %v260
    %281 = vmatpush1.bf16.msra.mxu0 %v257
    %282 = vmatprep.subr.bf16.mxu0 0
    %283 = vmatpush1.bf16.msra.mxu0 0
    %284 = vmatprep.subr.bf16.mxu0 0
    %285 = vmatpush1.bf16.msra.mxu0 0
    %286 = vmatprep.subr.bf16.mxu0 0
    %287 = vmatpush1.bf16.msra.mxu0 0
    %288 = vmatprep.subr.bf16.mxu0 0
    %289 = vmatpush1.bf16.msra.mxu0 0
    %290 = vmatprep.subr.bf16.mxu0 0
    %291 = vmatpush1.bf16.msra.mxu0 0
    %292 = vmatprep.subr.bf16.mxu0 0
    %293 = vmatpush1.bf16.msra.mxu0 0
    %294 = vmatprep.subr.bf16.mxu0 0
    %295 = vmatpush1.bf16.msra.mxu0 0
    %296 = vmatprep.subr.bf16.mxu0 0
    %297 = vmatpush1.bf16.msra.mxu0 0
    %298 = vmatprep.subr.bf16.mxu0 0
    %299 = vmatpush1.bf16.msra.mxu0 0
    %300 = vmatprep.mubr.bf16.mxu0 0
    %301 = vmatmul.mubr.bf16.gmra.mrb[0].mxu0 %v253
    %v302 = vpop.f32.mrb[0].mxu0
    %v303 = vadd.f32 0.0, %v302
    %v304 = vpop.f32.mrb[0].mxu0
    %v305 = vadd.f32 0.0, %v304
    %v306 = vpop.f32.mrb[0].mxu0
    %v307 = vpop.f32.mrb[0].mxu0
    %308 = vdwg.mxu0
    %309 = vmatprep.subr.bf16.mxu0 %v202
    %310 = vmatpush1.bf16.msra.mxu0 %v201
    %311 = vmatprep.subr.bf16.mxu0 %v206
    %312 = vmatpush1.bf16.msra.mxu0 %v205
    %313 = vmatprep.subr.bf16.mxu0 %v210
    %314 = vmatpush1.bf16.msra.mxu0 %v209
    %315 = vmatprep.subr.bf16.mxu0 %v214
    %316 = vmatpush1.bf16.msra.mxu0 %v213
    %317 = vmatprep.subr.bf16.mxu0 %v218
    %318 = vmatpush1.bf16.msra.mxu0 %v217
    %319 = vmatprep.subr.bf16.mxu0 %v222
    %320 = vmatpush1.bf16.msra.mxu0 %v221
    %321 = vmatprep.subr.bf16.mxu0 %v266
    %322 = vmatpush1.bf16.msra.mxu0 %v263
    %323 = vmatprep.subr.bf16.mxu0 0
    %324 = vmatpush1.bf16.msra.mxu0 0
    %325 = vmatprep.subr.bf16.mxu0 0
    %326 = vmatpush1.bf16.msra.mxu0 0
    %327 = vmatprep.subr.bf16.mxu0 0
    %328 = vmatpush1.bf16.msra.mxu0 0
    %329 = vmatprep.subr.bf16.mxu0 0
    %330 = vmatpush1.bf16.msra.mxu0 0
    %331 = vmatprep.subr.bf16.mxu0 0
    %332 = vmatpush1.bf16.msra.mxu0 0
    %333 = vmatprep.subr.bf16.mxu0 0
    %334 = vmatpush1.bf16.msra.mxu0 0
    %335 = vmatprep.subr.bf16.mxu0 0
    %336 = vmatpush1.bf16.msra.mxu0 0
    %337 = vmatprep.subr.bf16.mxu0 0
    %338 = vmatpush1.bf16.msra.mxu0 0
    %339 = vmatprep.subr.bf16.mxu0 0
    %340 = vmatpush1.bf16.msra.mxu0 0
    %341 = vmatprep.mubr.bf16.mxu0 0
    %342 = vmatmul.mubr.bf16.gmra.mrb[0].mxu0 %v253
    %v343 = vpop.f32.mrb[0].mxu0
    %v344 = vadd.f32 0.0, %v343
    %v345 = vpop.f32.mrb[0].mxu0
    %v346 = vadd.f32 0.0, %v345
    %v347 = vpop.f32.mrb[0].mxu0
    %v348 = vpop.f32.mrb[0].mxu0
    %349 = vdwg.mxu0
    %v351 = vrot.slane %v305, 7
    %v354 = vrot.slane %v344, 6
    %v357 = vrot.slane %v346, 5
    %v360 = vrot.slane %v303, 5
    %v362 = vrot.slane %v305, 4
    %v364 = vrot.slane %v344, 3
    %v366 = vrot.slane %v346, 2
    %vm368 = vcmask 1040384
    %v369 = vsel %vm368, %v303, %v351
    %v370 = vsel %vm255, %v369, %v354
    %vm371 = vcmask 1042432
    %v372 = vsel %vm371, %v370, %v357
    %vm373 = vcmask 1043456
    %v374 = vsel %vm373, %v372, %v360
    %vm375 = vcmask 1044480
    %v376 = vsel %vm375, %v374, %v362
    %vm377 = vcmask 1045504
    %v378 = vsel %vm377, %v376, %v364
    %vm379 = vcmask 1046528
    %v380 = vsel %vm379, %v378, %v366
    %v381 = vrot.slane %v380, 4
    %v382 = vadd.f32 %v380, %v381
    %v383 = vrot.slane %v382, 2
    %v384 = vadd.f32 %v382, %v383
    %v385 = vrot.slane %v384, 1
    %v386 = vadd.f32 %v384, %v385
    %v387 = vmul.f32 %v380, %v380
    %v388 = vrot.slane %v387, 4
    %v389 = vadd.f32 %v387, %v388
    %v390 = vrot.slane %v389, 2
    %v391 = vadd.f32 %v389, %v390
    %v392 = vrot.slane %v391, 1
    %v393 = vadd.f32 %v391, %v392
    %v394 = vld [vmem:[%s7] sm:$0xff]
    %v395 = vld [vmem:[%s7 + $0x8] sm:$0xff]
    %v396 = vld [vmem:[%s7 + $0x10] sm:$0xff]
    %v397 = vld [vmem:[%s7 + $0x18] sm:$0xff]
    %v398 = vld [vmem:[%s7 + $0x20] sm:$0xff]
    %v399 = vld [vmem:[%s7 + $0x28] sm:$0xff]
    %v400 = vld [vmem:[%s7 + $0x30] sm:$0xff]
    %v401 = vld [vmem:[%s7 + $0x38] sm:$0xff]
    %v402 = vld [vmem:[%s7 + $0x40] sm:$0xff]
    %v403 = vld [vmem:[%s7 + $0x48] sm:$0xff]
    %v404 = vld [vmem:[%s7 + $0x50] sm:$0xff]
    %v405 = vld [vmem:[%s7 + $0x58] sm:$0xff]
    %v406 = vld [vmem:[%s7 + $0x60] sm:$0xff]
    %v407 = vld [vmem:[%s7 + $0x68] sm:$0xff]
    %v408 = vld [vmem:[%s7 + $0x70] sm:$0xff]
    %v409 = vld [vmem:[%s7 + $0x78] sm:$0xff]
    %410 = vmatprep.subr.mxu0 0.0
    %411 = vmatpush1.msra.mxu0 %v394
    %412 = vmatprep.subr.mxu0 0.0
    %413 = vmatpush1.msra.mxu0 %v395
    %414 = vmatprep.subr.mxu0 0.0
    %415 = vmatpush1.msra.mxu0 %v396
    %416 = vmatprep.subr.mxu0 0.0
    %417 = vmatpush1.msra.mxu0 %v397
    %418 = vmatprep.subr.mxu0 0.0
    %419 = vmatpush1.msra.mxu0 %v398
    %420 = vmatprep.subr.mxu0 0.0
    %421 = vmatpush1.msra.mxu0 %v399
    %422 = vmatprep.subr.mxu0 0.0
    %423 = vmatpush1.msra.mxu0 %v400
    %424 = vmatprep.subr.mxu0 0.0
    %425 = vmatpush1.msra.mxu0 %v401
    %426 = vmatprep.subr.mxu0 0.0
    %427 = vmatpush1.msra.mxu0 %v402
    %428 = vmatprep.subr.mxu0 0.0
    %429 = vmatpush1.msra.mxu0 %v403
    %430 = vmatprep.subr.mxu0 0.0
    %431 = vmatpush1.msra.mxu0 %v404
    %432 = vmatprep.subr.mxu0 0.0
    %433 = vmatpush1.msra.mxu0 %v405
    %434 = vmatprep.subr.mxu0 0.0
    %435 = vmatpush1.msra.mxu0 %v406
    %436 = vmatprep.subr.mxu0 0.0
    %437 = vmatpush1.msra.mxu0 %v407
    %438 = vmatprep.subr.mxu0 0.0
    %439 = vmatpush1.msra.mxu0 %v408
    %440 = vmatprep.subr.mxu0 0.0
    %441 = vmatpush1.msra.mxu0 %v409
    %442 = vmatprep.subr.mxu0 0.0
    %443 = vmatpush1.msra.mxu0 0.0
    %444 = vmatprep.subr.mxu0 0.0
    %445 = vmatpush1.msra.mxu0 0.0
    %446 = vmatprep.subr.mxu0 0.0
    %447 = vmatpush1.msra.mxu0 0.0
    %448 = vmatprep.subr.mxu0 0.0
    %449 = vmatpush1.msra.mxu0 0.0
    %450 = vmatprep.subr.mxu0 0.0
    %451 = vmatpush1.msra.mxu0 0.0
    %452 = vmatprep.subr.mxu0 0.0
    %453 = vmatpush1.msra.mxu0 0.0
    %454 = vmatprep.subr.mxu0 0.0
    %455 = vmatpush1.msra.mxu0 0.0
    %456 = vmatprep.subr.mxu0 0.0
    %457 = vmatpush1.msra.mxu0 0.0
    %458 = vmatprep.subr.mxu0 0.0
    %459 = vmatpush1.msra.mxu0 0.0
    %460 = vmatprep.subr.mxu0 0.0
    %461 = vmatpush1.msra.mxu0 0.0
    %462 = vmatprep.subr.mxu0 0.0
    %463 = vmatpush1.msra.mxu0 0.0
    %464 = vmatprep.subr.mxu0 0.0
    %465 = vmatpush1.msra.mxu0 0.0
    %466 = vmatprep.subr.mxu0 0.0
    %467 = vmatpush1.msra.mxu0 0.0
    %468 = vmatprep.subr.mxu0 0.0
    %469 = vmatpush1.msra.mxu0 0.0
    %470 = vmatprep.subr.mxu0 0.0
    %471 = vmatpush1.msra.mxu0 0.0
    %472 = vmatprep.subr.mxu0 0.0
    %473 = vmatpush1.msra.mxu0 0.0
    %474 = vmatprep.mubr.f32.mxu0 0.0
    %475 = vmatmul.mubr.f32.gmra.mrb[0].mxu0 %v386
    %v476 = vpop.f32.mrb[0].mxu0
    %v477 = vadd.f32 0.0, %v476
    %v478 = vpop.f32.mrb[0].mxu0
    %479 = vdwg.mxu0
    %480 = vmatprep.subr.mxu0 0.0
    %481 = vmatpush1.msra.mxu0 %v394
    %482 = vmatprep.subr.mxu0 0.0
    %483 = vmatpush1.msra.mxu0 %v395
    %484 = vmatprep.subr.mxu0 0.0
    %485 = vmatpush1.msra.mxu0 %v396
    %486 = vmatprep.subr.mxu0 0.0
    %487 = vmatpush1.msra.mxu0 %v397
    %488 = vmatprep.subr.mxu0 0.0
    %489 = vmatpush1.msra.mxu0 %v398
    %490 = vmatprep.subr.mxu0 0.0
    %491 = vmatpush1.msra.mxu0 %v399
    %492 = vmatprep.subr.mxu0 0.0
    %493 = vmatpush1.msra.mxu0 %v400
    %494 = vmatprep.subr.mxu0 0.0
    %495 = vmatpush1.msra.mxu0 %v401
    %496 = vmatprep.subr.mxu0 0.0
    %497 = vmatpush1.msra.mxu0 %v402
    %498 = vmatprep.subr.mxu0 0.0
    %499 = vmatpush1.msra.mxu0 %v403
    %500 = vmatprep.subr.mxu0 0.0
    %501 = vmatpush1.msra.mxu0 %v404
    %502 = vmatprep.subr.mxu0 0.0
    %503 = vmatpush1.msra.mxu0 %v405
    %504 = vmatprep.subr.mxu0 0.0
    %505 = vmatpush1.msra.mxu0 %v406
    %506 = vmatprep.subr.mxu0 0.0
    %507 = vmatpush1.msra.mxu0 %v407
    %508 = vmatprep.subr.mxu0 0.0
    %509 = vmatpush1.msra.mxu0 %v408
    %510 = vmatprep.subr.mxu0 0.0
    %511 = vmatpush1.msra.mxu0 %v409
    %512 = vmatprep.subr.mxu0 0.0
    %513 = vmatpush1.msra.mxu0 0.0
    %514 = vmatprep.subr.mxu0 0.0
    %515 = vmatpush1.msra.mxu0 0.0
    %516 = vmatprep.subr.mxu0 0.0
    %517 = vmatpush1.msra.mxu0 0.0
    %518 = vmatprep.subr.mxu0 0.0
    %519 = vmatpush1.msra.mxu0 0.0
    %520 = vmatprep.subr.mxu0 0.0
    %521 = vmatpush1.msra.mxu0 0.0
    %522 = vmatprep.subr.mxu0 0.0
    %523 = vmatpush1.msra.mxu0 0.0
    %524 = vmatprep.subr.mxu0 0.0
    %525 = vmatpush1.msra.mxu0 0.0
    %526 = vmatprep.subr.mxu0 0.0
    %527 = vmatpush1.msra.mxu0 0.0
    %528 = vmatprep.subr.mxu0 0.0
    %529 = vmatpush1.msra.mxu0 0.0
    %530 = vmatprep.subr.mxu0 0.0
    %531 = vmatpush1.msra.mxu0 0.0
    %532 = vmatprep.subr.mxu0 0.0
    %533 = vmatpush1.msra.mxu0 0.0
    %534 = vmatprep.subr.mxu0 0.0
    %535 = vmatpush1.msra.mxu0 0.0
    %536 = vmatprep.subr.mxu0 0.0
    %537 = vmatpush1.msra.mxu0 0.0
    %538 = vmatprep.subr.mxu0 0.0
    %539 = vmatpush1.msra.mxu0 0.0
    %540 = vmatprep.subr.mxu0 0.0
    %541 = vmatpush1.msra.mxu0 0.0
    %542 = vmatprep.subr.mxu0 0.0
    %543 = vmatpush1.msra.mxu0 0.0
    %544 = vmatprep.mubr.f32.mxu0 0.0
    %545 = vmatmul.mubr.f32.gmra.mrb[0].mxu0 %v393
    %v546 = vpop.f32.mrb[0].mxu0
    %v547 = vadd.f32 0.0, %v546
    %v548 = vpop.f32.mrb[0].mxu0
    %549 = vdwg.mxu0
    %v550 = vmul.f32 %v477, 0.03125
    %v551 = vmul.f32 %v547, 0.03125
    %v552 = vmul.f32 %v550, %v550
    %v553 = vsub.f32 %v551, %v552
    %v554 = vld [vmem:[%s5] sm:$0x1]
    %v555 = vadd.f32 %v553, 1e-05
    %v556 = vrsqrt.pop %v555
    %v557 = vmul.f32 %v554, %v556
    %v558 = vld [vmem:[%s6] sm:$0x1]
    %v559 = vmul.f32 %v550, %v557
    %v560 = vsub.f32 %v558, %v559
    %v561 = vld [vmem:[#allocation2] sm:$0xff]
    %v562 = vld [vmem:[#allocation2 + $0x8] sm:$0xff]
    %v563 = vld [vmem:[#allocation2 + $0x10] sm:$0xff]
    %v564 = vld [vmem:[#allocation2 + $0x18] sm:$0xff]
    %vm565 = vcmask 261120
    %v567 = vsel %vm565, %v557, 0
    %569 = vmatprep.subr.mxu0 0.0
    %570 = vmatpush1.msra.mxu0 %v561
    %571 = vmatprep.subr.mxu0 0.0
    %572 = vmatpush1.msra.mxu0 %v562
    %573 = vmatprep.subr.mxu0 0.0
    %574 = vmatpush1.msra.mxu0 %v563
    %575 = vmatprep.subr.mxu0 0.0
    %576 = vmatpush1.msra.mxu0 %v564
    %577 = vmatprep.subr.mxu0 0.0
    %578 = vmatpush1.msra.mxu0 0.0
    %579 = vmatprep.subr.mxu0 0.0
    %580 = vmatpush1.msra.mxu0 0.0
    %581 = vmatprep.subr.mxu0 0.0
    %582 = vmatpush1.msra.mxu0 0.0
    %583 = vmatprep.subr.mxu0 0.0
    %584 = vmatpush1.msra.mxu0 0.0
    %585 = vmatprep.subr.mxu0 0.0
    %586 = vmatpush1.msra.mxu0 0.0
    %587 = vmatprep.subr.mxu0 0.0
    %588 = vmatpush1.msra.mxu0 0.0
    %589 = vmatprep.subr.mxu0 0.0
    %590 = vmatpush1.msra.mxu0 0.0
    %591 = vmatprep.subr.mxu0 0.0
    %592 = vmatpush1.msra.mxu0 0.0
    %593 = vmatprep.subr.mxu0 0.0
    %594 = vmatpush1.msra.mxu0 0.0
    %595 = vmatprep.subr.mxu0 0.0
    %596 = vmatpush1.msra.mxu0 0.0
    %597 = vmatprep.subr.mxu0 0.0
    %598 = vmatpush1.msra.mxu0 0.0
    %599 = vmatprep.subr.mxu0 0.0
    %600 = vmatpush1.msra.mxu0 0.0
    %601 = vmatprep.subr.mxu0 0.0
    %602 = vmatpush1.msra.mxu0 0.0
    %603 = vmatprep.subr.mxu0 0.0
    %604 = vmatpush1.msra.mxu0 0.0
    %605 = vmatprep.subr.mxu0 0.0
    %606 = vmatpush1.msra.mxu0 0.0
    %607 = vmatprep.subr.mxu0 0.0
    %608 = vmatpush1.msra.mxu0 0.0
    %609 = vmatprep.subr.mxu0 0.0
    %610 = vmatpush1.msra.mxu0 0.0
    %611 = vmatprep.subr.mxu0 0.0
    %612 = vmatpush1.msra.mxu0 0.0
    %613 = vmatprep.subr.mxu0 0.0
    %614 = vmatpush1.msra.mxu0 0.0
    %615 = vmatprep.subr.mxu0 0.0
    %616 = vmatpush1.msra.mxu0 0.0
    %617 = vmatprep.subr.mxu0 0.0
    %618 = vmatpush1.msra.mxu0 0.0
    %619 = vmatprep.subr.mxu0 0.0
    %620 = vmatpush1.msra.mxu0 0.0
    %621 = vmatprep.subr.mxu0 0.0
    %622 = vmatpush1.msra.mxu0 0.0
    %623 = vmatprep.subr.mxu0 0.0
    %624 = vmatpush1.msra.mxu0 0.0
    %625 = vmatprep.subr.mxu0 0.0
    %626 = vmatpush1.msra.mxu0 0.0
    %627 = vmatprep.subr.mxu0 0.0
    %628 = vmatpush1.msra.mxu0 0.0
    %629 = vmatprep.subr.mxu0 0.0
    %630 = vmatpush1.msra.mxu0 0.0
    %631 = vmatprep.subr.mxu0 0.0
    %632 = vmatpush1.msra.mxu0 0.0
    %633 = vmatprep.mubr.f32.mxu0 0.0
    %634 = vmatmul.mubr.f32.gmra.mrb[0].mxu0 %v567
    %v635 = vpop.f32.mrb[0].mxu0
    %v636 = vadd.f32 0.0, %v635
    %v637 = vpop.f32.mrb[0].mxu0
    %638 = vdwg.mxu0
    %v640 = vsel %vm565, %v560, 0
    %642 = vmatprep.subr.mxu0 0.0
    %643 = vmatpush1.msra.mxu0 %v561
    %644 = vmatprep.subr.mxu0 0.0
    %645 = vmatpush1.msra.mxu0 %v562
    %646 = vmatprep.subr.mxu0 0.0
    %647 = vmatpush1.msra.mxu0 %v563
    %648 = vmatprep.subr.mxu0 0.0
    %649 = vmatpush1.msra.mxu0 %v564
    %650 = vmatprep.subr.mxu0 0.0
    %651 = vmatpush1.msra.mxu0 0.0
    %652 = vmatprep.subr.mxu0 0.0
    %653 = vmatpush1.msra.mxu0 0.0
    %654 = vmatprep.subr.mxu0 0.0
    %655 = vmatpush1.msra.mxu0 0.0
    %656 = vmatprep.subr.mxu0 0.0
    %657 = vmatpush1.msra.mxu0 0.0
    %658 = vmatprep.subr.mxu0 0.0
    %659 = vmatpush1.msra.mxu0 0.0
    %660 = vmatprep.subr.mxu0 0.0
    %661 = vmatpush1.msra.mxu0 0.0
    %662 = vmatprep.subr.mxu0 0.0
    %663 = vmatpush1.msra.mxu0 0.0
    %664 = vmatprep.subr.mxu0 0.0
    %665 = vmatpush1.msra.mxu0 0.0
    %666 = vmatprep.subr.mxu0 0.0
    %667 = vmatpush1.msra.mxu0 0.0
    %668 = vmatprep.subr.mxu0 0.0
    %669 = vmatpush1.msra.mxu0 0.0
    %670 = vmatprep.subr.mxu0 0.0
    %671 = vmatpush1.msra.mxu0 0.0
    %672 = vmatprep.subr.mxu0 0.0
    %673 = vmatpush1.msra.mxu0 0.0
    %674 = vmatprep.subr.mxu0 0.0
    %675 = vmatpush1.msra.mxu0 0.0
    %676 = vmatprep.subr.mxu0 0.0
    %677 = vmatpush1.msra.mxu0 0.0
    %678 = vmatprep.subr.mxu0 0.0
    %679 = vmatpush1.msra.mxu0 0.0
    %680 = vmatprep.subr.mxu0 0.0
    %681 = vmatpush1.msra.mxu0 0.0
    %682 = vmatprep.subr.mxu0 0.0
    %683 = vmatpush1.msra.mxu0 0.0
    %684 = vmatprep.subr.mxu0 0.0
    %685 = vmatpush1.msra.mxu0 0.0
    %686 = vmatprep.subr.mxu0 0.0
    %687 = vmatpush1.msra.mxu0 0.0
    %688 = vmatprep.subr.mxu0 0.0
    %689 = vmatpush1.msra.mxu0 0.0
    %690 = vmatprep.subr.mxu0 0.0
    %691 = vmatpush1.msra.mxu0 0.0
    %692 = vmatprep.subr.mxu0 0.0
    %693 = vmatpush1.msra.mxu0 0.0
    %694 = vmatprep.subr.mxu0 0.0
    %695 = vmatpush1.msra.mxu0 0.0
    %696 = vmatprep.subr.mxu0 0.0
    %697 = vmatpush1.msra.mxu0 0.0
    %698 = vmatprep.subr.mxu0 0.0
    %699 = vmatpush1.msra.mxu0 0.0
    %700 = vmatprep.subr.mxu0 0.0
    %701 = vmatpush1.msra.mxu0 0.0
    %702 = vmatprep.subr.mxu0 0.0
    %703 = vmatpush1.msra.mxu0 0.0
    %704 = vmatprep.subr.mxu0 0.0
    %705 = vmatpush1.msra.mxu0 0.0
    %706 = vmatprep.mubr.f32.mxu0 0.0
    %707 = vmatmul.mubr.f32.gmra.mrb[0].mxu0 %v640
    %v708 = vpop.f32.mrb[0].mxu0
    %v709 = vadd.f32 0.0, %v708
    %v710 = vpop.f32.mrb[0].mxu0
    %711 = vdwg.mxu0
    %v712 = vlaneseq
    %v713 = vshrl.u32 %v712, 7
    %v714 = vsub.s32 0, %v713
    %v715 = vrot.slane %v636, %v714
    %v716 = vmul.f32 %v380, %v715
    %v717 = vlaneseq
    %v718 = vshrl.u32 %v717, 7
    %v719 = vsub.s32 0, %v718
    %v720 = vrot.slane %v709, %v719
    %v721 = vadd.f32 %v716, %v720
    %v722 = vmul.f32 %v721, 0.2
    %v723 = vmax.f32 %v721, %v722
    %v724 = vld [vmem:[%s2] sm:$0xf]
    %v725 = vld [vmem:[%s2 + $0x4] sm:$0xf]
    %v726 = vld [vmem:[%s2 + $0x8] sm:$0xf]
    %v727 = vld [vmem:[%s2 + $0xc] sm:$0xf]
    %v728 = vld [vmem:[%s2 + $0x10] sm:$0xf]
    %v729 = vld [vmem:[%s2 + $0x14] sm:$0xf]
    %v730 = vld [vmem:[%s2 + $0x18] sm:$0xf]
    %v731 = vld [vmem:[%s2 + $0x1c] sm:$0xf]
    %v732 = vld [vmem:[%s2 + $0x20] sm:$0xf]
    %v733 = vld [vmem:[%s2 + $0x24] sm:$0xf]
    %v734 = vld [vmem:[%s2 + $0x28] sm:$0xf]
    %v735 = vld [vmem:[%s2 + $0x2c] sm:$0xf]
    %v736 = vld [vmem:[%s2 + $0x30] sm:$0xf]
    %v737 = vld [vmem:[%s2 + $0x34] sm:$0xf]
    %v738 = vld [vmem:[%s2 + $0x38] sm:$0xf]
    %v739 = vld [vmem:[%s2 + $0x3c] sm:$0xf]
    %s740 = scalar_lea.vmem %s2, 64
    %v741 = vld [vmem:[%s740] sm:$0xf]
    %v742 = vld [vmem:[%s740 + $0x4] sm:$0xf]
    %v743 = vld [vmem:[%s740 + $0x8] sm:$0xf]
    %v744 = vld [vmem:[%s740 + $0xc] sm:$0xf]
    %v745 = vld [vmem:[%s740 + $0x10] sm:$0xf]
    %v746 = vld [vmem:[%s740 + $0x14] sm:$0xf]
    %v747 = vld [vmem:[%s740 + $0x18] sm:$0xf]
    %v748 = vld [vmem:[%s740 + $0x1c] sm:$0xf]
    %v749 = vld [vmem:[%s740 + $0x20] sm:$0xf]
    %v750 = vld [vmem:[%s740 + $0x24] sm:$0xf]
    %v751 = vld [vmem:[%s740 + $0x28] sm:$0xf]
    %v752 = vld [vmem:[%s740 + $0x2c] sm:$0xf]
    %v753 = vld [vmem:[%s740 + $0x30] sm:$0xf]
    %v754 = vld [vmem:[%s740 + $0x34] sm:$0xf]
    %v755 = vld [vmem:[%s740 + $0x38] sm:$0xf]
    %v756 = vld [vmem:[%s740 + $0x3c] sm:$0xf]
    %s757 = scalar_lea.vmem %s2, 128
    %v758 = vld [vmem:[%s757] sm:$0xf]
    %v759 = vld [vmem:[%s757 + $0x4] sm:$0xf]
    %v760 = vld [vmem:[%s757 + $0x8] sm:$0xf]
    %v761 = vld [vmem:[%s757 + $0xc] sm:$0xf]
    %v762 = vld [vmem:[%s757 + $0x10] sm:$0xf]
    %v763 = vld [vmem:[%s757 + $0x14] sm:$0xf]
    %v764 = vld [vmem:[%s757 + $0x18] sm:$0xf]
    %v765 = vld [vmem:[%s757 + $0x1c] sm:$0xf]
    %v766 = vld [vmem:[%s757 + $0x20] sm:$0xf]
    %v767 = vld [vmem:[%s757 + $0x24] sm:$0xf]
    %v768 = vld [vmem:[%s757 + $0x28] sm:$0xf]
    %v769 = vld [vmem:[%s757 + $0x2c] sm:$0xf]
    %v770 = vld [vmem:[%s757 + $0x30] sm:$0xf]
    %v771 = vld [vmem:[%s757 + $0x34] sm:$0xf]
    %v772 = vld [vmem:[%s757 + $0x38] sm:$0xf]
    %v773 = vld [vmem:[%s757 + $0x3c] sm:$0xf]
    %s774 = scalar_lea.vmem %s2, 192
    %v775 = vld [vmem:[%s774] sm:$0xf]
    %v776 = vld [vmem:[%s774 + $0x4] sm:$0xf]
    %v777 = vld [vmem:[%s774 + $0x8] sm:$0xf]
    %v778 = vld [vmem:[%s774 + $0xc] sm:$0xf]
    %v779 = vld [vmem:[%s774 + $0x10] sm:$0xf]
    %v780 = vld [vmem:[%s774 + $0x14] sm:$0xf]
    %v781 = vld [vmem:[%s774 + $0x18] sm:$0xf]
    %v782 = vld [vmem:[%s774 + $0x1c] sm:$0xf]
    %v783 = vld [vmem:[%s774 + $0x20] sm:$0xf]
    %v784 = vld [vmem:[%s774 + $0x24] sm:$0xf]
    %v785 = vld [vmem:[%s774 + $0x28] sm:$0xf]
    %v786 = vld [vmem:[%s774 + $0x2c] sm:$0xf]
    %v787 = vld [vmem:[%s774 + $0x30] sm:$0xf]
    %v788 = vld [vmem:[%s774 + $0x34] sm:$0xf]
    %v789 = vld [vmem:[%s774 + $0x38] sm:$0xf]
    %v790 = vld [vmem:[%s774 + $0x3c] sm:$0xf]
    %v792 = vrot.slane %v723, 7
    %v794 = vsel %vm368, 0.0, %v792
    %v795 = vsel %vm373, %v794, 0.0
    %v796 = vsel %vm375, %v795, %v792
    %v797 = vrot.slane %v723, 1
    %v799 = vsel %vm371, %v797, 0.0
    %v800 = vsel %vm373, %v799, %v797
    %v801 = vsel %vm379, %v800, 0.0
    %v802 = vpack.c.bf16 %v723, %v723
    %v803 = vpack.c.bf16 %v796, %v796
    %v820 = vunpack.c.l.b16 %v775
    %v821 = vunpack.c.l.b16 %v776
    %v822 = vunpack.c.l.b16 %v777
    %v823 = vunpack.c.l.b16 %v778
    %v824 = vunpack.c.l.b16 %v779
    %v825 = vunpack.c.l.b16 %v780
    %v826 = vunpack.c.l.b16 %v781
    %v827 = vunpack.c.l.b16 %v782
    %v828 = vunpack.c.l.b16 %v783
    %v829 = vunpack.c.l.b16 %v784
    %v830 = vunpack.c.l.b16 %v785
    %v831 = vunpack.c.l.b16 %v786
    %v832 = vunpack.c.l.b16 %v787
    %v833 = vunpack.c.l.b16 %v788
    %v834 = vunpack.c.l.b16 %v789
    %v835 = vunpack.c.l.b16 %v790
    %v836 = vpack.c.b16 %v821, %v820
    %v837 = vpack.c.b16 %v823, %v822
    %v838 = vpack.c.b16 %v825, %v824
    %v839 = vpack.c.b16 %v827, %v826
    %v840 = vpack.c.b16 %v829, %v828
    %v841 = vpack.c.b16 %v831, %v830
    %v842 = vpack.c.b16 %v833, %v832
    %v843 = vpack.c.b16 %v835, %v834
    %852 = vmatprep.subr.bf16.mxu0 0
    %853 = vmatpush1.bf16.msra.mxu0 %v836
    %854 = vmatprep.subr.bf16.mxu0 0
    %855 = vmatpush1.bf16.msra.mxu0 %v837
    %856 = vmatprep.subr.bf16.mxu0 0
    %857 = vmatpush1.bf16.msra.mxu0 %v838
    %858 = vmatprep.subr.bf16.mxu0 0
    %859 = vmatpush1.bf16.msra.mxu0 %v839
    %860 = vmatprep.subr.bf16.mxu0 0
    %861 = vmatpush1.bf16.msra.mxu0 %v840
    %862 = vmatprep.subr.bf16.mxu0 0
    %863 = vmatpush1.bf16.msra.mxu0 %v841
    %864 = vmatprep.subr.bf16.mxu0 0
    %865 = vmatpush1.bf16.msra.mxu0 %v842
    %866 = vmatprep.subr.bf16.mxu0 0
    %867 = vmatpush1.bf16.msra.mxu0 %v843
    %868 = vmatprep.subr.bf16.mxu0 0
    %869 = vmatpush1.bf16.msra.mxu0 0
    %870 = vmatprep.subr.bf16.mxu0 0
    %871 = vmatpush1.bf16.msra.mxu0 0
    %872 = vmatprep.subr.bf16.mxu0 0
    %873 = vmatpush1.bf16.msra.mxu0 0
    %874 = vmatprep.subr.bf16.mxu0 0
    %875 = vmatpush1.bf16.msra.mxu0 0
    %876 = vmatprep.subr.bf16.mxu0 0
    %877 = vmatpush1.bf16.msra.mxu0 0
    %878 = vmatprep.subr.bf16.mxu0 0
    %879 = vmatpush1.bf16.msra.mxu0 0
    %880 = vmatprep.subr.bf16.mxu0 0
    %881 = vmatpush1.bf16.msra.mxu0 0
    %882 = vmatprep.subr.bf16.mxu0 0
    %883 = vmatpush1.bf16.msra.mxu0 0
    %884 = vmatprep.mubr.bf16.mxu0 0
    %885 = vmatmul.mubr.bf16.gmra.mrb[0].mxu0 %v803
    %v886 = vpop.f32.mrb[0].mxu0
    %v887 = vadd.f32 0.0, %v886
    %v888 = vpop.f32.mrb[0].mxu0
    %v889 = vpop.f32.mrb[0].mxu0
    %v890 = vpop.f32.mrb[0].mxu0
    %891 = vdwg.mxu0
    %v908 = vunpack.c.l.b16 %v741
    %v909 = vunpack.c.l.b16 %v742
    %v910 = vunpack.c.l.b16 %v743
    %v911 = vunpack.c.l.b16 %v744
    %v912 = vunpack.c.l.b16 %v745
    %v913 = vunpack.c.l.b16 %v746
    %v914 = vunpack.c.l.b16 %v747
    %v915 = vunpack.c.l.b16 %v748
    %v916 = vunpack.c.l.b16 %v749
    %v917 = vunpack.c.l.b16 %v750
    %v918 = vunpack.c.l.b16 %v751
    %v919 = vunpack.c.l.b16 %v752
    %v920 = vunpack.c.l.b16 %v753
    %v921 = vunpack.c.l.b16 %v754
    %v922 = vunpack.c.l.b16 %v755
    %v923 = vunpack.c.l.b16 %v756
    %v924 = vpack.c.b16 %v909, %v908
    %v925 = vpack.c.b16 %v911, %v910
    %v926 = vpack.c.b16 %v913, %v912
    %v927 = vpack.c.b16 %v915, %v914
    %v928 = vpack.c.b16 %v917, %v916
    %v929 = vpack.c.b16 %v919, %v918
    %v930 = vpack.c.b16 %v921, %v920
    %v931 = vpack.c.b16 %v923, %v922
    %940 = vmatprep.subr.bf16.mxu0 0
    %941 = vmatpush1.bf16.msra.mxu0 %v924
    %942 = vmatprep.subr.bf16.mxu0 0
    %943 = vmatpush1.bf16.msra.mxu0 %v925
    %944 = vmatprep.subr.bf16.mxu0 0
    %945 = vmatpush1.bf16.msra.mxu0 %v926
    %946 = vmatprep.subr.bf16.mxu0 0
    %947 = vmatpush1.bf16.msra.mxu0 %v927
    %948 = vmatprep.subr.bf16.mxu0 0
    %949 = vmatpush1.bf16.msra.mxu0 %v928
    %950 = vmatprep.subr.bf16.mxu0 0
    %951 = vmatpush1.bf16.msra.mxu0 %v929
    %952 = vmatprep.subr.bf16.mxu0 0
    %953 = vmatpush1.bf16.msra.mxu0 %v930
    %954 = vmatprep.subr.bf16.mxu0 0
    %955 = vmatpush1.bf16.msra.mxu0 %v931
    %956 = vmatprep.subr.bf16.mxu0 0
    %957 = vmatpush1.bf16.msra.mxu0 0
    %958 = vmatprep.subr.bf16.mxu0 0
    %959 = vmatpush1.bf16.msra.mxu0 0
    %960 = vmatprep.subr.bf16.mxu0 0
    %961 = vmatpush1.bf16.msra.mxu0 0
    %962 = vmatprep.subr.bf16.mxu0 0
    %963 = vmatpush1.bf16.msra.mxu0 0
    %964 = vmatprep.subr.bf16.mxu0 0
    %965 = vmatpush1.bf16.msra.mxu0 0
    %966 = vmatprep.subr.bf16.mxu0 0
    %967 = vmatpush1.bf16.msra.mxu0 0
    %968 = vmatprep.subr.bf16.mxu0 0
    %969 = vmatpush1.bf16.msra.mxu0 0
    %970 = vmatprep.subr.bf16.mxu0 0
    %971 = vmatpush1.bf16.msra.mxu0 0
    %972 = vmatprep.mubr.bf16.mxu0 0
    %973 = vmatmul.mubr.bf16.gmra.mrb[0].mxu0 %v802
    %v974 = vpop.f32.mrb[0].mxu0
    %v975 = vadd.f32 %v887, %v974
    %v976 = vpop.f32.mrb[0].mxu0
    %v977 = vpop.f32.mrb[0].mxu0
    %v978 = vpop.f32.mrb[0].mxu0
    %979 = vdwg.mxu0
    %v980 = vpack.c.bf16 %v801, %v801
    %v997 = vunpack.c.l.b16 %v724
    %v998 = vunpack.c.l.b16 %v725
    %v999 = vunpack.c.l.b16 %v726
    %v1000 = vunpack.c.l.b16 %v727
    %v1001 = vunpack.c.l.b16 %v728
    %v1002 = vunpack.c.l.b16 %v729
    %v1003 = vunpack.c.l.b16 %v730
    %v1004 = vunpack.c.l.b16 %v731
    %v1005 = vunpack.c.l.b16 %v732
    %v1006 = vunpack.c.l.b16 %v733
    %v1007 = vunpack.c.l.b16 %v734
    %v1008 = vunpack.c.l.b16 %v735
    %v1009 = vunpack.c.l.b16 %v736
    %v1010 = vunpack.c.l.b16 %v737
    %v1011 = vunpack.c.l.b16 %v738
    %v1012 = vunpack.c.l.b16 %v739
    %v1013 = vpack.c.b16 %v998, %v997
    %v1014 = vpack.c.b16 %v1000, %v999
    %v1015 = vpack.c.b16 %v1002, %v1001
    %v1016 = vpack.c.b16 %v1004, %v1003
    %v1017 = vpack.c.b16 %v1006, %v1005
    %v1018 = vpack.c.b16 %v1008, %v1007
    %v1019 = vpack.c.b16 %v1010, %v1009
    %v1020 = vpack.c.b16 %v1012, %v1011
    %1029 = vmatprep.subr.bf16.mxu0 0
    %1030 = vmatpush1.bf16.msra.mxu0 %v1013
    %1031 = vmatprep.subr.bf16.mxu0 0
    %1032 = vmatpush1.bf16.msra.mxu0 %v1014
    %1033 = vmatprep.subr.bf16.mxu0 0
    %1034 = vmatpush1.bf16.msra.mxu0 %v1015
    %1035 = vmatprep.subr.bf16.mxu0 0
    %1036 = vmatpush1.bf16.msra.mxu0 %v1016
    %1037 = vmatprep.subr.bf16.mxu0 0
    %1038 = vmatpush1.bf16.msra.mxu0 %v1017
    %1039 = vmatprep.subr.bf16.mxu0 0
    %1040 = vmatpush1.bf16.msra.mxu0 %v1018
    %1041 = vmatprep.subr.bf16.mxu0 0
    %1042 = vmatpush1.bf16.msra.mxu0 %v1019
    %1043 = vmatprep.subr.bf16.mxu0 0
    %1044 = vmatpush1.bf16.msra.mxu0 %v1020
    %1045 = vmatprep.subr.bf16.mxu0 0
    %1046 = vmatpush1.bf16.msra.mxu0 0
    %1047 = vmatprep.subr.bf16.mxu0 0
    %1048 = vmatpush1.bf16.msra.mxu0 0
    %1049 = vmatprep.subr.bf16.mxu0 0
    %1050 = vmatpush1.bf16.msra.mxu0 0
    %1051 = vmatprep.subr.bf16.mxu0 0
    %1052 = vmatpush1.bf16.msra.mxu0 0
    %1053 = vmatprep.subr.bf16.mxu0 0
    %1054 = vmatpush1.bf16.msra.mxu0 0
    %1055 = vmatprep.subr.bf16.mxu0 0
    %1056 = vmatpush1.bf16.msra.mxu0 0
    %1057 = vmatprep.subr.bf16.mxu0 0
    %1058 = vmatpush1.bf16.msra.mxu0 0
    %1059 = vmatprep.subr.bf16.mxu0 0
    %1060 = vmatpush1.bf16.msra.mxu0 0
    %1061 = vmatprep.mubr.bf16.mxu0 0
    %1062 = vmatmul.mubr.bf16.gmra.mrb[0].mxu0 %v980
    %v1063 = vpop.f32.mrb[0].mxu0
    %v1064 = vadd.f32 0.0, %v1063
    %v1065 = vpop.f32.mrb[0].mxu0
    %v1066 = vpop.f32.mrb[0].mxu0
    %v1067 = vpop.f32.mrb[0].mxu0
    %1068 = vdwg.mxu0
    %v1085 = vunpack.c.l.b16 %v758
    %v1086 = vunpack.c.l.b16 %v759
    %v1087 = vunpack.c.l.b16 %v760
    %v1088 = vunpack.c.l.b16 %v761
    %v1089 = vunpack.c.l.b16 %v762
    %v1090 = vunpack.c.l.b16 %v763
    %v1091 = vunpack.c.l.b16 %v764
    %v1092 = vunpack.c.l.b16 %v765
    %v1093 = vunpack.c.l.b16 %v766
    %v1094 = vunpack.c.l.b16 %v767
    %v1095 = vunpack.c.l.b16 %v768
    %v1096 = vunpack.c.l.b16 %v769
    %v1097 = vunpack.c.l.b16 %v770
    %v1098 = vunpack.c.l.b16 %v771
    %v1099 = vunpack.c.l.b16 %v772
    %v1100 = vunpack.c.l.b16 %v773
    %v1101 = vpack.c.b16 %v1086, %v1085
    %v1102 = vpack.c.b16 %v1088, %v1087
    %v1103 = vpack.c.b16 %v1090, %v1089
    %v1104 = vpack.c.b16 %v1092, %v1091
    %v1105 = vpack.c.b16 %v1094, %v1093
    %v1106 = vpack.c.b16 %v1096, %v1095
    %v1107 = vpack.c.b16 %v1098, %v1097
    %v1108 = vpack.c.b16 %v1100, %v1099
    %1117 = vmatprep.subr.bf16.mxu0 0
    %1118 = vmatpush1.bf16.msra.mxu0 %v1101
    %1119 = vmatprep.subr.bf16.mxu0 0
    %1120 = vmatpush1.bf16.msra.mxu0 %v1102
    %1121 = vmatprep.subr.bf16.mxu0 0
    %1122 = vmatpush1.bf16.msra.mxu0 %v1103
    %1123 = vmatprep.subr.bf16.mxu0 0
    %1124 = vmatpush1.bf16.msra.mxu0 %v1104
    %1125 = vmatprep.subr.bf16.mxu0 0
    %1126 = vmatpush1.bf16.msra.mxu0 %v1105
    %1127 = vmatprep.subr.bf16.mxu0 0
    %1128 = vmatpush1.bf16.msra.mxu0 %v1106
    %1129 = vmatprep.subr.bf16.mxu0 0
    %1130 = vmatpush1.bf16.msra.mxu0 %v1107
    %1131 = vmatprep.subr.bf16.mxu0 0
    %1132 = vmatpush1.bf16.msra.mxu0 %v1108
    %1133 = vmatprep.subr.bf16.mxu0 0
    %1134 = vmatpush1.bf16.msra.mxu0 0
    %1135 = vmatprep.subr.bf16.mxu0 0
    %1136 = vmatpush1.bf16.msra.mxu0 0
    %1137 = vmatprep.subr.bf16.mxu0 0
    %1138 = vmatpush1.bf16.msra.mxu0 0
    %1139 = vmatprep.subr.bf16.mxu0 0
    %1140 = vmatpush1.bf16.msra.mxu0 0
    %1141 = vmatprep.subr.bf16.mxu0 0
    %1142 = vmatpush1.bf16.msra.mxu0 0
    %1143 = vmatprep.subr.bf16.mxu0 0
    %1144 = vmatpush1.bf16.msra.mxu0 0
    %1145 = vmatprep.subr.bf16.mxu0 0
    %1146 = vmatpush1.bf16.msra.mxu0 0
    %1147 = vmatprep.subr.bf16.mxu0 0
    %1148 = vmatpush1.bf16.msra.mxu0 0
    %1149 = vmatprep.mubr.bf16.mxu0 0
    %1150 = vmatmul.mubr.bf16.gmra.mrb[0].mxu0 %v802
    %v1151 = vpop.f32.mrb[0].mxu0
    %v1152 = vadd.f32 %v1064, %v1151
    %v1153 = vpop.f32.mrb[0].mxu0
    %v1154 = vpop.f32.mrb[0].mxu0
    %v1155 = vpop.f32.mrb[0].mxu0
    %1156 = vdwg.mxu0
    %v1157 = vrot.slane %v975, 4
    %v1158 = vadd.f32 %v975, %v1157
    %v1159 = vrot.slane %v1158, 2
    %v1160 = vadd.f32 %v1158, %v1159
    %v1161 = vrot.slane %v1160, 1
    %v1162 = vadd.f32 %v1160, %v1161
    %v1163 = vmul.f32 %v975, %v975
    %v1164 = vrot.slane %v1163, 4
    %v1165 = vadd.f32 %v1163, %v1164
    %v1166 = vrot.slane %v1165, 2
    %v1167 = vadd.f32 %v1165, %v1166
    %v1168 = vrot.slane %v1167, 1
    %v1169 = vadd.f32 %v1167, %v1168
    %v1170 = vrot.slane %v1152, 4
    %v1171 = vadd.f32 %v1152, %v1170
    %v1172 = vrot.slane %v1171, 2
    %v1173 = vadd.f32 %v1171, %v1172
    %v1174 = vrot.slane %v1173, 1
    %v1175 = vadd.f32 %v1173, %v1174
    %v1176 = vadd.f32 %v1162, %v1175
    %v1177 = vmul.f32 %v1152, %v1152
    %v1178 = vrot.slane %v1177, 4
    %v1179 = vadd.f32 %v1177, %v1178
    %v1180 = vrot.slane %v1179, 2
    %v1181 = vadd.f32 %v1179, %v1180
    %v1182 = vrot.slane %v1181, 1
    %v1183 = vadd.f32 %v1181, %v1182
    %v1184 = vadd.f32 %v1169, %v1183
    %v1185 = vld [vmem:[%s11] sm:$0xff]
    %v1186 = vld [vmem:[%s11 + $0x8] sm:$0xff]
    %v1187 = vld [vmem:[%s11 + $0x10] sm:$0xff]
    %v1188 = vld [vmem:[%s11 + $0x18] sm:$0xff]
    %v1189 = vld [vmem:[%s11 + $0x20] sm:$0xff]
    %v1190 = vld [vmem:[%s11 + $0x28] sm:$0xff]
    %v1191 = vld [vmem:[%s11 + $0x30] sm:$0xff]
    %v1192 = vld [vmem:[%s11 + $0x38] sm:$0xff]
    %v1193 = vld [vmem:[%s11 + $0x40] sm:$0xff]
    %v1194 = vld [vmem:[%s11 + $0x48] sm:$0xff]
    %v1195 = vld [vmem:[%s11 + $0x50] sm:$0xff]
    %v1196 = vld [vmem:[%s11 + $0x58] sm:$0xff]
    %v1197 = vld [vmem:[%s11 + $0x60] sm:$0xff]
    %v1198 = vld [vmem:[%s11 + $0x68] sm:$0xff]
    %v1199 = vld [vmem:[%s11 + $0x70] sm:$0xff]
    %v1200 = vld [vmem:[%s11 + $0x78] sm:$0xff]
    %1201 = vmatprep.subr.mxu0 0.0
    %1202 = vmatpush1.msra.mxu0 %v1185
    %1203 = vmatprep.subr.mxu0 0.0
    %1204 = vmatpush1.msra.mxu0 %v1186
    %1205 = vmatprep.subr.mxu0 0.0
    %1206 = vmatpush1.msra.mxu0 %v1187
    %1207 = vmatprep.subr.mxu0 0.0
    %1208 = vmatpush1.msra.mxu0 %v1188
    %1209 = vmatprep.subr.mxu0 0.0
    %1210 = vmatpush1.msra.mxu0 %v1189
    %1211 = vmatprep.subr.mxu0 0.0
    %1212 = vmatpush1.msra.mxu0 %v1190
    %1213 = vmatprep.subr.mxu0 0.0
    %1214 = vmatpush1.msra.mxu0 %v1191
    %1215 = vmatprep.subr.mxu0 0.0
    %1216 = vmatpush1.msra.mxu0 %v1192
    %1217 = vmatprep.subr.mxu0 0.0
    %1218 = vmatpush1.msra.mxu0 %v1193
    %1219 = vmatprep.subr.mxu0 0.0
    %1220 = vmatpush1.msra.mxu0 %v1194
    %1221 = vmatprep.subr.mxu0 0.0
    %1222 = vmatpush1.msra.mxu0 %v1195
    %1223 = vmatprep.subr.mxu0 0.0
    %1224 = vmatpush1.msra.mxu0 %v1196
    %1225 = vmatprep.subr.mxu0 0.0
    %1226 = vmatpush1.msra.mxu0 %v1197
    %1227 = vmatprep.subr.mxu0 0.0
    %1228 = vmatpush1.msra.mxu0 %v1198
    %1229 = vmatprep.subr.mxu0 0.0
    %1230 = vmatpush1.msra.mxu0 %v1199
    %1231 = vmatprep.subr.mxu0 0.0
    %1232 = vmatpush1.msra.mxu0 %v1200
    %1233 = vmatprep.subr.mxu0 0.0
    %1234 = vmatpush1.msra.mxu0 0.0
    %1235 = vmatprep.subr.mxu0 0.0
    %1236 = vmatpush1.msra.mxu0 0.0
    %1237 = vmatprep.subr.mxu0 0.0
    %1238 = vmatpush1.msra.mxu0 0.0
    %1239 = vmatprep.subr.mxu0 0.0
    %1240 = vmatpush1.msra.mxu0 0.0
    %1241 = vmatprep.subr.mxu0 0.0
    %1242 = vmatpush1.msra.mxu0 0.0
    %1243 = vmatprep.subr.mxu0 0.0
    %1244 = vmatpush1.msra.mxu0 0.0
    %1245 = vmatprep.subr.mxu0 0.0
    %1246 = vmatpush1.msra.mxu0 0.0
    %1247 = vmatprep.subr.mxu0 0.0
    %1248 = vmatpush1.msra.mxu0 0.0
    %1249 = vmatprep.subr.mxu0 0.0
    %1250 = vmatpush1.msra.mxu0 0.0
    %1251 = vmatprep.subr.mxu0 0.0
    %1252 = vmatpush1.msra.mxu0 0.0
    %1253 = vmatprep.subr.mxu0 0.0
    %1254 = vmatpush1.msra.mxu0 0.0
    %1255 = vmatprep.subr.mxu0 0.0
    %1256 = vmatpush1.msra.mxu0 0.0
    %1257 = vmatprep.subr.mxu0 0.0
    %1258 = vmatpush1.msra.mxu0 0.0
    %1259 = vmatprep.subr.mxu0 0.0
    %1260 = vmatpush1.msra.mxu0 0.0
    %1261 = vmatprep.subr.mxu0 0.0
    %1262 = vmatpush1.msra.mxu0 0.0
    %1263 = vmatprep.subr.mxu0 0.0
    %1264 = vmatpush1.msra.mxu0 0.0
    %1265 = vmatprep.mubr.f32.mxu0 0.0
    %1266 = vmatmul.mubr.f32.gmra.mrb[0].mxu0 %v1176
    %v1267 = vpop.f32.mrb[0].mxu0
    %v1268 = vadd.f32 0.0, %v1267
    %v1269 = vpop.f32.mrb[0].mxu0
    %1270 = vdwg.mxu0
    %1271 = vmatprep.subr.mxu0 0.0
    %1272 = vmatpush1.msra.mxu0 %v1185
    %1273 = vmatprep.subr.mxu0 0.0
    %1274 = vmatpush1.msra.mxu0 %v1186
    %1275 = vmatprep.subr.mxu0 0.0
    %1276 = vmatpush1.msra.mxu0 %v1187
    %1277 = vmatprep.subr.mxu0 0.0
    %1278 = vmatpush1.msra.mxu0 %v1188
    %1279 = vmatprep.subr.mxu0 0.0
    %1280 = vmatpush1.msra.mxu0 %v1189
    %1281 = vmatprep.subr.mxu0 0.0
    %1282 = vmatpush1.msra.mxu0 %v1190
    %1283 = vmatprep.subr.mxu0 0.0
    %1284 = vmatpush1.msra.mxu0 %v1191
    %1285 = vmatprep.subr.mxu0 0.0
    %1286 = vmatpush1.msra.mxu0 %v1192
    %1287 = vmatprep.subr.mxu0 0.0
    %1288 = vmatpush1.msra.mxu0 %v1193
    %1289 = vmatprep.subr.mxu0 0.0
    %1290 = vmatpush1.msra.mxu0 %v1194
    %1291 = vmatprep.subr.mxu0 0.0
    %1292 = vmatpush1.msra.mxu0 %v1195
    %1293 = vmatprep.subr.mxu0 0.0
    %1294 = vmatpush1.msra.mxu0 %v1196
    %1295 = vmatprep.subr.mxu0 0.0
    %1296 = vmatpush1.msra.mxu0 %v1197
    %1297 = vmatprep.subr.mxu0 0.0
    %1298 = vmatpush1.msra.mxu0 %v1198
    %1299 = vmatprep.subr.mxu0 0.0
    %1300 = vmatpush1.msra.mxu0 %v1199
    %1301 = vmatprep.subr.mxu0 0.0
    %1302 = vmatpush1.msra.mxu0 %v1200
    %1303 = vmatprep.subr.mxu0 0.0
    %1304 = vmatpush1.msra.mxu0 0.0
    %1305 = vmatprep.subr.mxu0 0.0
    %1306 = vmatpush1.msra.mxu0 0.0
    %1307 = vmatprep.subr.mxu0 0.0
    %1308 = vmatpush1.msra.mxu0 0.0
    %1309 = vmatprep.subr.mxu0 0.0
    %1310 = vmatpush1.msra.mxu0 0.0
    %1311 = vmatprep.subr.mxu0 0.0
    %1312 = vmatpush1.msra.mxu0 0.0
    %1313 = vmatprep.subr.mxu0 0.0
    %1314 = vmatpush1.msra.mxu0 0.0
    %1315 = vmatprep.subr.mxu0 0.0
    %1316 = vmatpush1.msra.mxu0 0.0
    %1317 = vmatprep.subr.mxu0 0.0
    %1318 = vmatpush1.msra.mxu0 0.0
    %1319 = vmatprep.subr.mxu0 0.0
    %1320 = vmatpush1.msra.mxu0 0.0
    %1321 = vmatprep.subr.mxu0 0.0
    %1322 = vmatpush1.msra.mxu0 0.0
    %1323 = vmatprep.subr.mxu0 0.0
    %1324 = vmatpush1.msra.mxu0 0.0
    %1325 = vmatprep.subr.mxu0 0.0
    %1326 = vmatpush1.msra.mxu0 0.0
    %1327 = vmatprep.subr.mxu0 0.0
    %1328 = vmatpush1.msra.mxu0 0.0
    %1329 = vmatprep.subr.mxu0 0.0
    %1330 = vmatpush1.msra.mxu0 0.0
    %1331 = vmatprep.subr.mxu0 0.0
    %1332 = vmatpush1.msra.mxu0 0.0
    %1333 = vmatprep.subr.mxu0 0.0
    %1334 = vmatpush1.msra.mxu0 0.0
    %1335 = vmatprep.mubr.f32.mxu0 0.0
    %1336 = vmatmul.mubr.f32.gmra.mrb[0].mxu0 %v1184
    %v1337 = vpop.f32.mrb[0].mxu0
    %v1338 = vadd.f32 0.0, %v1337
    %v1339 = vpop.f32.mrb[0].mxu0
    %1340 = vdwg.mxu0
    %v1341 = vmul.f32 %v1268, 0.0078125
    %v1342 = vmul.f32 %v1338, 0.0078125
    %v1343 = vmul.f32 %v1341, %v1341
    %v1344 = vsub.f32 %v1342, %v1343
    %v1345 = vld [vmem:[%s9] sm:$0x1]
    %v1346 = vadd.f32 %v1344, 1e-05
    %v1347 = vrsqrt.pop %v1346
    %v1348 = vmul.f32 %v1345, %v1347
    %v1349 = vld [vmem:[%s10] sm:$0x1]
    %v1350 = vmul.f32 %v1341, %v1348
    %v1351 = vsub.f32 %v1349, %v1350
    %v1352 = vld [vmem:[%s12] sm:$0xff]
    %v1353 = vld [vmem:[%s12 + $0x8] sm:$0xff]
    %vm1354 = vcmask 130048
    %v1356 = vsel %vm1354, %v1348, 0
    %1358 = vmatprep.subr.mxu0 0.0
    %1359 = vmatpush1.msra.mxu0 %v1352
    %1360 = vmatprep.subr.mxu0 0.0
    %1361 = vmatpush1.msra.mxu0 %v1353
    %1362 = vmatprep.subr.mxu0 0.0
    %1363 = vmatpush1.msra.mxu0 0.0
    %1364 = vmatprep.subr.mxu0 0.0
    %1365 = vmatpush1.msra.mxu0 0.0
    %1366 = vmatprep.subr.mxu0 0.0
    %1367 = vmatpush1.msra.mxu0 0.0
    %1368 = vmatprep.subr.mxu0 0.0
    %1369 = vmatpush1.msra.mxu0 0.0
    %1370 = vmatprep.subr.mxu0 0.0
    %1371 = vmatpush1.msra.mxu0 0.0
    %1372 = vmatprep.subr.mxu0 0.0
    %1373 = vmatpush1.msra.mxu0 0.0
    %1374 = vmatprep.subr.mxu0 0.0
    %1375 = vmatpush1.msra.mxu0 0.0
    %1376 = vmatprep.subr.mxu0 0.0
    %1377 = vmatpush1.msra.mxu0 0.0
    %1378 = vmatprep.subr.mxu0 0.0
    %1379 = vmatpush1.msra.mxu0 0.0
    %1380 = vmatprep.subr.mxu0 0.0
    %1381 = vmatpush1.msra.mxu0 0.0
    %1382 = vmatprep.subr.mxu0 0.0
    %1383 = vmatpush1.msra.mxu0 0.0
    %1384 = vmatprep.subr.mxu0 0.0
    %1385 = vmatpush1.msra.mxu0 0.0
    %1386 = vmatprep.subr.mxu0 0.0
    %1387 = vmatpush1.msra.mxu0 0.0
    %1388 = vmatprep.subr.mxu0 0.0
    %1389 = vmatpush1.msra.mxu0 0.0
    %1390 = vmatprep.subr.mxu0 0.0
    %1391 = vmatpush1.msra.mxu0 0.0
    %1392 = vmatprep.subr.mxu0 0.0
    %1393 = vmatpush1.msra.mxu0 0.0
    %1394 = vmatprep.subr.mxu0 0.0
    %1395 = vmatpush1.msra.mxu0 0.0
    %1396 = vmatprep.subr.mxu0 0.0
    %1397 = vmatpush1.msra.mxu0 0.0
    %1398 = vmatprep.subr.mxu0 0.0
    %1399 = vmatpush1.msra.mxu0 0.0
    %1400 = vmatprep.subr.mxu0 0.0
    %1401 = vmatpush1.msra.mxu0 0.0
    %1402 = vmatprep.subr.mxu0 0.0
    %1403 = vmatpush1.msra.mxu0 0.0
    %1404 = vmatprep.subr.mxu0 0.0
    %1405 = vmatpush1.msra.mxu0 0.0
    %1406 = vmatprep.subr.mxu0 0.0
    %1407 = vmatpush1.msra.mxu0 0.0
    %1408 = vmatprep.subr.mxu0 0.0
    %1409 = vmatpush1.msra.mxu0 0.0
    %1410 = vmatprep.subr.mxu0 0.0
    %1411 = vmatpush1.msra.mxu0 0.0
    %1412 = vmatprep.subr.mxu0 0.0
    %1413 = vmatpush1.msra.mxu0 0.0
    %1414 = vmatprep.subr.mxu0 0.0
    %1415 = vmatpush1.msra.mxu0 0.0
    %1416 = vmatprep.subr.mxu0 0.0
    %1417 = vmatpush1.msra.mxu0 0.0
    %1418 = vmatprep.subr.mxu0 0.0
    %1419 = vmatpush1.msra.mxu0 0.0
    %1420 = vmatprep.subr.mxu0 0.0
    %1421 = vmatpush1.msra.mxu0 0.0
    %1422 = vmatprep.mubr.f32.mxu0 0.0
    %1423 = vmatmul.mubr.f32.gmra.mrb[0].mxu0 %v1356
    %v1424 = vpop.f32.mrb[0].mxu0
    %v1425 = vadd.f32 0.0, %v1424
    %v1426 = vpop.f32.mrb[0].mxu0
    %1427 = vdwg.mxu0
    %v1429 = vsel %vm1354, %v1351, 0
    %1431 = vmatprep.subr.mxu0 0.0
    %1432 = vmatpush1.msra.mxu0 %v1352
    %1433 = vmatprep.subr.mxu0 0.0
    %1434 = vmatpush1.msra.mxu0 %v1353
    %1435 = vmatprep.subr.mxu0 0.0
    %1436 = vmatpush1.msra.mxu0 0.0
    %1437 = vmatprep.subr.mxu0 0.0
    %1438 = vmatpush1.msra.mxu0 0.0
    %1439 = vmatprep.subr.mxu0 0.0
    %1440 = vmatpush1.msra.mxu0 0.0
    %1441 = vmatprep.subr.mxu0 0.0
    %1442 = vmatpush1.msra.mxu0 0.0
    %1443 = vmatprep.subr.mxu0 0.0
    %1444 = vmatpush1.msra.mxu0 0.0
    %1445 = vmatprep.subr.mxu0 0.0
    %1446 = vmatpush1.msra.mxu0 0.0
    %1447 = vmatprep.subr.mxu0 0.0
    %1448 = vmatpush1.msra.mxu0 0.0
    %1449 = vmatprep.subr.mxu0 0.0
    %1450 = vmatpush1.msra.mxu0 0.0
    %1451 = vmatprep.subr.mxu0 0.0
    %1452 = vmatpush1.msra.mxu0 0.0
    %1453 = vmatprep.subr.mxu0 0.0
    %1454 = vmatpush1.msra.mxu0 0.0
    %1455 = vmatprep.subr.mxu0 0.0
    %1456 = vmatpush1.msra.mxu0 0.0
    %1457 = vmatprep.subr.mxu0 0.0
    %1458 = vmatpush1.msra.mxu0 0.0
    %1459 = vmatprep.subr.mxu0 0.0
    %1460 = vmatpush1.msra.mxu0 0.0
    %1461 = vmatprep.subr.mxu0 0.0
    %1462 = vmatpush1.msra.mxu0 0.0
    %1463 = vmatprep.subr.mxu0 0.0
    %1464 = vmatpush1.msra.mxu0 0.0
    %1465 = vmatprep.subr.mxu0 0.0
    %1466 = vmatpush1.msra.mxu0 0.0
    %1467 = vmatprep.subr.mxu0 0.0
    %1468 = vmatpush1.msra.mxu0 0.0
    %1469 = vmatprep.subr.mxu0 0.0
    %1470 = vmatpush1.msra.mxu0 0.0
    %1471 = vmatprep.subr.mxu0 0.0
    %1472 = vmatpush1.msra.mxu0 0.0
    %1473 = vmatprep.subr.mxu0 0.0
    %1474 = vmatpush1.msra.mxu0 0.0
    %1475 = vmatprep.subr.mxu0 0.0
    %1476 = vmatpush1.msra.mxu0 0.0
    %1477 = vmatprep.subr.mxu0 0.0
    %1478 = vmatpush1.msra.mxu0 0.0
    %1479 = vmatprep.subr.mxu0 0.0
    %1480 = vmatpush1.msra.mxu0 0.0
    %1481 = vmatprep.subr.mxu0 0.0
    %1482 = vmatpush1.msra.mxu0 0.0
    %1483 = vmatprep.subr.mxu0 0.0
    %1484 = vmatpush1.msra.mxu0 0.0
    %1485 = vmatprep.subr.mxu0 0.0
    %1486 = vmatpush1.msra.mxu0 0.0
    %1487 = vmatprep.subr.mxu0 0.0
    %1488 = vmatpush1.msra.mxu0 0.0
    %1489 = vmatprep.subr.mxu0 0.0
    %1490 = vmatpush1.msra.mxu0 0.0
    %1491 = vmatprep.subr.mxu0 0.0
    %1492 = vmatpush1.msra.mxu0 0.0
    %1493 = vmatprep.subr.mxu0 0.0
    %1494 = vmatpush1.msra.mxu0 0.0
    %1495 = vmatprep.mubr.f32.mxu0 0.0
    %1496 = vmatmul.mubr.f32.gmra.mrb[0].mxu0 %v1429
    %v1497 = vpop.f32.mrb[0].mxu0
    %v1498 = vadd.f32 0.0, %v1497
    %v1499 = vpop.f32.mrb[0].mxu0
    %1500 = vdwg.mxu0
    %v1501 = vlaneseq
    %v1502 = vshrl.u32 %v1501, 7
    %v1503 = vsub.s32 0, %v1502
    %v1504 = vrot.slane %v1425, %v1503
    %v1505 = vmul.f32 %v975, %v1504
    %v1506 = vlaneseq
    %v1507 = vshrl.u32 %v1506, 7
    %v1508 = vsub.s32 0, %v1507
    %v1509 = vrot.slane %v1498, %v1508
    %v1510 = vadd.f32 %v1505, %v1509
    %v1511 = vmul.f32 %v1510, 0.2
    %v1512 = vmax.f32 %v1510, %v1511
    %v1513 = vmul.f32 %v1152, %v1504
    %v1514 = vadd.f32 %v1513, %v1509
    %v1515 = vmul.f32 %v1514, 0.2
    %v1516 = vmax.f32 %v1514, %v1515
    %v1517 = vld [vmem:[%s3] sm:$0xf]
    %v1518 = vld [vmem:[%s3 + $0x4] sm:$0xf]
    %v1519 = vld [vmem:[%s3 + $0x8] sm:$0xf]
    %v1520 = vld [vmem:[%s3 + $0xc] sm:$0xf]
    %v1521 = vld [vmem:[%s3 + $0x10] sm:$0xf]
    %v1522 = vld [vmem:[%s3 + $0x14] sm:$0xf]
    %v1523 = vld [vmem:[%s3 + $0x18] sm:$0xf]
    %v1524 = vld [vmem:[%s3 + $0x1c] sm:$0xf]
    %v1525 = vld [vmem:[%s3 + $0x20] sm:$0xf]
    %v1526 = vld [vmem:[%s3 + $0x24] sm:$0xf]
    %v1527 = vld [vmem:[%s3 + $0x28] sm:$0xf]
    %v1528 = vld [vmem:[%s3 + $0x2c] sm:$0xf]
    %v1529 = vld [vmem:[%s3 + $0x30] sm:$0xf]
    %v1530 = vld [vmem:[%s3 + $0x34] sm:$0xf]
    %v1531 = vld [vmem:[%s3 + $0x38] sm:$0xf]
    %v1532 = vld [vmem:[%s3 + $0x3c] sm:$0xf]
    %s1533 = scalar_lea.vmem %s3, 64
    %v1534 = vld [vmem:[%s1533] sm:$0xf]
    %v1535 = vld [vmem:[%s1533 + $0x4] sm:$0xf]
    %v1536 = vld [vmem:[%s1533 + $0x8] sm:$0xf]
    %v1537 = vld [vmem:[%s1533 + $0xc] sm:$0xf]
    %v1538 = vld [vmem:[%s1533 + $0x10] sm:$0xf]
    %v1539 = vld [vmem:[%s1533 + $0x14] sm:$0xf]
    %v1540 = vld [vmem:[%s1533 + $0x18] sm:$0xf]
    %v1541 = vld [vmem:[%s1533 + $0x1c] sm:$0xf]
    %v1542 = vld [vmem:[%s1533 + $0x20] sm:$0xf]
    %v1543 = vld [vmem:[%s1533 + $0x24] sm:$0xf]
    %v1544 = vld [vmem:[%s1533 + $0x28] sm:$0xf]
    %v1545 = vld [vmem:[%s1533 + $0x2c] sm:$0xf]
    %v1546 = vld [vmem:[%s1533 + $0x30] sm:$0xf]
    %v1547 = vld [vmem:[%s1533 + $0x34] sm:$0xf]
    %v1548 = vld [vmem:[%s1533 + $0x38] sm:$0xf]
    %v1549 = vld [vmem:[%s1533 + $0x3c] sm:$0xf]
    %s1550 = scalar_lea.vmem %s3, 128
    %v1551 = vld [vmem:[%s1550] sm:$0xf]
    %v1552 = vld [vmem:[%s1550 + $0x4] sm:$0xf]
    %v1553 = vld [vmem:[%s1550 + $0x8] sm:$0xf]
    %v1554 = vld [vmem:[%s1550 + $0xc] sm:$0xf]
    %v1555 = vld [vmem:[%s1550 + $0x10] sm:$0xf]
    %v1556 = vld [vmem:[%s1550 + $0x14] sm:$0xf]
    %v1557 = vld [vmem:[%s1550 + $0x18] sm:$0xf]
    %v1558 = vld [vmem:[%s1550 + $0x1c] sm:$0xf]
    %v1559 = vld [vmem:[%s1550 + $0x20] sm:$0xf]
    %v1560 = vld [vmem:[%s1550 + $0x24] sm:$0xf]
    %v1561 = vld [vmem:[%s1550 + $0x28] sm:$0xf]
    %v1562 = vld [vmem:[%s1550 + $0x2c] sm:$0xf]
    %v1563 = vld [vmem:[%s1550 + $0x30] sm:$0xf]
    %v1564 = vld [vmem:[%s1550 + $0x34] sm:$0xf]
    %v1565 = vld [vmem:[%s1550 + $0x38] sm:$0xf]
    %v1566 = vld [vmem:[%s1550 + $0x3c] sm:$0xf]
    %s1567 = scalar_lea.vmem %s3, 192
    %v1568 = vld [vmem:[%s1567] sm:$0xf]
    %v1569 = vld [vmem:[%s1567 + $0x4] sm:$0xf]
    %v1570 = vld [vmem:[%s1567 + $0x8] sm:$0xf]
    %v1571 = vld [vmem:[%s1567 + $0xc] sm:$0xf]
    %v1572 = vld [vmem:[%s1567 + $0x10] sm:$0xf]
    %v1573 = vld [vmem:[%s1567 + $0x14] sm:$0xf]
    %v1574 = vld [vmem:[%s1567 + $0x18] sm:$0xf]
    %v1575 = vld [vmem:[%s1567 + $0x1c] sm:$0xf]
    %v1576 = vld [vmem:[%s1567 + $0x20] sm:$0xf]
    %v1577 = vld [vmem:[%s1567 + $0x24] sm:$0xf]
    %v1578 = vld [vmem:[%s1567 + $0x28] sm:$0xf]
    %v1579 = vld [vmem:[%s1567 + $0x2c] sm:$0xf]
    %v1580 = vld [vmem:[%s1567 + $0x30] sm:$0xf]
    %v1581 = vld [vmem:[%s1567 + $0x34] sm:$0xf]
    %v1582 = vld [vmem:[%s1567 + $0x38] sm:$0xf]
    %v1583 = vld [vmem:[%s1567 + $0x3c] sm:$0xf]
    %v1585 = vrot.slane %v1516, 7
    %v1587 = vsel %vm368, 0.0, %v1585
    %v1588 = vsel %vm373, %v1587, 0.0
    %v1589 = vsel %vm375, %v1588, %v1585
    %v1590 = vpack.c.bf16 %v1512, %v1512
    %v1591 = vpack.c.bf16 %v1589, %v1589
    %v1608 = vunpack.c.l.b16 %v1568
    %v1609 = vunpack.c.l.b16 %v1569
    %v1610 = vunpack.c.l.b16 %v1570
    %v1611 = vunpack.c.l.b16 %v1571
    %v1612 = vunpack.c.l.b16 %v1572
    %v1613 = vunpack.c.l.b16 %v1573
    %v1614 = vunpack.c.l.b16 %v1574
    %v1615 = vunpack.c.l.b16 %v1575
    %v1616 = vunpack.c.l.b16 %v1576
    %v1617 = vunpack.c.l.b16 %v1577
    %v1618 = vunpack.c.l.b16 %v1578
    %v1619 = vunpack.c.l.b16 %v1579
    %v1620 = vunpack.c.l.b16 %v1580
    %v1621 = vunpack.c.l.b16 %v1581
    %v1622 = vunpack.c.l.b16 %v1582
    %v1623 = vunpack.c.l.b16 %v1583
    %v1624 = vpack.c.b16 %v1609, %v1608
    %v1625 = vpack.c.b16 %v1611, %v1610
    %v1626 = vpack.c.b16 %v1613, %v1612
    %v1627 = vpack.c.b16 %v1615, %v1614
    %v1628 = vpack.c.b16 %v1617, %v1616
    %v1629 = vpack.c.b16 %v1619, %v1618
    %v1630 = vpack.c.b16 %v1621, %v1620
    %v1631 = vpack.c.b16 %v1623, %v1622
    %1640 = vmatprep.subr.bf16.mxu0 0
    %1641 = vmatpush1.bf16.msra.mxu0 %v1624
    %1642 = vmatprep.subr.bf16.mxu0 0
    %1643 = vmatpush1.bf16.msra.mxu0 %v1625
    %1644 = vmatprep.subr.bf16.mxu0 0
    %1645 = vmatpush1.bf16.msra.mxu0 %v1626
    %1646 = vmatprep.subr.bf16.mxu0 0
    %1647 = vmatpush1.bf16.msra.mxu0 %v1627
    %1648 = vmatprep.subr.bf16.mxu0 0
    %1649 = vmatpush1.bf16.msra.mxu0 %v1628
    %1650 = vmatprep.subr.bf16.mxu0 0
    %1651 = vmatpush1.bf16.msra.mxu0 %v1629
    %1652 = vmatprep.subr.bf16.mxu0 0
    %1653 = vmatpush1.bf16.msra.mxu0 %v1630
    %1654 = vmatprep.subr.bf16.mxu0 0
    %1655 = vmatpush1.bf16.msra.mxu0 %v1631
    %1656 = vmatprep.subr.bf16.mxu0 0
    %1657 = vmatpush1.bf16.msra.mxu0 0
    %1658 = vmatprep.subr.bf16.mxu0 0
    %1659 = vmatpush1.bf16.msra.mxu0 0
    %1660 = vmatprep.subr.bf16.mxu0 0
    %1661 = vmatpush1.bf16.msra.mxu0 0
    %1662 = vmatprep.subr.bf16.mxu0 0
    %1663 = vmatpush1.bf16.msra.mxu0 0
    %1664 = vmatprep.subr.bf16.mxu0 0
    %1665 = vmatpush1.bf16.msra.mxu0 0
    %1666 = vmatprep.subr.bf16.mxu0 0
    %1667 = vmatpush1.bf16.msra.mxu0 0
    %1668 = vmatprep.subr.bf16.mxu0 0
    %1669 = vmatpush1.bf16.msra.mxu0 0
    %1670 = vmatprep.subr.bf16.mxu0 0
    %1671 = vmatpush1.bf16.msra.mxu0 0
    %1672 = vmatprep.mubr.bf16.mxu0 0
    %1673 = vmatmul.mubr.bf16.gmra.mrb[0].mxu0 %v1591
    %v1674 = vpop.f32.mrb[0].mxu0
    %v1675 = vadd.f32 0.0, %v1674
    %v1676 = vpop.f32.mrb[0].mxu0
    %v1677 = vpop.f32.mrb[0].mxu0
    %v1678 = vpop.f32.mrb[0].mxu0
    %1679 = vdwg.mxu0
    %v1696 = vunpack.c.l.b16 %v1534
    %v1697 = vunpack.c.l.b16 %v1535
    %v1698 = vunpack.c.l.b16 %v1536
    %v1699 = vunpack.c.l.b16 %v1537
    %v1700 = vunpack.c.l.b16 %v1538
    %v1701 = vunpack.c.l.b16 %v1539
    %v1702 = vunpack.c.l.b16 %v1540
    %v1703 = vunpack.c.l.b16 %v1541
    %v1704 = vunpack.c.l.b16 %v1542
    %v1705 = vunpack.c.l.b16 %v1543
    %v1706 = vunpack.c.l.b16 %v1544
    %v1707 = vunpack.c.l.b16 %v1545
    %v1708 = vunpack.c.l.b16 %v1546
    %v1709 = vunpack.c.l.b16 %v1547
    %v1710 = vunpack.c.l.b16 %v1548
    %v1711 = vunpack.c.l.b16 %v1549
    %v1712 = vpack.c.b16 %v1697, %v1696
    %v1713 = vpack.c.b16 %v1699, %v1698
    %v1714 = vpack.c.b16 %v1701, %v1700
    %v1715 = vpack.c.b16 %v1703, %v1702
    %v1716 = vpack.c.b16 %v1705, %v1704
    %v1717 = vpack.c.b16 %v1707, %v1706
    %v1718 = vpack.c.b16 %v1709, %v1708
    %v1719 = vpack.c.b16 %v1711, %v1710
    %1728 = vmatprep.subr.bf16.mxu0 0
    %1729 = vmatpush1.bf16.msra.mxu0 %v1712
    %1730 = vmatprep.subr.bf16.mxu0 0
    %1731 = vmatpush1.bf16.msra.mxu0 %v1713
    %1732 = vmatprep.subr.bf16.mxu0 0
    %1733 = vmatpush1.bf16.msra.mxu0 %v1714
    %1734 = vmatprep.subr.bf16.mxu0 0
    %1735 = vmatpush1.bf16.msra.mxu0 %v1715
    %1736 = vmatprep.subr.bf16.mxu0 0
    %1737 = vmatpush1.bf16.msra.mxu0 %v1716
    %1738 = vmatprep.subr.bf16.mxu0 0
    %1739 = vmatpush1.bf16.msra.mxu0 %v1717
    %1740 = vmatprep.subr.bf16.mxu0 0
    %1741 = vmatpush1.bf16.msra.mxu0 %v1718
    %1742 = vmatprep.subr.bf16.mxu0 0
    %1743 = vmatpush1.bf16.msra.mxu0 %v1719
    %1744 = vmatprep.subr.bf16.mxu0 0
    %1745 = vmatpush1.bf16.msra.mxu0 0
    %1746 = vmatprep.subr.bf16.mxu0 0
    %1747 = vmatpush1.bf16.msra.mxu0 0
    %1748 = vmatprep.subr.bf16.mxu0 0
    %1749 = vmatpush1.bf16.msra.mxu0 0
    %1750 = vmatprep.subr.bf16.mxu0 0
    %1751 = vmatpush1.bf16.msra.mxu0 0
    %1752 = vmatprep.subr.bf16.mxu0 0
    %1753 = vmatpush1.bf16.msra.mxu0 0
    %1754 = vmatprep.subr.bf16.mxu0 0
    %1755 = vmatpush1.bf16.msra.mxu0 0
    %1756 = vmatprep.subr.bf16.mxu0 0
    %1757 = vmatpush1.bf16.msra.mxu0 0
    %1758 = vmatprep.subr.bf16.mxu0 0
    %1759 = vmatpush1.bf16.msra.mxu0 0
    %1760 = vmatprep.mubr.bf16.mxu0 0
    %1761 = vmatmul.mubr.bf16.gmra.mrb[0].mxu0 %v1590
    %v1762 = vpop.f32.mrb[0].mxu0
    %v1763 = vadd.f32 %v1675, %v1762
    %v1764 = vpop.f32.mrb[0].mxu0
    %v1765 = vpop.f32.mrb[0].mxu0
    %v1766 = vpop.f32.mrb[0].mxu0
    %1767 = vdwg.mxu0
    %v1768 = vpack.c.bf16 %v1516, %v1516
    %v1785 = vunpack.c.l.b16 %v1517
    %v1786 = vunpack.c.l.b16 %v1518
    %v1787 = vunpack.c.l.b16 %v1519
    %v1788 = vunpack.c.l.b16 %v1520
    %v1789 = vunpack.c.l.b16 %v1521
    %v1790 = vunpack.c.l.b16 %v1522
    %v1791 = vunpack.c.l.b16 %v1523
    %v1792 = vunpack.c.l.b16 %v1524
    %v1793 = vunpack.c.l.b16 %v1525
    %v1794 = vunpack.c.l.b16 %v1526
    %v1795 = vunpack.c.l.b16 %v1527
    %v1796 = vunpack.c.l.b16 %v1528
    %v1797 = vunpack.c.l.b16 %v1529
    %v1798 = vunpack.c.l.b16 %v1530
    %v1799 = vunpack.c.l.b16 %v1531
    %v1800 = vunpack.c.l.b16 %v1532
    %v1801 = vpack.c.b16 %v1786, %v1785
    %v1802 = vpack.c.b16 %v1788, %v1787
    %v1803 = vpack.c.b16 %v1790, %v1789
    %v1804 = vpack.c.b16 %v1792, %v1791
    %v1805 = vpack.c.b16 %v1794, %v1793
    %v1806 = vpack.c.b16 %v1796, %v1795
    %v1807 = vpack.c.b16 %v1798, %v1797
    %v1808 = vpack.c.b16 %v1800, %v1799
    %1817 = vmatprep.subr.bf16.mxu0 0
    %1818 = vmatpush1.bf16.msra.mxu0 %v1801
    %1819 = vmatprep.subr.bf16.mxu0 0
    %1820 = vmatpush1.bf16.msra.mxu0 %v1802
    %1821 = vmatprep.subr.bf16.mxu0 0
    %1822 = vmatpush1.bf16.msra.mxu0 %v1803
    %1823 = vmatprep.subr.bf16.mxu0 0
    %1824 = vmatpush1.bf16.msra.mxu0 %v1804
    %1825 = vmatprep.subr.bf16.mxu0 0
    %1826 = vmatpush1.bf16.msra.mxu0 %v1805
    %1827 = vmatprep.subr.bf16.mxu0 0
    %1828 = vmatpush1.bf16.msra.mxu0 %v1806
    %1829 = vmatprep.subr.bf16.mxu0 0
    %1830 = vmatpush1.bf16.msra.mxu0 %v1807
    %1831 = vmatprep.subr.bf16.mxu0 0
    %1832 = vmatpush1.bf16.msra.mxu0 %v1808
    %1833 = vmatprep.subr.bf16.mxu0 0
    %1834 = vmatpush1.bf16.msra.mxu0 0
    %1835 = vmatprep.subr.bf16.mxu0 0
    %1836 = vmatpush1.bf16.msra.mxu0 0
    %1837 = vmatprep.subr.bf16.mxu0 0
    %1838 = vmatpush1.bf16.msra.mxu0 0
    %1839 = vmatprep.subr.bf16.mxu0 0
    %1840 = vmatpush1.bf16.msra.mxu0 0
    %1841 = vmatprep.subr.bf16.mxu0 0
    %1842 = vmatpush1.bf16.msra.mxu0 0
    %1843 = vmatprep.subr.bf16.mxu0 0
    %1844 = vmatpush1.bf16.msra.mxu0 0
    %1845 = vmatprep.subr.bf16.mxu0 0
    %1846 = vmatpush1.bf16.msra.mxu0 0
    %1847 = vmatprep.subr.bf16.mxu0 0
    %1848 = vmatpush1.bf16.msra.mxu0 0
    %1849 = vmatprep.mubr.bf16.mxu0 0
    %1850 = vmatmul.mubr.bf16.gmra.mrb[0].mxu0 %v1768
    %v1851 = vpop.f32.mrb[0].mxu0
    %v1852 = vadd.f32 0.0, %v1851
    %v1853 = vpop.f32.mrb[0].mxu0
    %v1854 = vpop.f32.mrb[0].mxu0
    %v1855 = vpop.f32.mrb[0].mxu0
    %1856 = vdwg.mxu0
    %v1873 = vunpack.c.l.b16 %v1551
    %v1874 = vunpack.c.l.b16 %v1552
    %v1875 = vunpack.c.l.b16 %v1553
    %v1876 = vunpack.c.l.b16 %v1554
    %v1877 = vunpack.c.l.b16 %v1555
    %v1878 = vunpack.c.l.b16 %v1556
    %v1879 = vunpack.c.l.b16 %v1557
    %v1880 = vunpack.c.l.b16 %v1558
    %v1881 = vunpack.c.l.b16 %v1559
    %v1882 = vunpack.c.l.b16 %v1560
    %v1883 = vunpack.c.l.b16 %v1561
    %v1884 = vunpack.c.l.b16 %v1562
    %v1885 = vunpack.c.l.b16 %v1563
    %v1886 = vunpack.c.l.b16 %v1564
    %v1887 = vunpack.c.l.b16 %v1565
    %v1888 = vunpack.c.l.b16 %v1566
    %v1889 = vpack.c.b16 %v1874, %v1873
    %v1890 = vpack.c.b16 %v1876, %v1875
    %v1891 = vpack.c.b16 %v1878, %v1877
    %v1892 = vpack.c.b16 %v1880, %v1879
    %v1893 = vpack.c.b16 %v1882, %v1881
    %v1894 = vpack.c.b16 %v1884, %v1883
    %v1895 = vpack.c.b16 %v1886, %v1885
    %v1896 = vpack.c.b16 %v1888, %v1887
    %1905 = vmatprep.subr.bf16.mxu0 0
    %1906 = vmatpush1.bf16.msra.mxu0 %v1889
    %1907 = vmatprep.subr.bf16.mxu0 0
    %1908 = vmatpush1.bf16.msra.mxu0 %v1890
    %1909 = vmatprep.subr.bf16.mxu0 0
    %1910 = vmatpush1.bf16.msra.mxu0 %v1891
    %1911 = vmatprep.subr.bf16.mxu0 0
    %1912 = vmatpush1.bf16.msra.mxu0 %v1892
    %1913 = vmatprep.subr.bf16.mxu0 0
    %1914 = vmatpush1.bf16.msra.mxu0 %v1893
    %1915 = vmatprep.subr.bf16.mxu0 0
    %1916 = vmatpush1.bf16.msra.mxu0 %v1894
    %1917 = vmatprep.subr.bf16.mxu0 0
    %1918 = vmatpush1.bf16.msra.mxu0 %v1895
    %1919 = vmatprep.subr.bf16.mxu0 0
    %1920 = vmatpush1.bf16.msra.mxu0 %v1896
    %1921 = vmatprep.subr.bf16.mxu0 0
    %1922 = vmatpush1.bf16.msra.mxu0 0
    %1923 = vmatprep.subr.bf16.mxu0 0
    %1924 = vmatpush1.bf16.msra.mxu0 0
    %1925 = vmatprep.subr.bf16.mxu0 0
    %1926 = vmatpush1.bf16.msra.mxu0 0
    %1927 = vmatprep.subr.bf16.mxu0 0
    %1928 = vmatpush1.bf16.msra.mxu0 0
    %1929 = vmatprep.subr.bf16.mxu0 0
    %1930 = vmatpush1.bf16.msra.mxu0 0
    %1931 = vmatprep.subr.bf16.mxu0 0
    %1932 = vmatpush1.bf16.msra.mxu0 0
    %1933 = vmatprep.subr.bf16.mxu0 0
    %1934 = vmatpush1.bf16.msra.mxu0 0
    %1935 = vmatprep.subr.bf16.mxu0 0
    %1936 = vmatpush1.bf16.msra.mxu0 0
    %1937 = vmatprep.mubr.bf16.mxu0 0
    %1938 = vmatmul.mubr.bf16.gmra.mrb[0].mxu0 %v1590
    %v1939 = vpop.f32.mrb[0].mxu0
    %v1940 = vadd.f32 %v1852, %v1939
    %v1941 = vpop.f32.mrb[0].mxu0
    %v1942 = vpop.f32.mrb[0].mxu0
    %v1943 = vpop.f32.mrb[0].mxu0
    %1944 = vdwg.mxu0
    %v1946 = vrot.slane %v1512, 1
    %v1948 = vsel %vm371, %v1946, 0.0
    %v1949 = vsel %vm373, %v1948, %v1946
    %v1950 = vsel %vm379, %v1949, 0.0
    %1951 = vmatprep.subr.bf16.mxu0 0
    %1952 = vmatpush1.bf16.msra.mxu0 %v1624
    %1953 = vmatprep.subr.bf16.mxu0 0
    %1954 = vmatpush1.bf16.msra.mxu0 %v1625
    %1955 = vmatprep.subr.bf16.mxu0 0
    %1956 = vmatpush1.bf16.msra.mxu0 %v1626
    %1957 = vmatprep.subr.bf16.mxu0 0
    %1958 = vmatpush1.bf16.msra.mxu0 %v1627
    %1959 = vmatprep.subr.bf16.mxu0 0
    %1960 = vmatpush1.bf16.msra.mxu0 %v1628
    %1961 = vmatprep.subr.bf16.mxu0 0
    %1962 = vmatpush1.bf16.msra.mxu0 %v1629
    %1963 = vmatprep.subr.bf16.mxu0 0
    %1964 = vmatpush1.bf16.msra.mxu0 %v1630
    %1965 = vmatprep.subr.bf16.mxu0 0
    %1966 = vmatpush1.bf16.msra.mxu0 %v1631
    %1967 = vmatprep.subr.bf16.mxu0 0
    %1968 = vmatpush1.bf16.msra.mxu0 0
    %1969 = vmatprep.subr.bf16.mxu0 0
    %1970 = vmatpush1.bf16.msra.mxu0 0
    %1971 = vmatprep.subr.bf16.mxu0 0
    %1972 = vmatpush1.bf16.msra.mxu0 0
    %1973 = vmatprep.subr.bf16.mxu0 0
    %1974 = vmatpush1.bf16.msra.mxu0 0
    %1975 = vmatprep.subr.bf16.mxu0 0
    %1976 = vmatpush1.bf16.msra.mxu0 0
    %1977 = vmatprep.subr.bf16.mxu0 0
    %1978 = vmatpush1.bf16.msra.mxu0 0
    %1979 = vmatprep.subr.bf16.mxu0 0
    %1980 = vmatpush1.bf16.msra.mxu0 0
    %1981 = vmatprep.subr.bf16.mxu0 0
    %1982 = vmatpush1.bf16.msra.mxu0 0
    %1983 = vmatprep.mubr.bf16.mxu0 0
    %1984 = vmatmul.mubr.bf16.gmra.mrb[0].mxu0 %v1590
    %v1985 = vpop.f32.mrb[0].mxu0
    %v1986 = vadd.f32 0.0, %v1985
    %v1987 = vpop.f32.mrb[0].mxu0
    %v1988 = vpop.f32.mrb[0].mxu0
    %v1989 = vpop.f32.mrb[0].mxu0
    %1990 = vdwg.mxu0
    %1991 = vmatprep.subr.bf16.mxu0 0
    %1992 = vmatpush1.bf16.msra.mxu0 %v1712
    %1993 = vmatprep.subr.bf16.mxu0 0
    %1994 = vmatpush1.bf16.msra.mxu0 %v1713
    %1995 = vmatprep.subr.bf16.mxu0 0
    %1996 = vmatpush1.bf16.msra.mxu0 %v1714
    %1997 = vmatprep.subr.bf16.mxu0 0
    %1998 = vmatpush1.bf16.msra.mxu0 %v1715
    %1999 = vmatprep.subr.bf16.mxu0 0
    %2000 = vmatpush1.bf16.msra.mxu0 %v1716
    %2001 = vmatprep.subr.bf16.mxu0 0
    %2002 = vmatpush1.bf16.msra.mxu0 %v1717
    %2003 = vmatprep.subr.bf16.mxu0 0
    %2004 = vmatpush1.bf16.msra.mxu0 %v1718
    %2005 = vmatprep.subr.bf16.mxu0 0
    %2006 = vmatpush1.bf16.msra.mxu0 %v1719
    %2007 = vmatprep.subr.bf16.mxu0 0
    %2008 = vmatpush1.bf16.msra.mxu0 0
    %2009 = vmatprep.subr.bf16.mxu0 0
    %2010 = vmatpush1.bf16.msra.mxu0 0
    %2011 = vmatprep.subr.bf16.mxu0 0
    %2012 = vmatpush1.bf16.msra.mxu0 0
    %2013 = vmatprep.subr.bf16.mxu0 0
    %2014 = vmatpush1.bf16.msra.mxu0 0
    %2015 = vmatprep.subr.bf16.mxu0 0
    %2016 = vmatpush1.bf16.msra.mxu0 0
    %2017 = vmatprep.subr.bf16.mxu0 0
    %2018 = vmatpush1.bf16.msra.mxu0 0
    %2019 = vmatprep.subr.bf16.mxu0 0
    %2020 = vmatpush1.bf16.msra.mxu0 0
    %2021 = vmatprep.subr.bf16.mxu0 0
    %2022 = vmatpush1.bf16.msra.mxu0 0
    %2023 = vmatprep.mubr.bf16.mxu0 0
    %2024 = vmatmul.mubr.bf16.gmra.mrb[0].mxu0 %v1768
    %v2025 = vpop.f32.mrb[0].mxu0
    %v2026 = vadd.f32 %v1986, %v2025
    %v2027 = vpop.f32.mrb[0].mxu0
    %v2028 = vpop.f32.mrb[0].mxu0
    %v2029 = vpop.f32.mrb[0].mxu0
    %2030 = vdwg.mxu0
    %v2031 = vpack.c.bf16 %v1950, %v1950
    %2032 = vmatprep.subr.bf16.mxu0 0
    %2033 = vmatpush1.bf16.msra.mxu0 %v1801
    %2034 = vmatprep.subr.bf16.mxu0 0
    %2035 = vmatpush1.bf16.msra.mxu0 %v1802
    %2036 = vmatprep.subr.bf16.mxu0 0
    %2037 = vmatpush1.bf16.msra.mxu0 %v1803
    %2038 = vmatprep.subr.bf16.mxu0 0
    %2039 = vmatpush1.bf16.msra.mxu0 %v1804
    %2040 = vmatprep.subr.bf16.mxu0 0
    %2041 = vmatpush1.bf16.msra.mxu0 %v1805
    %2042 = vmatprep.subr.bf16.mxu0 0
    %2043 = vmatpush1.bf16.msra.mxu0 %v1806
    %2044 = vmatprep.subr.bf16.mxu0 0
    %2045 = vmatpush1.bf16.msra.mxu0 %v1807
    %2046 = vmatprep.subr.bf16.mxu0 0
    %2047 = vmatpush1.bf16.msra.mxu0 %v1808
    %2048 = vmatprep.subr.bf16.mxu0 0
    %2049 = vmatpush1.bf16.msra.mxu0 0
    %2050 = vmatprep.subr.bf16.mxu0 0
    %2051 = vmatpush1.bf16.msra.mxu0 0
    %2052 = vmatprep.subr.bf16.mxu0 0
    %2053 = vmatpush1.bf16.msra.mxu0 0
    %2054 = vmatprep.subr.bf16.mxu0 0
    %2055 = vmatpush1.bf16.msra.mxu0 0
    %2056 = vmatprep.subr.bf16.mxu0 0
    %2057 = vmatpush1.bf16.msra.mxu0 0
    %2058 = vmatprep.subr.bf16.mxu0 0
    %2059 = vmatpush1.bf16.msra.mxu0 0
    %2060 = vmatprep.subr.bf16.mxu0 0
    %2061 = vmatpush1.bf16.msra.mxu0 0
    %2062 = vmatprep.subr.bf16.mxu0 0
    %2063 = vmatpush1.bf16.msra.mxu0 0
    %2064 = vmatprep.mubr.bf16.mxu0 0
    %2065 = vmatmul.mubr.bf16.gmra.mrb[0].mxu0 %v2031
    %v2066 = vpop.f32.mrb[0].mxu0
    %v2067 = vadd.f32 0.0, %v2066
    %v2068 = vpop.f32.mrb[0].mxu0
    %v2069 = vpop.f32.mrb[0].mxu0
    %v2070 = vpop.f32.mrb[0].mxu0
    %2071 = vdwg.mxu0
    %2072 = vmatprep.subr.bf16.mxu0 0
    %2073 = vmatpush1.bf16.msra.mxu0 %v1889
    %2074 = vmatprep.subr.bf16.mxu0 0
    %2075 = vmatpush1.bf16.msra.mxu0 %v1890
    %2076 = vmatprep.subr.bf16.mxu0 0
    %2077 = vmatpush1.bf16.msra.mxu0 %v1891
    %2078 = vmatprep.subr.bf16.mxu0 0
    %2079 = vmatpush1.bf16.msra.mxu0 %v1892
    %2080 = vmatprep.subr.bf16.mxu0 0
    %2081 = vmatpush1.bf16.msra.mxu0 %v1893
    %2082 = vmatprep.subr.bf16.mxu0 0
    %2083 = vmatpush1.bf16.msra.mxu0 %v1894
    %2084 = vmatprep.subr.bf16.mxu0 0
    %2085 = vmatpush1.bf16.msra.mxu0 %v1895
    %2086 = vmatprep.subr.bf16.mxu0 0
    %2087 = vmatpush1.bf16.msra.mxu0 %v1896
    %2088 = vmatprep.subr.bf16.mxu0 0
    %2089 = vmatpush1.bf16.msra.mxu0 0
    %2090 = vmatprep.subr.bf16.mxu0 0
    %2091 = vmatpush1.bf16.msra.mxu0 0
    %2092 = vmatprep.subr.bf16.mxu0 0
    %2093 = vmatpush1.bf16.msra.mxu0 0
    %2094 = vmatprep.subr.bf16.mxu0 0
    %2095 = vmatpush1.bf16.msra.mxu0 0
    %2096 = vmatprep.subr.bf16.mxu0 0
    %2097 = vmatpush1.bf16.msra.mxu0 0
    %2098 = vmatprep.subr.bf16.mxu0 0
    %2099 = vmatpush1.bf16.msra.mxu0 0
    %2100 = vmatprep.subr.bf16.mxu0 0
    %2101 = vmatpush1.bf16.msra.mxu0 0
    %2102 = vmatprep.subr.bf16.mxu0 0
    %2103 = vmatpush1.bf16.msra.mxu0 0
    %2104 = vmatprep.mubr.bf16.mxu0 0
    %2105 = vmatmul.mubr.bf16.gmra.mrb[0].mxu0 %v1768
    %v2106 = vpop.f32.mrb[0].mxu0
    %v2107 = vadd.f32 %v2067, %v2106
    %v2108 = vpop.f32.mrb[0].mxu0
    %v2109 = vpop.f32.mrb[0].mxu0
    %v2110 = vpop.f32.mrb[0].mxu0
    %2111 = vdwg.mxu0
    %v2112 = vrot.slane %v1763, 4
    %v2113 = vadd.f32 %v1763, %v2112
    %v2114 = vrot.slane %v2113, 2
    %v2115 = vadd.f32 %v2113, %v2114
    %v2116 = vrot.slane %v2115, 1
    %v2117 = vadd.f32 %v2115, %v2116
    %v2118 = vmul.f32 %v1763, %v1763
    %v2119 = vrot.slane %v2118, 4
    %v2120 = vadd.f32 %v2118, %v2119
    %v2121 = vrot.slane %v2120, 2
    %v2122 = vadd.f32 %v2120, %v2121
    %v2123 = vrot.slane %v2122, 1
    %v2124 = vadd.f32 %v2122, %v2123
    %v2125 = vrot.slane %v1940, 4
    %v2126 = vadd.f32 %v1940, %v2125
    %v2127 = vrot.slane %v2126, 2
    %v2128 = vadd.f32 %v2126, %v2127
    %v2129 = vrot.slane %v2128, 1
    %v2130 = vadd.f32 %v2128, %v2129
    %v2131 = vadd.f32 %v2117, %v2130
    %v2132 = vmul.f32 %v1940, %v1940
    %v2133 = vrot.slane %v2132, 4
    %v2134 = vadd.f32 %v2132, %v2133
    %v2135 = vrot.slane %v2134, 2
    %v2136 = vadd.f32 %v2134, %v2135
    %v2137 = vrot.slane %v2136, 1
    %v2138 = vadd.f32 %v2136, %v2137
    %v2139 = vadd.f32 %v2124, %v2138
    %v2140 = vrot.slane %v2026, 4
    %v2141 = vadd.f32 %v2026, %v2140
    %v2142 = vrot.slane %v2141, 2
    %v2143 = vadd.f32 %v2141, %v2142
    %v2144 = vrot.slane %v2143, 1
    %v2145 = vadd.f32 %v2143, %v2144
    %v2146 = vadd.f32 %v2131, %v2145
    %v2147 = vmul.f32 %v2026, %v2026
    %v2148 = vrot.slane %v2147, 4
    %v2149 = vadd.f32 %v2147, %v2148
    %v2150 = vrot.slane %v2149, 2
    %v2151 = vadd.f32 %v2149, %v2150
    %v2152 = vrot.slane %v2151, 1
    %v2153 = vadd.f32 %v2151, %v2152
    %v2154 = vadd.f32 %v2139, %v2153
    %v2155 = vrot.slane %v2107, 4
    %v2156 = vadd.f32 %v2107, %v2155
    %v2157 = vrot.slane %v2156, 2
    %v2158 = vadd.f32 %v2156, %v2157
    %v2159 = vrot.slane %v2158, 1
    %v2160 = vadd.f32 %v2158, %v2159
    %v2161 = vadd.f32 %v2146, %v2160
    %v2162 = vmul.f32 %v2107, %v2107
    %v2163 = vrot.slane %v2162, 4
    %v2164 = vadd.f32 %v2162, %v2163
    %v2165 = vrot.slane %v2164, 2
    %v2166 = vadd.f32 %v2164, %v2165
    %v2167 = vrot.slane %v2166, 1
    %v2168 = vadd.f32 %v2166, %v2167
    %v2169 = vadd.f32 %v2154, %v2168
    %v2170 = vld [vmem:[%s15] sm:$0xff]
    %v2171 = vld [vmem:[%s15 + $0x8] sm:$0xff]
    %v2172 = vld [vmem:[%s15 + $0x10] sm:$0xff]
    %v2173 = vld [vmem:[%s15 + $0x18] sm:$0xff]
    %v2174 = vld [vmem:[%s15 + $0x20] sm:$0xff]
    %v2175 = vld [vmem:[%s15 + $0x28] sm:$0xff]
    %v2176 = vld [vmem:[%s15 + $0x30] sm:$0xff]
    %v2177 = vld [vmem:[%s15 + $0x38] sm:$0xff]
    %v2178 = vld [vmem:[%s15 + $0x40] sm:$0xff]
    %v2179 = vld [vmem:[%s15 + $0x48] sm:$0xff]
    %v2180 = vld [vmem:[%s15 + $0x50] sm:$0xff]
    %v2181 = vld [vmem:[%s15 + $0x58] sm:$0xff]
    %v2182 = vld [vmem:[%s15 + $0x60] sm:$0xff]
    %v2183 = vld [vmem:[%s15 + $0x68] sm:$0xff]
    %v2184 = vld [vmem:[%s15 + $0x70] sm:$0xff]
    %v2185 = vld [vmem:[%s15 + $0x78] sm:$0xff]
    %2186 = vmatprep.subr.mxu0 0.0
    %2187 = vmatpush1.msra.mxu0 %v2170
    %2188 = vmatprep.subr.mxu0 0.0
    %2189 = vmatpush1.msra.mxu0 %v2171
    %2190 = vmatprep.subr.mxu0 0.0
    %2191 = vmatpush1.msra.mxu0 %v2172
    %2192 = vmatprep.subr.mxu0 0.0
    %2193 = vmatpush1.msra.mxu0 %v2173
    %2194 = vmatprep.subr.mxu0 0.0
    %2195 = vmatpush1.msra.mxu0 %v2174
    %2196 = vmatprep.subr.mxu0 0.0
    %2197 = vmatpush1.msra.mxu0 %v2175
    %2198 = vmatprep.subr.mxu0 0.0
    %2199 = vmatpush1.msra.mxu0 %v2176
    %2200 = vmatprep.subr.mxu0 0.0
    %2201 = vmatpush1.msra.mxu0 %v2177
    %2202 = vmatprep.subr.mxu0 0.0
    %2203 = vmatpush1.msra.mxu0 %v2178
    %2204 = vmatprep.subr.mxu0 0.0
    %2205 = vmatpush1.msra.mxu0 %v2179
    %2206 = vmatprep.subr.mxu0 0.0
    %2207 = vmatpush1.msra.mxu0 %v2180
    %2208 = vmatprep.subr.mxu0 0.0
    %2209 = vmatpush1.msra.mxu0 %v2181
    %2210 = vmatprep.subr.mxu0 0.0
    %2211 = vmatpush1.msra.mxu0 %v2182
    %2212 = vmatprep.subr.mxu0 0.0
    %2213 = vmatpush1.msra.mxu0 %v2183
    %2214 = vmatprep.subr.mxu0 0.0
    %2215 = vmatpush1.msra.mxu0 %v2184
    %2216 = vmatprep.subr.mxu0 0.0
    %2217 = vmatpush1.msra.mxu0 %v2185
    %2218 = vmatprep.subr.mxu0 0.0
    %2219 = vmatpush1.msra.mxu0 0.0
    %2220 = vmatprep.subr.mxu0 0.0
    %2221 = vmatpush1.msra.mxu0 0.0
    %2222 = vmatprep.subr.mxu0 0.0
    %2223 = vmatpush1.msra.mxu0 0.0
    %2224 = vmatprep.subr.mxu0 0.0
    %2225 = vmatpush1.msra.mxu0 0.0
    %2226 = vmatprep.subr.mxu0 0.0
    %2227 = vmatpush1.msra.mxu0 0.0
    %2228 = vmatprep.subr.mxu0 0.0
    %2229 = vmatpush1.msra.mxu0 0.0
    %2230 = vmatprep.subr.mxu0 0.0
    %2231 = vmatpush1.msra.mxu0 0.0
    %2232 = vmatprep.subr.mxu0 0.0
    %2233 = vmatpush1.msra.mxu0 0.0
    %2234 = vmatprep.subr.mxu0 0.0
    %2235 = vmatpush1.msra.mxu0 0.0
    %2236 = vmatprep.subr.mxu0 0.0
    %2237 = vmatpush1.msra.mxu0 0.0
    %2238 = vmatprep.subr.mxu0 0.0
    %2239 = vmatpush1.msra.mxu0 0.0
    %2240 = vmatprep.subr.mxu0 0.0
    %2241 = vmatpush1.msra.mxu0 0.0
    %2242 = vmatprep.subr.mxu0 0.0
    %2243 = vmatpush1.msra.mxu0 0.0
    %2244 = vmatprep.subr.mxu0 0.0
    %2245 = vmatpush1.msra.mxu0 0.0
    %2246 = vmatprep.subr.mxu0 0.0
    %2247 = vmatpush1.msra.mxu0 0.0
    %2248 = vmatprep.subr.mxu0 0.0
    %2249 = vmatpush1.msra.mxu0 0.0
    %2250 = vmatprep.mubr.f32.mxu0 0.0
    %2251 = vmatmul.mubr.f32.gmra.mrb[0].mxu0 %v2161
    %v2252 = vpop.f32.mrb[0].mxu0
    %v2253 = vadd.f32 0.0, %v2252
    %v2254 = vpop.f32.mrb[0].mxu0
    %2255 = vdwg.mxu0
    %2256 = vmatprep.subr.mxu0 0.0
    %2257 = vmatpush1.msra.mxu0 %v2170
    %2258 = vmatprep.subr.mxu0 0.0
    %2259 = vmatpush1.msra.mxu0 %v2171
    %2260 = vmatprep.subr.mxu0 0.0
    %2261 = vmatpush1.msra.mxu0 %v2172
    %2262 = vmatprep.subr.mxu0 0.0
    %2263 = vmatpush1.msra.mxu0 %v2173
    %2264 = vmatprep.subr.mxu0 0.0
    %2265 = vmatpush1.msra.mxu0 %v2174
    %2266 = vmatprep.subr.mxu0 0.0
    %2267 = vmatpush1.msra.mxu0 %v2175
    %2268 = vmatprep.subr.mxu0 0.0
    %2269 = vmatpush1.msra.mxu0 %v2176
    %2270 = vmatprep.subr.mxu0 0.0
    %2271 = vmatpush1.msra.mxu0 %v2177
    %2272 = vmatprep.subr.mxu0 0.0
    %2273 = vmatpush1.msra.mxu0 %v2178
    %2274 = vmatprep.subr.mxu0 0.0
    %2275 = vmatpush1.msra.mxu0 %v2179
    %2276 = vmatprep.subr.mxu0 0.0
    %2277 = vmatpush1.msra.mxu0 %v2180
    %2278 = vmatprep.subr.mxu0 0.0
    %2279 = vmatpush1.msra.mxu0 %v2181
    %2280 = vmatprep.subr.mxu0 0.0
    %2281 = vmatpush1.msra.mxu0 %v2182
    %2282 = vmatprep.subr.mxu0 0.0
    %2283 = vmatpush1.msra.mxu0 %v2183
    %2284 = vmatprep.subr.mxu0 0.0
    %2285 = vmatpush1.msra.mxu0 %v2184
    %2286 = vmatprep.subr.mxu0 0.0
    %2287 = vmatpush1.msra.mxu0 %v2185
    %2288 = vmatprep.subr.mxu0 0.0
    %2289 = vmatpush1.msra.mxu0 0.0
    %2290 = vmatprep.subr.mxu0 0.0
    %2291 = vmatpush1.msra.mxu0 0.0
    %2292 = vmatprep.subr.mxu0 0.0
    %2293 = vmatpush1.msra.mxu0 0.0
    %2294 = vmatprep.subr.mxu0 0.0
    %2295 = vmatpush1.msra.mxu0 0.0
    %2296 = vmatprep.subr.mxu0 0.0
    %2297 = vmatpush1.msra.mxu0 0.0
    %2298 = vmatprep.subr.mxu0 0.0
    %2299 = vmatpush1.msra.mxu0 0.0
    %2300 = vmatprep.subr.mxu0 0.0
    %2301 = vmatpush1.msra.mxu0 0.0
    %2302 = vmatprep.subr.mxu0 0.0
    %2303 = vmatpush1.msra.mxu0 0.0
    %2304 = vmatprep.subr.mxu0 0.0
    %2305 = vmatpush1.msra.mxu0 0.0
    %2306 = vmatprep.subr.mxu0 0.0
    %2307 = vmatpush1.msra.mxu0 0.0
    %2308 = vmatprep.subr.mxu0 0.0
    %2309 = vmatpush1.msra.mxu0 0.0
    %2310 = vmatprep.subr.mxu0 0.0
    %2311 = vmatpush1.msra.mxu0 0.0
    %2312 = vmatprep.subr.mxu0 0.0
    %2313 = vmatpush1.msra.mxu0 0.0
    %2314 = vmatprep.subr.mxu0 0.0
    %2315 = vmatpush1.msra.mxu0 0.0
    %2316 = vmatprep.subr.mxu0 0.0
    %2317 = vmatpush1.msra.mxu0 0.0
    %2318 = vmatprep.subr.mxu0 0.0
    %2319 = vmatpush1.msra.mxu0 0.0
    %2320 = vmatprep.mubr.f32.mxu0 0.0
    %2321 = vmatmul.mubr.f32.gmra.mrb[0].mxu0 %v2169
    %v2322 = vpop.f32.mrb[0].mxu0
    %v2323 = vadd.f32 0.0, %v2322
    %v2324 = vpop.f32.mrb[0].mxu0
    %2325 = vdwg.mxu0
    %v2326 = vmul.f32 %v2253, 0.001953125
    %v2327 = vmul.f32 %v2323, 0.001953125
    %v2328 = vmul.f32 %v2326, %v2326
    %v2329 = vsub.f32 %v2327, %v2328
    %v2330 = vld [vmem:[%s13] sm:$0x1]
    %v2331 = vadd.f32 %v2329, 1e-05
    %v2332 = vrsqrt.pop %v2331
    %v2333 = vmul.f32 %v2330, %v2332
    %v2334 = vld [vmem:[#allocation4] sm:$0x1]
    %v2335 = vmul.f32 %v2326, %v2333
    %v2336 = vsub.f32 %v2334, %v2335
    %v2337 = vld [vmem:[#allocation6] sm:$0xff]
    %vm2338 = vcmask 64512
    %v2340 = vsel %vm2338, %v2333, 0
    %2342 = vmatprep.subr.mxu0 0.0
    %2343 = vmatpush1.msra.mxu0 %v2337
    %2344 = vmatprep.subr.mxu0 0.0
    %2345 = vmatpush1.msra.mxu0 0.0
    %2346 = vmatprep.subr.mxu0 0.0
    %2347 = vmatpush1.msra.mxu0 0.0
    %2348 = vmatprep.subr.mxu0 0.0
    %2349 = vmatpush1.msra.mxu0 0.0
    %2350 = vmatprep.subr.mxu0 0.0
    %2351 = vmatpush1.msra.mxu0 0.0
    %2352 = vmatprep.subr.mxu0 0.0
    %2353 = vmatpush1.msra.mxu0 0.0
    %2354 = vmatprep.subr.mxu0 0.0
    %2355 = vmatpush1.msra.mxu0 0.0
    %2356 = vmatprep.subr.mxu0 0.0
    %2357 = vmatpush1.msra.mxu0 0.0
    %2358 = vmatprep.subr.mxu0 0.0
    %2359 = vmatpush1.msra.mxu0 0.0
    %2360 = vmatprep.subr.mxu0 0.0
    %2361 = vmatpush1.msra.mxu0 0.0
    %2362 = vmatprep.subr.mxu0 0.0
    %2363 = vmatpush1.msra.mxu0 0.0
    %2364 = vmatprep.subr.mxu0 0.0
    %2365 = vmatpush1.msra.mxu0 0.0
    %2366 = vmatprep.subr.mxu0 0.0
    %2367 = vmatpush1.msra.mxu0 0.0
    %2368 = vmatprep.subr.mxu0 0.0
    %2369 = vmatpush1.msra.mxu0 0.0
    %2370 = vmatprep.subr.mxu0 0.0
    %2371 = vmatpush1.msra.mxu0 0.0
    %2372 = vmatprep.subr.mxu0 0.0
    %2373 = vmatpush1.msra.mxu0 0.0
    %2374 = vmatprep.subr.mxu0 0.0
    %2375 = vmatpush1.msra.mxu0 0.0
    %2376 = vmatprep.subr.mxu0 0.0
    %2377 = vmatpush1.msra.mxu0 0.0
    %2378 = vmatprep.subr.mxu0 0.0
    %2379 = vmatpush1.msra.mxu0 0.0
    %2380 = vmatprep.subr.mxu0 0.0
    %2381 = vmatpush1.msra.mxu0 0.0
    %2382 = vmatprep.subr.mxu0 0.0
    %2383 = vmatpush1.msra.mxu0 0.0
    %2384 = vmatprep.subr.mxu0 0.0
    %2385 = vmatpush1.msra.mxu0 0.0
    %2386 = vmatprep.subr.mxu0 0.0
    %2387 = vmatpush1.msra.mxu0 0.0
    %2388 = vmatprep.subr.mxu0 0.0
    %2389 = vmatpush1.msra.mxu0 0.0
    %2390 = vmatprep.subr.mxu0 0.0
    %2391 = vmatpush1.msra.mxu0 0.0
    %2392 = vmatprep.subr.mxu0 0.0
    %2393 = vmatpush1.msra.mxu0 0.0
    %2394 = vmatprep.subr.mxu0 0.0
    %2395 = vmatpush1.msra.mxu0 0.0
    %2396 = vmatprep.subr.mxu0 0.0
    %2397 = vmatpush1.msra.mxu0 0.0
    %2398 = vmatprep.subr.mxu0 0.0
    %2399 = vmatpush1.msra.mxu0 0.0
    %2400 = vmatprep.subr.mxu0 0.0
    %2401 = vmatpush1.msra.mxu0 0.0
    %2402 = vmatprep.subr.mxu0 0.0
    %2403 = vmatpush1.msra.mxu0 0.0
    %2404 = vmatprep.subr.mxu0 0.0
    %2405 = vmatpush1.msra.mxu0 0.0
    %2406 = vmatprep.mubr.f32.mxu0 0.0
    %2407 = vmatmul.mubr.f32.gmra.mrb[0].mxu0 %v2340
    %v2408 = vpop.f32.mrb[0].mxu0
    %v2409 = vadd.f32 0.0, %v2408
    %v2410 = vpop.f32.mrb[0].mxu0
    %2411 = vdwg.mxu0
    %v2413 = vsel %vm2338, %v2336, 0
    %2415 = vmatprep.subr.mxu0 0.0
    %2416 = vmatpush1.msra.mxu0 %v2337
    %2417 = vmatprep.subr.mxu0 0.0
    %2418 = vmatpush1.msra.mxu0 0.0
    %2419 = vmatprep.subr.mxu0 0.0
    %2420 = vmatpush1.msra.mxu0 0.0
    %2421 = vmatprep.subr.mxu0 0.0
    %2422 = vmatpush1.msra.mxu0 0.0
    %2423 = vmatprep.subr.mxu0 0.0
    %2424 = vmatpush1.msra.mxu0 0.0
    %2425 = vmatprep.subr.mxu0 0.0
    %2426 = vmatpush1.msra.mxu0 0.0
    %2427 = vmatprep.subr.mxu0 0.0
    %2428 = vmatpush1.msra.mxu0 0.0
    %2429 = vmatprep.subr.mxu0 0.0
    %2430 = vmatpush1.msra.mxu0 0.0
    %2431 = vmatprep.subr.mxu0 0.0
    %2432 = vmatpush1.msra.mxu0 0.0
    %2433 = vmatprep.subr.mxu0 0.0
    %2434 = vmatpush1.msra.mxu0 0.0
    %2435 = vmatprep.subr.mxu0 0.0
    %2436 = vmatpush1.msra.mxu0 0.0
    %2437 = vmatprep.subr.mxu0 0.0
    %2438 = vmatpush1.msra.mxu0 0.0
    %2439 = vmatprep.subr.mxu0 0.0
    %2440 = vmatpush1.msra.mxu0 0.0
    %2441 = vmatprep.subr.mxu0 0.0
    %2442 = vmatpush1.msra.mxu0 0.0
    %2443 = vmatprep.subr.mxu0 0.0
    %2444 = vmatpush1.msra.mxu0 0.0
    %2445 = vmatprep.subr.mxu0 0.0
    %2446 = vmatpush1.msra.mxu0 0.0
    %2447 = vmatprep.subr.mxu0 0.0
    %2448 = vmatpush1.msra.mxu0 0.0
    %2449 = vmatprep.subr.mxu0 0.0
    %2450 = vmatpush1.msra.mxu0 0.0
    %2451 = vmatprep.subr.mxu0 0.0
    %2452 = vmatpush1.msra.mxu0 0.0
    %2453 = vmatprep.subr.mxu0 0.0
    %2454 = vmatpush1.msra.mxu0 0.0
    %2455 = vmatprep.subr.mxu0 0.0
    %2456 = vmatpush1.msra.mxu0 0.0
    %2457 = vmatprep.subr.mxu0 0.0
    %2458 = vmatpush1.msra.mxu0 0.0
    %2459 = vmatprep.subr.mxu0 0.0
    %2460 = vmatpush1.msra.mxu0 0.0
    %2461 = vmatprep.subr.mxu0 0.0
    %2462 = vmatpush1.msra.mxu0 0.0
    %2463 = vmatprep.subr.mxu0 0.0
    %2464 = vmatpush1.msra.mxu0 0.0
    %2465 = vmatprep.subr.mxu0 0.0
    %2466 = vmatpush1.msra.mxu0 0.0
    %2467 = vmatprep.subr.mxu0 0.0
    %2468 = vmatpush1.msra.mxu0 0.0
    %2469 = vmatprep.subr.mxu0 0.0
    %2470 = vmatpush1.msra.mxu0 0.0
    %2471 = vmatprep.subr.mxu0 0.0
    %2472 = vmatpush1.msra.mxu0 0.0
    %2473 = vmatprep.subr.mxu0 0.0
    %2474 = vmatpush1.msra.mxu0 0.0
    %2475 = vmatprep.subr.mxu0 0.0
    %2476 = vmatpush1.msra.mxu0 0.0
    %2477 = vmatprep.subr.mxu0 0.0
    %2478 = vmatpush1.msra.mxu0 0.0
    %2479 = vmatprep.mubr.f32.mxu0 0.0
    %2480 = vmatmul.mubr.f32.gmra.mrb[0].mxu0 %v2413
    %v2481 = vpop.f32.mrb[0].mxu0
    %v2482 = vadd.f32 0.0, %v2481
    %v2483 = vpop.f32.mrb[0].mxu0
    %2484 = vdwg.mxu0
    %v2485 = vlaneseq
    %v2486 = vshrl.u32 %v2485, 7
    %v2487 = vsub.s32 0, %v2486
    %v2488 = vrot.slane %v2409, %v2487
    %v2489 = vmul.f32 %v1763, %v2488
    %v2490 = vlaneseq
    %v2491 = vshrl.u32 %v2490, 7
    %v2492 = vsub.s32 0, %v2491
    %v2493 = vrot.slane %v2482, %v2492
    %v2494 = vadd.f32 %v2489, %v2493
    %v2495 = vmul.f32 %v2494, 0.2
    %v2496 = vmax.f32 %v2494, %v2495
    %v2497 = vmul.f32 %v1940, %v2488
    %v2498 = vadd.f32 %v2497, %v2493
    %v2499 = vmul.f32 %v2498, 0.2
    %v2500 = vmax.f32 %v2498, %v2499
    %v2501 = vmul.f32 %v2026, %v2488
    %v2502 = vadd.f32 %v2501, %v2493
    %v2503 = vmul.f32 %v2502, 0.2
    %v2504 = vmax.f32 %v2502, %v2503
    %v2505 = vmul.f32 %v2107, %v2488
    %v2506 = vadd.f32 %v2505, %v2493
    %v2507 = vmul.f32 %v2506, 0.2
    %v2508 = vmax.f32 %v2506, %v2507
    %v2509 = vld [vmem:[%s4] sm:$0xf]
    %v2510 = vld [vmem:[%s4 + $0x4] sm:$0xf]
    %v2511 = vld [vmem:[%s4 + $0x8] sm:$0xf]
    %v2512 = vld [vmem:[%s4 + $0xc] sm:$0xf]
    %v2513 = vld [vmem:[%s4 + $0x10] sm:$0xf]
    %v2514 = vld [vmem:[%s4 + $0x14] sm:$0xf]
    %v2515 = vld [vmem:[%s4 + $0x18] sm:$0xf]
    %v2516 = vld [vmem:[%s4 + $0x1c] sm:$0xf]
    %v2517 = vld [vmem:[%s4 + $0x20] sm:$0xf]
    %v2518 = vld [vmem:[%s4 + $0x24] sm:$0xf]
    %v2519 = vld [vmem:[%s4 + $0x28] sm:$0xf]
    %v2520 = vld [vmem:[%s4 + $0x2c] sm:$0xf]
    %v2521 = vld [vmem:[%s4 + $0x30] sm:$0xf]
    %v2522 = vld [vmem:[%s4 + $0x34] sm:$0xf]
    %v2523 = vld [vmem:[%s4 + $0x38] sm:$0xf]
    %v2524 = vld [vmem:[%s4 + $0x3c] sm:$0xf]
    %s2525 = scalar_lea.vmem %s4, 64
    %v2526 = vld [vmem:[%s2525] sm:$0xf]
    %v2527 = vld [vmem:[%s2525 + $0x4] sm:$0xf]
    %v2528 = vld [vmem:[%s2525 + $0x8] sm:$0xf]
    %v2529 = vld [vmem:[%s2525 + $0xc] sm:$0xf]
    %v2530 = vld [vmem:[%s2525 + $0x10] sm:$0xf]
    %v2531 = vld [vmem:[%s2525 + $0x14] sm:$0xf]
    %v2532 = vld [vmem:[%s2525 + $0x18] sm:$0xf]
    %v2533 = vld [vmem:[%s2525 + $0x1c] sm:$0xf]
    %v2534 = vld [vmem:[%s2525 + $0x20] sm:$0xf]
    %v2535 = vld [vmem:[%s2525 + $0x24] sm:$0xf]
    %v2536 = vld [vmem:[%s2525 + $0x28] sm:$0xf]
    %v2537 = vld [vmem:[%s2525 + $0x2c] sm:$0xf]
    %v2538 = vld [vmem:[%s2525 + $0x30] sm:$0xf]
    %v2539 = vld [vmem:[%s2525 + $0x34] sm:$0xf]
    %v2540 = vld [vmem:[%s2525 + $0x38] sm:$0xf]
    %v2541 = vld [vmem:[%s2525 + $0x3c] sm:$0xf]
    %s2542 = scalar_lea.vmem %s4, 128
    %v2543 = vld [vmem:[%s2542] sm:$0xf]
    %v2544 = vld [vmem:[%s2542 + $0x4] sm:$0xf]
    %v2545 = vld [vmem:[%s2542 + $0x8] sm:$0xf]
    %v2546 = vld [vmem:[%s2542 + $0xc] sm:$0xf]
    %v2547 = vld [vmem:[%s2542 + $0x10] sm:$0xf]
    %v2548 = vld [vmem:[%s2542 + $0x14] sm:$0xf]
    %v2549 = vld [vmem:[%s2542 + $0x18] sm:$0xf]
    %v2550 = vld [vmem:[%s2542 + $0x1c] sm:$0xf]
    %v2551 = vld [vmem:[%s2542 + $0x20] sm:$0xf]
    %v2552 = vld [vmem:[%s2542 + $0x24] sm:$0xf]
    %v2553 = vld [vmem:[%s2542 + $0x28] sm:$0xf]
    %v2554 = vld [vmem:[%s2542 + $0x2c] sm:$0xf]
    %v2555 = vld [vmem:[%s2542 + $0x30] sm:$0xf]
    %v2556 = vld [vmem:[%s2542 + $0x34] sm:$0xf]
    %v2557 = vld [vmem:[%s2542 + $0x38] sm:$0xf]
    %v2558 = vld [vmem:[%s2542 + $0x3c] sm:$0xf]
    %s2559 = scalar_lea.vmem %s4, 192
    %v2560 = vld [vmem:[%s2559] sm:$0xf]
    %v2561 = vld [vmem:[%s2559 + $0x4] sm:$0xf]
    %v2562 = vld [vmem:[%s2559 + $0x8] sm:$0xf]
    %v2563 = vld [vmem:[%s2559 + $0xc] sm:$0xf]
    %v2564 = vld [vmem:[%s2559 + $0x10] sm:$0xf]
    %v2565 = vld [vmem:[%s2559 + $0x14] sm:$0xf]
    %v2566 = vld [vmem:[%s2559 + $0x18] sm:$0xf]
    %v2567 = vld [vmem:[%s2559 + $0x1c] sm:$0xf]
    %v2568 = vld [vmem:[%s2559 + $0x20] sm:$0xf]
    %v2569 = vld [vmem:[%s2559 + $0x24] sm:$0xf]
    %v2570 = vld [vmem:[%s2559 + $0x28] sm:$0xf]
    %v2571 = vld [vmem:[%s2559 + $0x2c] sm:$0xf]
    %v2572 = vld [vmem:[%s2559 + $0x30] sm:$0xf]
    %v2573 = vld [vmem:[%s2559 + $0x34] sm:$0xf]
    %v2574 = vld [vmem:[%s2559 + $0x38] sm:$0xf]
    %v2575 = vld [vmem:[%s2559 + $0x3c] sm:$0xf]
    %v2577 = vrot.slane %v2508, 7
    %v2579 = vsel %vm368, 0.0, %v2577
    %v2580 = vsel %vm373, %v2579, 0.0
    %v2581 = vsel %vm375, %v2580, %v2577
    %v2582 = vpack.c.bf16 %v2496, %v2496
    %v2583 = vpack.c.bf16 %v2581, %v2581
    %v2600 = vunpack.c.l.b16 %v2560
    %v2601 = vunpack.c.l.b16 %v2561
    %v2602 = vunpack.c.l.b16 %v2562
    %v2603 = vunpack.c.l.b16 %v2563
    %v2604 = vunpack.c.l.b16 %v2564
    %v2605 = vunpack.c.l.b16 %v2565
    %v2606 = vunpack.c.l.b16 %v2566
    %v2607 = vunpack.c.l.b16 %v2567
    %v2608 = vunpack.c.l.b16 %v2568
    %v2609 = vunpack.c.l.b16 %v2569
    %v2610 = vunpack.c.l.b16 %v2570
    %v2611 = vunpack.c.l.b16 %v2571
    %v2612 = vunpack.c.l.b16 %v2572
    %v2613 = vunpack.c.l.b16 %v2573
    %v2614 = vunpack.c.l.b16 %v2574
    %v2615 = vunpack.c.l.b16 %v2575
    %v2616 = vpack.c.b16 %v2601, %v2600
    %v2617 = vpack.c.b16 %v2603, %v2602
    %v2618 = vpack.c.b16 %v2605, %v2604
    %v2619 = vpack.c.b16 %v2607, %v2606
    %v2620 = vpack.c.b16 %v2609, %v2608
    %v2621 = vpack.c.b16 %v2611, %v2610
    %v2622 = vpack.c.b16 %v2613, %v2612
    %v2623 = vpack.c.b16 %v2615, %v2614
    %2632 = vmatprep.subr.bf16.mxu0 0
    %2633 = vmatpush1.bf16.msra.mxu0 %v2616
    %2634 = vmatprep.subr.bf16.mxu0 0
    %2635 = vmatpush1.bf16.msra.mxu0 %v2617
    %2636 = vmatprep.subr.bf16.mxu0 0
    %2637 = vmatpush1.bf16.msra.mxu0 %v2618
    %2638 = vmatprep.subr.bf16.mxu0 0
    %2639 = vmatpush1.bf16.msra.mxu0 %v2619
    %2640 = vmatprep.subr.bf16.mxu0 0
    %2641 = vmatpush1.bf16.msra.mxu0 %v2620
    %2642 = vmatprep.subr.bf16.mxu0 0
    %2643 = vmatpush1.bf16.msra.mxu0 %v2621
    %2644 = vmatprep.subr.bf16.mxu0 0
    %2645 = vmatpush1.bf16.msra.mxu0 %v2622
    %2646 = vmatprep.subr.bf16.mxu0 0
    %2647 = vmatpush1.bf16.msra.mxu0 %v2623
    %2648 = vmatprep.subr.bf16.mxu0 0
    %2649 = vmatpush1.bf16.msra.mxu0 0
    %2650 = vmatprep.subr.bf16.mxu0 0
    %2651 = vmatpush1.bf16.msra.mxu0 0
    %2652 = vmatprep.subr.bf16.mxu0 0
    %2653 = vmatpush1.bf16.msra.mxu0 0
    %2654 = vmatprep.subr.bf16.mxu0 0
    %2655 = vmatpush1.bf16.msra.mxu0 0
    %2656 = vmatprep.subr.bf16.mxu0 0
    %2657 = vmatpush1.bf16.msra.mxu0 0
    %2658 = vmatprep.subr.bf16.mxu0 0
    %2659 = vmatpush1.bf16.msra.mxu0 0
    %2660 = vmatprep.subr.bf16.mxu0 0
    %2661 = vmatpush1.bf16.msra.mxu0 0
    %2662 = vmatprep.subr.bf16.mxu0 0
    %2663 = vmatpush1.bf16.msra.mxu0 0
    %2664 = vmatprep.mubr.bf16.mxu0 0
    %2665 = vmatmul.mubr.bf16.gmra.mrb[0].mxu0 %v2583
    %v2666 = vpop.f32.mrb[0].mxu0
    %v2667 = vadd.f32 0.0, %v2666
    %v2668 = vpop.f32.mrb[0].mxu0
    %v2669 = vpop.f32.mrb[0].mxu0
    %v2670 = vpop.f32.mrb[0].mxu0
    %2671 = vdwg.mxu0
    %v2688 = vunpack.c.l.b16 %v2526
    %v2689 = vunpack.c.l.b16 %v2527
    %v2690 = vunpack.c.l.b16 %v2528
    %v2691 = vunpack.c.l.b16 %v2529
    %v2692 = vunpack.c.l.b16 %v2530
    %v2693 = vunpack.c.l.b16 %v2531
    %v2694 = vunpack.c.l.b16 %v2532
    %v2695 = vunpack.c.l.b16 %v2533
    %v2696 = vunpack.c.l.b16 %v2534
    %v2697 = vunpack.c.l.b16 %v2535
    %v2698 = vunpack.c.l.b16 %v2536
    %v2699 = vunpack.c.l.b16 %v2537
    %v2700 = vunpack.c.l.b16 %v2538
    %v2701 = vunpack.c.l.b16 %v2539
    %v2702 = vunpack.c.l.b16 %v2540
    %v2703 = vunpack.c.l.b16 %v2541
    %v2704 = vpack.c.b16 %v2689, %v2688
    %v2705 = vpack.c.b16 %v2691, %v2690
    %v2706 = vpack.c.b16 %v2693, %v2692
    %v2707 = vpack.c.b16 %v2695, %v2694
    %v2708 = vpack.c.b16 %v2697, %v2696
    %v2709 = vpack.c.b16 %v2699, %v2698
    %v2710 = vpack.c.b16 %v2701, %v2700
    %v2711 = vpack.c.b16 %v2703, %v2702
    %2720 = vmatprep.subr.bf16.mxu0 0
    %2721 = vmatpush1.bf16.msra.mxu0 %v2704
    %2722 = vmatprep.subr.bf16.mxu0 0
    %2723 = vmatpush1.bf16.msra.mxu0 %v2705
    %2724 = vmatprep.subr.bf16.mxu0 0
    %2725 = vmatpush1.bf16.msra.mxu0 %v2706
    %2726 = vmatprep.subr.bf16.mxu0 0
    %2727 = vmatpush1.bf16.msra.mxu0 %v2707
    %2728 = vmatprep.subr.bf16.mxu0 0
    %2729 = vmatpush1.bf16.msra.mxu0 %v2708
    %2730 = vmatprep.subr.bf16.mxu0 0
    %2731 = vmatpush1.bf16.msra.mxu0 %v2709
    %2732 = vmatprep.subr.bf16.mxu0 0
    %2733 = vmatpush1.bf16.msra.mxu0 %v2710
    %2734 = vmatprep.subr.bf16.mxu0 0
    %2735 = vmatpush1.bf16.msra.mxu0 %v2711
    %2736 = vmatprep.subr.bf16.mxu0 0
    %2737 = vmatpush1.bf16.msra.mxu0 0
    %2738 = vmatprep.subr.bf16.mxu0 0
    %2739 = vmatpush1.bf16.msra.mxu0 0
    %2740 = vmatprep.subr.bf16.mxu0 0
    %2741 = vmatpush1.bf16.msra.mxu0 0
    %2742 = vmatprep.subr.bf16.mxu0 0
    %2743 = vmatpush1.bf16.msra.mxu0 0
    %2744 = vmatprep.subr.bf16.mxu0 0
    %2745 = vmatpush1.bf16.msra.mxu0 0
    %2746 = vmatprep.subr.bf16.mxu0 0
    %2747 = vmatpush1.bf16.msra.mxu0 0
    %2748 = vmatprep.subr.bf16.mxu0 0
    %2749 = vmatpush1.bf16.msra.mxu0 0
    %2750 = vmatprep.subr.bf16.mxu0 0
    %2751 = vmatpush1.bf16.msra.mxu0 0
    %2752 = vmatprep.mubr.bf16.mxu0 0
    %2753 = vmatmul.mubr.bf16.gmra.mrb[0].mxu0 %v2582
    %v2754 = vpop.f32.mrb[0].mxu0
    %v2755 = vadd.f32 %v2667, %v2754
    %v2756 = vpop.f32.mrb[0].mxu0
    %v2757 = vpop.f32.mrb[0].mxu0
    %v2758 = vpop.f32.mrb[0].mxu0
    %2759 = vdwg.mxu0
    %v2760 = vpack.c.bf16 %v2500, %v2500
    %v2777 = vunpack.c.l.b16 %v2509
    %v2778 = vunpack.c.l.b16 %v2510
    %v2779 = vunpack.c.l.b16 %v2511
    %v2780 = vunpack.c.l.b16 %v2512
    %v2781 = vunpack.c.l.b16 %v2513
    %v2782 = vunpack.c.l.b16 %v2514
    %v2783 = vunpack.c.l.b16 %v2515
    %v2784 = vunpack.c.l.b16 %v2516
    %v2785 = vunpack.c.l.b16 %v2517
    %v2786 = vunpack.c.l.b16 %v2518
    %v2787 = vunpack.c.l.b16 %v2519
    %v2788 = vunpack.c.l.b16 %v2520
    %v2789 = vunpack.c.l.b16 %v2521
    %v2790 = vunpack.c.l.b16 %v2522
    %v2791 = vunpack.c.l.b16 %v2523
    %v2792 = vunpack.c.l.b16 %v2524
    %v2793 = vpack.c.b16 %v2778, %v2777
    %v2794 = vpack.c.b16 %v2780, %v2779
    %v2795 = vpack.c.b16 %v2782, %v2781
    %v2796 = vpack.c.b16 %v2784, %v2783
    %v2797 = vpack.c.b16 %v2786, %v2785
    %v2798 = vpack.c.b16 %v2788, %v2787
    %v2799 = vpack.c.b16 %v2790, %v2789
    %v2800 = vpack.c.b16 %v2792, %v2791
    %2809 = vmatprep.subr.bf16.mxu0 0
    %2810 = vmatpush1.bf16.msra.mxu0 %v2793
    %2811 = vmatprep.subr.bf16.mxu0 0
    %2812 = vmatpush1.bf16.msra.mxu0 %v2794
    %2813 = vmatprep.subr.bf16.mxu0 0
    %2814 = vmatpush1.bf16.msra.mxu0 %v2795
    %2815 = vmatprep.subr.bf16.mxu0 0
    %2816 = vmatpush1.bf16.msra.mxu0 %v2796
    %2817 = vmatprep.subr.bf16.mxu0 0
    %2818 = vmatpush1.bf16.msra.mxu0 %v2797
    %2819 = vmatprep.subr.bf16.mxu0 0
    %2820 = vmatpush1.bf16.msra.mxu0 %v2798
    %2821 = vmatprep.subr.bf16.mxu0 0
    %2822 = vmatpush1.bf16.msra.mxu0 %v2799
    %2823 = vmatprep.subr.bf16.mxu0 0
    %2824 = vmatpush1.bf16.msra.mxu0 %v2800
    %2825 = vmatprep.subr.bf16.mxu0 0
    %2826 = vmatpush1.bf16.msra.mxu0 0
    %2827 = vmatprep.subr.bf16.mxu0 0
    %2828 = vmatpush1.bf16.msra.mxu0 0
    %2829 = vmatprep.subr.bf16.mxu0 0
    %2830 = vmatpush1.bf16.msra.mxu0 0
    %2831 = vmatprep.subr.bf16.mxu0 0
    %2832 = vmatpush1.bf16.msra.mxu0 0
    %2833 = vmatprep.subr.bf16.mxu0 0
    %2834 = vmatpush1.bf16.msra.mxu0 0
    %2835 = vmatprep.subr.bf16.mxu0 0
    %2836 = vmatpush1.bf16.msra.mxu0 0
    %2837 = vmatprep.subr.bf16.mxu0 0
    %2838 = vmatpush1.bf16.msra.mxu0 0
    %2839 = vmatprep.subr.bf16.mxu0 0
    %2840 = vmatpush1.bf16.msra.mxu0 0
    %2841 = vmatprep.mubr.bf16.mxu0 0
    %2842 = vmatmul.mubr.bf16.gmra.mrb[0].mxu0 %v2760
    %v2843 = vpop.f32.mrb[0].mxu0
    %v2844 = vadd.f32 0.0, %v2843
    %v2845 = vpop.f32.mrb[0].mxu0
    %v2846 = vpop.f32.mrb[0].mxu0
    %v2847 = vpop.f32.mrb[0].mxu0
    %2848 = vdwg.mxu0
    %v2865 = vunpack.c.l.b16 %v2543
    %v2866 = vunpack.c.l.b16 %v2544
    %v2867 = vunpack.c.l.b16 %v2545
    %v2868 = vunpack.c.l.b16 %v2546
    %v2869 = vunpack.c.l.b16 %v2547
    %v2870 = vunpack.c.l.b16 %v2548
    %v2871 = vunpack.c.l.b16 %v2549
    %v2872 = vunpack.c.l.b16 %v2550
    %v2873 = vunpack.c.l.b16 %v2551
    %v2874 = vunpack.c.l.b16 %v2552
    %v2875 = vunpack.c.l.b16 %v2553
    %v2876 = vunpack.c.l.b16 %v2554
    %v2877 = vunpack.c.l.b16 %v2555
    %v2878 = vunpack.c.l.b16 %v2556
    %v2879 = vunpack.c.l.b16 %v2557
    %v2880 = vunpack.c.l.b16 %v2558
    %v2881 = vpack.c.b16 %v2866, %v2865
    %v2882 = vpack.c.b16 %v2868, %v2867
    %v2883 = vpack.c.b16 %v2870, %v2869
    %v2884 = vpack.c.b16 %v2872, %v2871
    %v2885 = vpack.c.b16 %v2874, %v2873
    %v2886 = vpack.c.b16 %v2876, %v2875
    %v2887 = vpack.c.b16 %v2878, %v2877
    %v2888 = vpack.c.b16 %v2880, %v2879
    %2897 = vmatprep.subr.bf16.mxu0 0
    %2898 = vmatpush1.bf16.msra.mxu0 %v2881
    %2899 = vmatprep.subr.bf16.mxu0 0
    %2900 = vmatpush1.bf16.msra.mxu0 %v2882
    %2901 = vmatprep.subr.bf16.mxu0 0
    %2902 = vmatpush1.bf16.msra.mxu0 %v2883
    %2903 = vmatprep.subr.bf16.mxu0 0
    %2904 = vmatpush1.bf16.msra.mxu0 %v2884
    %2905 = vmatprep.subr.bf16.mxu0 0
    %2906 = vmatpush1.bf16.msra.mxu0 %v2885
    %2907 = vmatprep.subr.bf16.mxu0 0
    %2908 = vmatpush1.bf16.msra.mxu0 %v2886
    %2909 = vmatprep.subr.bf16.mxu0 0
    %2910 = vmatpush1.bf16.msra.mxu0 %v2887
    %2911 = vmatprep.subr.bf16.mxu0 0
    %2912 = vmatpush1.bf16.msra.mxu0 %v2888
    %2913 = vmatprep.subr.bf16.mxu0 0
    %2914 = vmatpush1.bf16.msra.mxu0 0
    %2915 = vmatprep.subr.bf16.mxu0 0
    %2916 = vmatpush1.bf16.msra.mxu0 0
    %2917 = vmatprep.subr.bf16.mxu0 0
    %2918 = vmatpush1.bf16.msra.mxu0 0
    %2919 = vmatprep.subr.bf16.mxu0 0
    %2920 = vmatpush1.bf16.msra.mxu0 0
    %2921 = vmatprep.subr.bf16.mxu0 0
    %2922 = vmatpush1.bf16.msra.mxu0 0
    %2923 = vmatprep.subr.bf16.mxu0 0
    %2924 = vmatpush1.bf16.msra.mxu0 0
    %2925 = vmatprep.subr.bf16.mxu0 0
    %2926 = vmatpush1.bf16.msra.mxu0 0
    %2927 = vmatprep.subr.bf16.mxu0 0
    %2928 = vmatpush1.bf16.msra.mxu0 0
    %2929 = vmatprep.mubr.bf16.mxu0 0
    %2930 = vmatmul.mubr.bf16.gmra.mrb[0].mxu0 %v2582
    %v2931 = vpop.f32.mrb[0].mxu0
    %v2932 = vadd.f32 %v2844, %v2931
    %v2933 = vpop.f32.mrb[0].mxu0
    %v2934 = vpop.f32.mrb[0].mxu0
    %v2935 = vpop.f32.mrb[0].mxu0
    %2936 = vdwg.mxu0
    %2937 = vmatprep.subr.bf16.mxu0 0
    %2938 = vmatpush1.bf16.msra.mxu0 %v2616
    %2939 = vmatprep.subr.bf16.mxu0 0
    %2940 = vmatpush1.bf16.msra.mxu0 %v2617
    %2941 = vmatprep.subr.bf16.mxu0 0
    %2942 = vmatpush1.bf16.msra.mxu0 %v2618
    %2943 = vmatprep.subr.bf16.mxu0 0
    %2944 = vmatpush1.bf16.msra.mxu0 %v2619
    %2945 = vmatprep.subr.bf16.mxu0 0
    %2946 = vmatpush1.bf16.msra.mxu0 %v2620
    %2947 = vmatprep.subr.bf16.mxu0 0
    %2948 = vmatpush1.bf16.msra.mxu0 %v2621
    %2949 = vmatprep.subr.bf16.mxu0 0
    %2950 = vmatpush1.bf16.msra.mxu0 %v2622
    %2951 = vmatprep.subr.bf16.mxu0 0
    %2952 = vmatpush1.bf16.msra.mxu0 %v2623
    %2953 = vmatprep.subr.bf16.mxu0 0
    %2954 = vmatpush1.bf16.msra.mxu0 0
    %2955 = vmatprep.subr.bf16.mxu0 0
    %2956 = vmatpush1.bf16.msra.mxu0 0
    %2957 = vmatprep.subr.bf16.mxu0 0
    %2958 = vmatpush1.bf16.msra.mxu0 0
    %2959 = vmatprep.subr.bf16.mxu0 0
    %2960 = vmatpush1.bf16.msra.mxu0 0
    %2961 = vmatprep.subr.bf16.mxu0 0
    %2962 = vmatpush1.bf16.msra.mxu0 0
    %2963 = vmatprep.subr.bf16.mxu0 0
    %2964 = vmatpush1.bf16.msra.mxu0 0
    %2965 = vmatprep.subr.bf16.mxu0 0
    %2966 = vmatpush1.bf16.msra.mxu0 0
    %2967 = vmatprep.subr.bf16.mxu0 0
    %2968 = vmatpush1.bf16.msra.mxu0 0
    %2969 = vmatprep.mubr.bf16.mxu0 0
    %2970 = vmatmul.mubr.bf16.gmra.mrb[0].mxu0 %v2582
    %v2971 = vpop.f32.mrb[0].mxu0
    %v2972 = vadd.f32 0.0, %v2971
    %v2973 = vpop.f32.mrb[0].mxu0
    %v2974 = vpop.f32.mrb[0].mxu0
    %v2975 = vpop.f32.mrb[0].mxu0
    %2976 = vdwg.mxu0
    %2977 = vmatprep.subr.bf16.mxu0 0
    %2978 = vmatpush1.bf16.msra.mxu0 %v2704
    %2979 = vmatprep.subr.bf16.mxu0 0
    %2980 = vmatpush1.bf16.msra.mxu0 %v2705
    %2981 = vmatprep.subr.bf16.mxu0 0
    %2982 = vmatpush1.bf16.msra.mxu0 %v2706
    %2983 = vmatprep.subr.bf16.mxu0 0
    %2984 = vmatpush1.bf16.msra.mxu0 %v2707
    %2985 = vmatprep.subr.bf16.mxu0 0
    %2986 = vmatpush1.bf16.msra.mxu0 %v2708
    %2987 = vmatprep.subr.bf16.mxu0 0
    %2988 = vmatpush1.bf16.msra.mxu0 %v2709
    %2989 = vmatprep.subr.bf16.mxu0 0
    %2990 = vmatpush1.bf16.msra.mxu0 %v2710
    %2991 = vmatprep.subr.bf16.mxu0 0
    %2992 = vmatpush1.bf16.msra.mxu0 %v2711
    %2993 = vmatprep.subr.bf16.mxu0 0
    %2994 = vmatpush1.bf16.msra.mxu0 0
    %2995 = vmatprep.subr.bf16.mxu0 0
    %2996 = vmatpush1.bf16.msra.mxu0 0
    %2997 = vmatprep.subr.bf16.mxu0 0
    %2998 = vmatpush1.bf16.msra.mxu0 0
    %2999 = vmatprep.subr.bf16.mxu0 0
    %3000 = vmatpush1.bf16.msra.mxu0 0
    %3001 = vmatprep.subr.bf16.mxu0 0
    %3002 = vmatpush1.bf16.msra.mxu0 0
    %3003 = vmatprep.subr.bf16.mxu0 0
    %3004 = vmatpush1.bf16.msra.mxu0 0
    %3005 = vmatprep.subr.bf16.mxu0 0
    %3006 = vmatpush1.bf16.msra.mxu0 0
    %3007 = vmatprep.subr.bf16.mxu0 0
    %3008 = vmatpush1.bf16.msra.mxu0 0
    %3009 = vmatprep.mubr.bf16.mxu0 0
    %3010 = vmatmul.mubr.bf16.gmra.mrb[0].mxu0 %v2760
    %v3011 = vpop.f32.mrb[0].mxu0
    %v3012 = vadd.f32 %v2972, %v3011
    %v3013 = vpop.f32.mrb[0].mxu0
    %v3014 = vpop.f32.mrb[0].mxu0
    %v3015 = vpop.f32.mrb[0].mxu0
    %3016 = vdwg.mxu0
    %v3017 = vpack.c.bf16 %v2504, %v2504
    %3018 = vmatprep.subr.bf16.mxu0 0
    %3019 = vmatpush1.bf16.msra.mxu0 %v2793
    %3020 = vmatprep.subr.bf16.mxu0 0
    %3021 = vmatpush1.bf16.msra.mxu0 %v2794
    %3022 = vmatprep.subr.bf16.mxu0 0
    %3023 = vmatpush1.bf16.msra.mxu0 %v2795
    %3024 = vmatprep.subr.bf16.mxu0 0
    %3025 = vmatpush1.bf16.msra.mxu0 %v2796
    %3026 = vmatprep.subr.bf16.mxu0 0
    %3027 = vmatpush1.bf16.msra.mxu0 %v2797
    %3028 = vmatprep.subr.bf16.mxu0 0
    %3029 = vmatpush1.bf16.msra.mxu0 %v2798
    %3030 = vmatprep.subr.bf16.mxu0 0
    %3031 = vmatpush1.bf16.msra.mxu0 %v2799
    %3032 = vmatprep.subr.bf16.mxu0 0
    %3033 = vmatpush1.bf16.msra.mxu0 %v2800
    %3034 = vmatprep.subr.bf16.mxu0 0
    %3035 = vmatpush1.bf16.msra.mxu0 0
    %3036 = vmatprep.subr.bf16.mxu0 0
    %3037 = vmatpush1.bf16.msra.mxu0 0
    %3038 = vmatprep.subr.bf16.mxu0 0
    %3039 = vmatpush1.bf16.msra.mxu0 0
    %3040 = vmatprep.subr.bf16.mxu0 0
    %3041 = vmatpush1.bf16.msra.mxu0 0
    %3042 = vmatprep.subr.bf16.mxu0 0
    %3043 = vmatpush1.bf16.msra.mxu0 0
    %3044 = vmatprep.subr.bf16.mxu0 0
    %3045 = vmatpush1.bf16.msra.mxu0 0
    %3046 = vmatprep.subr.bf16.mxu0 0
    %3047 = vmatpush1.bf16.msra.mxu0 0
    %3048 = vmatprep.subr.bf16.mxu0 0
    %3049 = vmatpush1.bf16.msra.mxu0 0
    %3050 = vmatprep.mubr.bf16.mxu0 0
    %3051 = vmatmul.mubr.bf16.gmra.mrb[0].mxu0 %v3017
    %v3052 = vpop.f32.mrb[0].mxu0
    %v3053 = vadd.f32 0.0, %v3052
    %v3054 = vpop.f32.mrb[0].mxu0
    %v3055 = vpop.f32.mrb[0].mxu0
    %v3056 = vpop.f32.mrb[0].mxu0
    %3057 = vdwg.mxu0
    %3058 = vmatprep.subr.bf16.mxu0 0
    %3059 = vmatpush1.bf16.msra.mxu0 %v2881
    %3060 = vmatprep.subr.bf16.mxu0 0
    %3061 = vmatpush1.bf16.msra.mxu0 %v2882
    %3062 = vmatprep.subr.bf16.mxu0 0
    %3063 = vmatpush1.bf16.msra.mxu0 %v2883
    %3064 = vmatprep.subr.bf16.mxu0 0
    %3065 = vmatpush1.bf16.msra.mxu0 %v2884
    %3066 = vmatprep.subr.bf16.mxu0 0
    %3067 = vmatpush1.bf16.msra.mxu0 %v2885
    %3068 = vmatprep.subr.bf16.mxu0 0
    %3069 = vmatpush1.bf16.msra.mxu0 %v2886
    %3070 = vmatprep.subr.bf16.mxu0 0
    %3071 = vmatpush1.bf16.msra.mxu0 %v2887
    %3072 = vmatprep.subr.bf16.mxu0 0
    %3073 = vmatpush1.bf16.msra.mxu0 %v2888
    %3074 = vmatprep.subr.bf16.mxu0 0
    %3075 = vmatpush1.bf16.msra.mxu0 0
    %3076 = vmatprep.subr.bf16.mxu0 0
    %3077 = vmatpush1.bf16.msra.mxu0 0
    %3078 = vmatprep.subr.bf16.mxu0 0
    %3079 = vmatpush1.bf16.msra.mxu0 0
    %3080 = vmatprep.subr.bf16.mxu0 0
    %3081 = vmatpush1.bf16.msra.mxu0 0
    %3082 = vmatprep.subr.bf16.mxu0 0
    %3083 = vmatpush1.bf16.msra.mxu0 0
    %3084 = vmatprep.subr.bf16.mxu0 0
    %3085 = vmatpush1.bf16.msra.mxu0 0
    %3086 = vmatprep.subr.bf16.mxu0 0
    %3087 = vmatpush1.bf16.msra.mxu0 0
    %3088 = vmatprep.subr.bf16.mxu0 0
    %3089 = vmatpush1.bf16.msra.mxu0 0
    %3090 = vmatprep.mubr.bf16.mxu0 0
    %3091 = vmatmul.mubr.bf16.gmra.mrb[0].mxu0 %v2760
    %v3092 = vpop.f32.mrb[0].mxu0
    %v3093 = vadd.f32 %v3053, %v3092
    %v3094 = vpop.f32.mrb[0].mxu0
    %v3095 = vpop.f32.mrb[0].mxu0
    %v3096 = vpop.f32.mrb[0].mxu0
    %3097 = vdwg.mxu0
    %3098 = vmatprep.subr.bf16.mxu0 0
    %3099 = vmatpush1.bf16.msra.mxu0 %v2616
    %3100 = vmatprep.subr.bf16.mxu0 0
    %3101 = vmatpush1.bf16.msra.mxu0 %v2617
    %3102 = vmatprep.subr.bf16.mxu0 0
    %3103 = vmatpush1.bf16.msra.mxu0 %v2618
    %3104 = vmatprep.subr.bf16.mxu0 0
    %3105 = vmatpush1.bf16.msra.mxu0 %v2619
    %3106 = vmatprep.subr.bf16.mxu0 0
    %3107 = vmatpush1.bf16.msra.mxu0 %v2620
    %3108 = vmatprep.subr.bf16.mxu0 0
    %3109 = vmatpush1.bf16.msra.mxu0 %v2621
    %3110 = vmatprep.subr.bf16.mxu0 0
    %3111 = vmatpush1.bf16.msra.mxu0 %v2622
    %3112 = vmatprep.subr.bf16.mxu0 0
    %3113 = vmatpush1.bf16.msra.mxu0 %v2623
    %3114 = vmatprep.subr.bf16.mxu0 0
    %3115 = vmatpush1.bf16.msra.mxu0 0
    %3116 = vmatprep.subr.bf16.mxu0 0
    %3117 = vmatpush1.bf16.msra.mxu0 0
    %3118 = vmatprep.subr.bf16.mxu0 0
    %3119 = vmatpush1.bf16.msra.mxu0 0
    %3120 = vmatprep.subr.bf16.mxu0 0
    %3121 = vmatpush1.bf16.msra.mxu0 0
    %3122 = vmatprep.subr.bf16.mxu0 0
    %3123 = vmatpush1.bf16.msra.mxu0 0
    %3124 = vmatprep.subr.bf16.mxu0 0
    %3125 = vmatpush1.bf16.msra.mxu0 0
    %3126 = vmatprep.subr.bf16.mxu0 0
    %3127 = vmatpush1.bf16.msra.mxu0 0
    %3128 = vmatprep.subr.bf16.mxu0 0
    %3129 = vmatpush1.bf16.msra.mxu0 0
    %3130 = vmatprep.mubr.bf16.mxu0 0
    %3131 = vmatmul.mubr.bf16.gmra.mrb[0].mxu0 %v2760
    %v3132 = vpop.f32.mrb[0].mxu0
    %v3133 = vadd.f32 0.0, %v3132
    %v3134 = vpop.f32.mrb[0].mxu0
    %v3135 = vpop.f32.mrb[0].mxu0
    %v3136 = vpop.f32.mrb[0].mxu0
    %3137 = vdwg.mxu0
    %3138 = vmatprep.subr.bf16.mxu0 0
    %3139 = vmatpush1.bf16.msra.mxu0 %v2704
    %3140 = vmatprep.subr.bf16.mxu0 0
    %3141 = vmatpush1.bf16.msra.mxu0 %v2705
    %3142 = vmatprep.subr.bf16.mxu0 0
    %3143 = vmatpush1.bf16.msra.mxu0 %v2706
    %3144 = vmatprep.subr.bf16.mxu0 0
    %3145 = vmatpush1.bf16.msra.mxu0 %v2707
    %3146 = vmatprep.subr.bf16.mxu0 0
    %3147 = vmatpush1.bf16.msra.mxu0 %v2708
    %3148 = vmatprep.subr.bf16.mxu0 0
    %3149 = vmatpush1.bf16.msra.mxu0 %v2709
    %3150 = vmatprep.subr.bf16.mxu0 0
    %3151 = vmatpush1.bf16.msra.mxu0 %v2710
    %3152 = vmatprep.subr.bf16.mxu0 0
    %3153 = vmatpush1.bf16.msra.mxu0 %v2711
    %3154 = vmatprep.subr.bf16.mxu0 0
    %3155 = vmatpush1.bf16.msra.mxu0 0
    %3156 = vmatprep.subr.bf16.mxu0 0
    %3157 = vmatpush1.bf16.msra.mxu0 0
    %3158 = vmatprep.subr.bf16.mxu0 0
    %3159 = vmatpush1.bf16.msra.mxu0 0
    %3160 = vmatprep.subr.bf16.mxu0 0
    %3161 = vmatpush1.bf16.msra.mxu0 0
    %3162 = vmatprep.subr.bf16.mxu0 0
    %3163 = vmatpush1.bf16.msra.mxu0 0
    %3164 = vmatprep.subr.bf16.mxu0 0
    %3165 = vmatpush1.bf16.msra.mxu0 0
    %3166 = vmatprep.subr.bf16.mxu0 0
    %3167 = vmatpush1.bf16.msra.mxu0 0
    %3168 = vmatprep.subr.bf16.mxu0 0
    %3169 = vmatpush1.bf16.msra.mxu0 0
    %3170 = vmatprep.mubr.bf16.mxu0 0
    %3171 = vmatmul.mubr.bf16.gmra.mrb[0].mxu0 %v3017
    %v3172 = vpop.f32.mrb[0].mxu0
    %v3173 = vadd.f32 %v3133, %v3172
    %v3174 = vpop.f32.mrb[0].mxu0
    %v3175 = vpop.f32.mrb[0].mxu0
    %v3176 = vpop.f32.mrb[0].mxu0
    %3177 = vdwg.mxu0
    %v3178 = vpack.c.bf16 %v2508, %v2508
    %3179 = vmatprep.subr.bf16.mxu0 0
    %3180 = vmatpush1.bf16.msra.mxu0 %v2793
    %3181 = vmatprep.subr.bf16.mxu0 0
    %3182 = vmatpush1.bf16.msra.mxu0 %v2794
    %3183 = vmatprep.subr.bf16.mxu0 0
    %3184 = vmatpush1.bf16.msra.mxu0 %v2795
    %3185 = vmatprep.subr.bf16.mxu0 0
    %3186 = vmatpush1.bf16.msra.mxu0 %v2796
    %3187 = vmatprep.subr.bf16.mxu0 0
    %3188 = vmatpush1.bf16.msra.mxu0 %v2797
    %3189 = vmatprep.subr.bf16.mxu0 0
    %3190 = vmatpush1.bf16.msra.mxu0 %v2798
    %3191 = vmatprep.subr.bf16.mxu0 0
    %3192 = vmatpush1.bf16.msra.mxu0 %v2799
    %3193 = vmatprep.subr.bf16.mxu0 0
    %3194 = vmatpush1.bf16.msra.mxu0 %v2800
    %3195 = vmatprep.subr.bf16.mxu0 0
    %3196 = vmatpush1.bf16.msra.mxu0 0
    %3197 = vmatprep.subr.bf16.mxu0 0
    %3198 = vmatpush1.bf16.msra.mxu0 0
    %3199 = vmatprep.subr.bf16.mxu0 0
    %3200 = vmatpush1.bf16.msra.mxu0 0
    %3201 = vmatprep.subr.bf16.mxu0 0
    %3202 = vmatpush1.bf16.msra.mxu0 0
    %3203 = vmatprep.subr.bf16.mxu0 0
    %3204 = vmatpush1.bf16.msra.mxu0 0
    %3205 = vmatprep.subr.bf16.mxu0 0
    %3206 = vmatpush1.bf16.msra.mxu0 0
    %3207 = vmatprep.subr.bf16.mxu0 0
    %3208 = vmatpush1.bf16.msra.mxu0 0
    %3209 = vmatprep.subr.bf16.mxu0 0
    %3210 = vmatpush1.bf16.msra.mxu0 0
    %3211 = vmatprep.mubr.bf16.mxu0 0
    %3212 = vmatmul.mubr.bf16.gmra.mrb[0].mxu0 %v3178
    %v3213 = vpop.f32.mrb[0].mxu0
    %v3214 = vadd.f32 0.0, %v3213
    %v3215 = vpop.f32.mrb[0].mxu0
    %v3216 = vpop.f32.mrb[0].mxu0
    %v3217 = vpop.f32.mrb[0].mxu0
    %3218 = vdwg.mxu0
    %3219 = vmatprep.subr.bf16.mxu0 0
    %3220 = vmatpush1.bf16.msra.mxu0 %v2881
    %3221 = vmatprep.subr.bf16.mxu0 0
    %3222 = vmatpush1.bf16.msra.mxu0 %v2882
    %3223 = vmatprep.subr.bf16.mxu0 0
    %3224 = vmatpush1.bf16.msra.mxu0 %v2883
    %3225 = vmatprep.subr.bf16.mxu0 0
    %3226 = vmatpush1.bf16.msra.mxu0 %v2884
    %3227 = vmatprep.subr.bf16.mxu0 0
    %3228 = vmatpush1.bf16.msra.mxu0 %v2885
    %3229 = vmatprep.subr.bf16.mxu0 0
    %3230 = vmatpush1.bf16.msra.mxu0 %v2886
    %3231 = vmatprep.subr.bf16.mxu0 0
    %3232 = vmatpush1.bf16.msra.mxu0 %v2887
    %3233 = vmatprep.subr.bf16.mxu0 0
    %3234 = vmatpush1.bf16.msra.mxu0 %v2888
    %3235 = vmatprep.subr.bf16.mxu0 0
    %3236 = vmatpush1.bf16.msra.mxu0 0
    %3237 = vmatprep.subr.bf16.mxu0 0
    %3238 = vmatpush1.bf16.msra.mxu0 0
    %3239 = vmatprep.subr.bf16.mxu0 0
    %3240 = vmatpush1.bf16.msra.mxu0 0
    %3241 = vmatprep.subr.bf16.mxu0 0
    %3242 = vmatpush1.bf16.msra.mxu0 0
    %3243 = vmatprep.subr.bf16.mxu0 0
    %3244 = vmatpush1.bf16.msra.mxu0 0
    %3245 = vmatprep.subr.bf16.mxu0 0
    %3246 = vmatpush1.bf16.msra.mxu0 0
    %3247 = vmatprep.subr.bf16.mxu0 0
    %3248 = vmatpush1.bf16.msra.mxu0 0
    %3249 = vmatprep.subr.bf16.mxu0 0
    %3250 = vmatpush1.bf16.msra.mxu0 0
    %3251 = vmatprep.mubr.bf16.mxu0 0
    %3252 = vmatmul.mubr.bf16.gmra.mrb[0].mxu0 %v3017
    %v3253 = vpop.f32.mrb[0].mxu0
    %v3254 = vadd.f32 %v3214, %v3253
    %v3255 = vpop.f32.mrb[0].mxu0
    %v3256 = vpop.f32.mrb[0].mxu0
    %v3257 = vpop.f32.mrb[0].mxu0
    %3258 = vdwg.mxu0
    %v3260 = vrot.slane %v2496, 1
    %v3262 = vsel %vm371, %v3260, 0.0
    %v3263 = vsel %vm373, %v3262, %v3260
    %v3264 = vsel %vm379, %v3263, 0.0
    %3265 = vmatprep.subr.bf16.mxu0 0
    %3266 = vmatpush1.bf16.msra.mxu0 %v2616
    %3267 = vmatprep.subr.bf16.mxu0 0
    %3268 = vmatpush1.bf16.msra.mxu0 %v2617
    %3269 = vmatprep.subr.bf16.mxu0 0
    %3270 = vmatpush1.bf16.msra.mxu0 %v2618
    %3271 = vmatprep.subr.bf16.mxu0 0
    %3272 = vmatpush1.bf16.msra.mxu0 %v2619
    %3273 = vmatprep.subr.bf16.mxu0 0
    %3274 = vmatpush1.bf16.msra.mxu0 %v2620
    %3275 = vmatprep.subr.bf16.mxu0 0
    %3276 = vmatpush1.bf16.msra.mxu0 %v2621
    %3277 = vmatprep.subr.bf16.mxu0 0
    %3278 = vmatpush1.bf16.msra.mxu0 %v2622
    %3279 = vmatprep.subr.bf16.mxu0 0
    %3280 = vmatpush1.bf16.msra.mxu0 %v2623
    %3281 = vmatprep.subr.bf16.mxu0 0
    %3282 = vmatpush1.bf16.msra.mxu0 0
    %3283 = vmatprep.subr.bf16.mxu0 0
    %3284 = vmatpush1.bf16.msra.mxu0 0
    %3285 = vmatprep.subr.bf16.mxu0 0
    %3286 = vmatpush1.bf16.msra.mxu0 0
    %3287 = vmatprep.subr.bf16.mxu0 0
    %3288 = vmatpush1.bf16.msra.mxu0 0
    %3289 = vmatprep.subr.bf16.mxu0 0
    %3290 = vmatpush1.bf16.msra.mxu0 0
    %3291 = vmatprep.subr.bf16.mxu0 0
    %3292 = vmatpush1.bf16.msra.mxu0 0
    %3293 = vmatprep.subr.bf16.mxu0 0
    %3294 = vmatpush1.bf16.msra.mxu0 0
    %3295 = vmatprep.subr.bf16.mxu0 0
    %3296 = vmatpush1.bf16.msra.mxu0 0
    %3297 = vmatprep.mubr.bf16.mxu0 0
    %3298 = vmatmul.mubr.bf16.gmra.mrb[0].mxu0 %v3017
    %v3299 = vpop.f32.mrb[0].mxu0
    %v3300 = vadd.f32 0.0, %v3299
    %v3301 = vpop.f32.mrb[0].mxu0
    %v3302 = vpop.f32.mrb[0].mxu0
    %v3303 = vpop.f32.mrb[0].mxu0
    %3304 = vdwg.mxu0
    %3305 = vmatprep.subr.bf16.mxu0 0
    %3306 = vmatpush1.bf16.msra.mxu0 %v2704
    %3307 = vmatprep.subr.bf16.mxu0 0
    %3308 = vmatpush1.bf16.msra.mxu0 %v2705
    %3309 = vmatprep.subr.bf16.mxu0 0
    %3310 = vmatpush1.bf16.msra.mxu0 %v2706
    %3311 = vmatprep.subr.bf16.mxu0 0
    %3312 = vmatpush1.bf16.msra.mxu0 %v2707
    %3313 = vmatprep.subr.bf16.mxu0 0
    %3314 = vmatpush1.bf16.msra.mxu0 %v2708
    %3315 = vmatprep.subr.bf16.mxu0 0
    %3316 = vmatpush1.bf16.msra.mxu0 %v2709
    %3317 = vmatprep.subr.bf16.mxu0 0
    %3318 = vmatpush1.bf16.msra.mxu0 %v2710
    %3319 = vmatprep.subr.bf16.mxu0 0
    %3320 = vmatpush1.bf16.msra.mxu0 %v2711
    %3321 = vmatprep.subr.bf16.mxu0 0
    %3322 = vmatpush1.bf16.msra.mxu0 0
    %3323 = vmatprep.subr.bf16.mxu0 0
    %3324 = vmatpush1.bf16.msra.mxu0 0
    %3325 = vmatprep.subr.bf16.mxu0 0
    %3326 = vmatpush1.bf16.msra.mxu0 0
    %3327 = vmatprep.subr.bf16.mxu0 0
    %3328 = vmatpush1.bf16.msra.mxu0 0
    %3329 = vmatprep.subr.bf16.mxu0 0
    %3330 = vmatpush1.bf16.msra.mxu0 0
    %3331 = vmatprep.subr.bf16.mxu0 0
    %3332 = vmatpush1.bf16.msra.mxu0 0
    %3333 = vmatprep.subr.bf16.mxu0 0
    %3334 = vmatpush1.bf16.msra.mxu0 0
    %3335 = vmatprep.subr.bf16.mxu0 0
    %3336 = vmatpush1.bf16.msra.mxu0 0
    %3337 = vmatprep.mubr.bf16.mxu0 0
    %3338 = vmatmul.mubr.bf16.gmra.mrb[0].mxu0 %v3178
    %v3339 = vpop.f32.mrb[0].mxu0
    %v3340 = vadd.f32 %v3300, %v3339
    %v3341 = vpop.f32.mrb[0].mxu0
    %v3342 = vpop.f32.mrb[0].mxu0
    %v3343 = vpop.f32.mrb[0].mxu0
    %3344 = vdwg.mxu0
    %v3345 = vpack.c.bf16 %v3264, %v3264
    %3346 = vmatprep.subr.bf16.mxu0 0
    %3347 = vmatpush1.bf16.msra.mxu0 %v2793
    %3348 = vmatprep.subr.bf16.mxu0 0
    %3349 = vmatpush1.bf16.msra.mxu0 %v2794
    %3350 = vmatprep.subr.bf16.mxu0 0
    %3351 = vmatpush1.bf16.msra.mxu0 %v2795
    %3352 = vmatprep.subr.bf16.mxu0 0
    %3353 = vmatpush1.bf16.msra.mxu0 %v2796
    %3354 = vmatprep.subr.bf16.mxu0 0
    %3355 = vmatpush1.bf16.msra.mxu0 %v2797
    %3356 = vmatprep.subr.bf16.mxu0 0
    %3357 = vmatpush1.bf16.msra.mxu0 %v2798
    %3358 = vmatprep.subr.bf16.mxu0 0
    %3359 = vmatpush1.bf16.msra.mxu0 %v2799
    %3360 = vmatprep.subr.bf16.mxu0 0
    %3361 = vmatpush1.bf16.msra.mxu0 %v2800
    %3362 = vmatprep.subr.bf16.mxu0 0
    %3363 = vmatpush1.bf16.msra.mxu0 0
    %3364 = vmatprep.subr.bf16.mxu0 0
    %3365 = vmatpush1.bf16.msra.mxu0 0
    %3366 = vmatprep.subr.bf16.mxu0 0
    %3367 = vmatpush1.bf16.msra.mxu0 0
    %3368 = vmatprep.subr.bf16.mxu0 0
    %3369 = vmatpush1.bf16.msra.mxu0 0
    %3370 = vmatprep.subr.bf16.mxu0 0
    %3371 = vmatpush1.bf16.msra.mxu0 0
    %3372 = vmatprep.subr.bf16.mxu0 0
    %3373 = vmatpush1.bf16.msra.mxu0 0
    %3374 = vmatprep.subr.bf16.mxu0 0
    %3375 = vmatpush1.bf16.msra.mxu0 0
    %3376 = vmatprep.subr.bf16.mxu0 0
    %3377 = vmatpush1.bf16.msra.mxu0 0
    %3378 = vmatprep.mubr.bf16.mxu0 0
    %3379 = vmatmul.mubr.bf16.gmra.mrb[0].mxu0 %v3345
    %v3380 = vpop.f32.mrb[0].mxu0
    %v3381 = vadd.f32 0.0, %v3380
    %v3382 = vpop.f32.mrb[0].mxu0
    %v3383 = vpop.f32.mrb[0].mxu0
    %v3384 = vpop.f32.mrb[0].mxu0
    %3385 = vdwg.mxu0
    %3386 = vmatprep.subr.bf16.mxu0 0
    %3387 = vmatpush1.bf16.msra.mxu0 %v2881
    %3388 = vmatprep.subr.bf16.mxu0 0
    %3389 = vmatpush1.bf16.msra.mxu0 %v2882
    %3390 = vmatprep.subr.bf16.mxu0 0
    %3391 = vmatpush1.bf16.msra.mxu0 %v2883
    %3392 = vmatprep.subr.bf16.mxu0 0
    %3393 = vmatpush1.bf16.msra.mxu0 %v2884
    %3394 = vmatprep.subr.bf16.mxu0 0
    %3395 = vmatpush1.bf16.msra.mxu0 %v2885
    %3396 = vmatprep.subr.bf16.mxu0 0
    %3397 = vmatpush1.bf16.msra.mxu0 %v2886
    %3398 = vmatprep.subr.bf16.mxu0 0
    %3399 = vmatpush1.bf16.msra.mxu0 %v2887
    %3400 = vmatprep.subr.bf16.mxu0 0
    %3401 = vmatpush1.bf16.msra.mxu0 %v2888
    %3402 = vmatprep.subr.bf16.mxu0 0
    %3403 = vmatpush1.bf16.msra.mxu0 0
    %3404 = vmatprep.subr.bf16.mxu0 0
    %3405 = vmatpush1.bf16.msra.mxu0 0
    %3406 = vmatprep.subr.bf16.mxu0 0
    %3407 = vmatpush1.bf16.msra.mxu0 0
    %3408 = vmatprep.subr.bf16.mxu0 0
    %3409 = vmatpush1.bf16.msra.mxu0 0
    %3410 = vmatprep.subr.bf16.mxu0 0
    %3411 = vmatpush1.bf16.msra.mxu0 0
    %3412 = vmatprep.subr.bf16.mxu0 0
    %3413 = vmatpush1.bf16.msra.mxu0 0
    %3414 = vmatprep.subr.bf16.mxu0 0
    %3415 = vmatpush1.bf16.msra.mxu0 0
    %3416 = vmatprep.subr.bf16.mxu0 0
    %3417 = vmatpush1.bf16.msra.mxu0 0
    %3418 = vmatprep.mubr.bf16.mxu0 0
    %3419 = vmatmul.mubr.bf16.gmra.mrb[0].mxu0 %v3178
    %v3420 = vpop.f32.mrb[0].mxu0
    %v3421 = vadd.f32 %v3381, %v3420
    %v3422 = vpop.f32.mrb[0].mxu0
    %v3423 = vpop.f32.mrb[0].mxu0
    %v3424 = vpop.f32.mrb[0].mxu0
    %3425 = vdwg.mxu0
    %v3426 = vtanh.pop %v2755
    %vm3427 = vcmask 785408
    %3428 = vst.msk [vmem:[%s17] sm:$0xff] %vm3427, %v3426
    %v3429 = vtanh.pop %v2932
    %s3430 = scalar_lea.vmem %s17, 8
    %3431 = vst.msk [vmem:[%s3430] sm:$0xff] %vm3427, %v3429
    %v3432 = vtanh.pop %v3012
    %s3433 = scalar_lea.vmem %s17, 16
    %3434 = vst.msk [vmem:[%s3433] sm:$0xff] %vm3427, %v3432
    %v3435 = vtanh.pop %v3093
    %s3436 = scalar_lea.vmem %s17, 24
    %3437 = vst.msk [vmem:[%s3436] sm:$0xff] %vm3427, %v3435
    %v3438 = vtanh.pop %v3173
    %s3439 = scalar_lea.vmem %s17, 32
    %3440 = vst.msk [vmem:[%s3439] sm:$0xff] %vm3427, %v3438
    %v3441 = vtanh.pop %v3254
    %s3442 = scalar_lea.vmem %s17, 40
    %3443 = vst.msk [vmem:[%s3442] sm:$0xff] %vm3427, %v3441
    %v3444 = vtanh.pop %v3340
    %s3445 = scalar_lea.vmem %s17, 48
    %3446 = vst.msk [vmem:[%s3445] sm:$0xff] %vm3427, %v3444
    %v3447 = vtanh.pop %v3421
    %s3448 = scalar_lea.vmem %s17, 56
    %3449 = vst.msk [vmem:[%s3448] sm:$0xff] %vm3427, %v3447
    // Predicated region
    $region82: #{generator_forward.1} parent=1 // pred_check
      _
    $region83: #{generator_forward.1} parent=1 // pred_check_branch
      %3451 = sbr.rel (0) target = $region85
    $region84: #{generator_forward.1} parent=1 // pred_region
      _
    $region85: #{generator_forward.1} parent=1 // pred_fallthru
      _
    // Predicated region
    $region86: #{generator_forward.1} parent=1 // pred_check
      _
    $region87: #{generator_forward.1} parent=1 // pred_check_branch
      %3453 = sbr.rel (0) target = $region89
    $region88: #{generator_forward.1} parent=1 // pred_region
      _
    $region89: #{generator_forward.1} parent=1 // pred_fallthru
      _
    %3454 = vsyncpa [#allocation3], 1
    %3455 = vsyncpa [#allocation5], 1

</llo_original>
